<compile_context>
chip_gen: v5e
topology: v5e:2x2
jax: 0.10.0
libtpu: 0.0.40
codegen_flags: <defaults>
</compile_context>

<pallas_src>
import jax
import jax.numpy as jnp
import numpy as np
from jax import lax
from jax.experimental import pallas as pl
from jax.experimental.pallas import tpu as pltpu

# ----------------- synthetic "args" -----------------
B = 8
C_IN = 4
H = W = 16
HW = H * W
BHW = B * HW
K_AUG = 8                  # conv contraction width: C_IN + 1 (ones row for bias) + 3 zero pad
F_BACKBONE = 64            # backbone_net.out_features
HIDDEN = 32                # args.hidden_dim
S1, S2, S3, S4 = 8, 8, 8, 8
Z_DIM = S1 + S2 + S3 + S4  # args.z_dim
U_DIM = 16                 # args.u_dim
NUM_CLASSES = 10           # args.num_classes
N_DOMAINS = 3              # args.n_domains
N_EMB = 10                 # nn.Embedding(10, u_dim)
N_EMB_PAD = 16             # padded one-hot / uproj row count
BN_EPS = 1e-5

# backbone chunking (conv -> relu -> pooled accumulate per chunk; avoids spilling (64,2048) f32)
N_CHUNKS = 4
CHUNK = BHW // N_CHUNKS    # 512 lanes per chunk

# merged output layout (single lane-dense (B, 128) store)
OUT_LANES = 128
DOM_OFF = 64               # domain logits live in lanes [DOM_OFF : DOM_OFF + N_DOMAINS)

# ----------------- packed parameter slab layout (bf16, densified) -----------------
# Row starts are 16-aligned (bf16 tile rows); small lane-offset slices are cheap vs. the DMA saved.
SLAB_LANES = 128
SLAB_ROWS = 160
R_W2,    L_W2    = 0,   0      # (2*HIDDEN, 128)  fused [classifier|domain] output layer
R_B2,    L_B2    = 64,  0      # (1, 128)
R_BENC,  L_BENC  = 66,  0      # (1, HIDDEN)
R_BMU,   L_BMU   = 66,  32     # (1, Z_DIM)
R_WENC,  L_WENC  = 80,  0      # (F, HIDDEN)      encoder Linear (eval-BN + 1/HW pool folded)
R_WCONV, L_WCONV = 80,  32     # (F, K_AUG)       backbone 1x1 conv weight^T | bias col | zero pad
R_WMU,   L_WMU   = 80,  64     # (HIDDEN, Z_DIM)  fc_mu
R_W1Z,   L_W1Z   = 112, 64     # (Z_DIM, 2*HIDDEN) fused hidden layer, z part (BN folded)
R_UPROJ, L_UPROJ = 144, 64     # (N_EMB_PAD, 2*HIDDEN) emb_tab @ w1u (folded) + b1 folded per row


# ----------------- Pallas kernel -----------------
def ivae_fwd_kernel(xt_ref, u_ref, w_ref, out_ref):
    # xt_ref  : (K_AUG, B*HW) bf16  channel-first lane-dense pixels; row C_IN = ones (conv bias)
    # u_ref   : (B, 1) int32        domain index u
    # w_ref   : (SLAB_ROWS, 128) bf16  packed/folded parameters
    # out_ref : (B, OUT_LANES) f32  label logits in [:, :NUM_CLASSES], domain in [:, DOM_OFF:+N_DOMAINS]

    # --- backbone 1x1 conv + ReLU + AdaptiveAvgPool, chunked; pooling done on the MXU ---
    wconv = w_ref[R_WCONV:R_WCONV + F_BACKBONE, L_WCONV:L_WCONV + K_AUG]       # (F, K_AUG) bf16
    feat_t = jnp.zeros((F_BACKBONE, B), jnp.float32)
    for c in range(N_CHUNKS):                                                  # 4 static iterations
        s = c * CHUNK
        xch = xt_ref[:, s:s + CHUNK]                                           # (K_AUG, CHUNK) bf16
        f = jnp.maximum(jnp.dot(wconv, xch, preferred_element_type=jnp.float32), 0.0)  # (F, CHUNK)
        # pool-selection block poolT[r, b] = 1 iff pixel (s + r) belongs to sample b
        pix = s + lax.broadcasted_iota(jnp.int32, (CHUNK, B), 0)
        lo = lax.broadcasted_iota(jnp.int32, (CHUNK, B), 1) * HW
        poolT = jnp.logical_and(pix >= lo, pix < lo + HW).astype(jnp.float32)  # (CHUNK, B)
        feat_t = feat_t + jnp.dot(f, poolT, preferred_element_type=jnp.float32)
    feat = feat_t.T                       # (B, F) sum-pooled; 1/HW is folded into wenc at pack time

    # --- encoder: Linear (eval-BN + 1/HW folded) + ReLU + Dropout(identity in eval) ---
    wenc = w_ref[R_WENC:R_WENC + F_BACKBONE, L_WENC:L_WENC + HIDDEN]
    benc = w_ref[R_BENC:R_BENC + 1, L_BENC:L_BENC + HIDDEN].astype(jnp.float32)
    h = jnp.maximum(jnp.dot(feat, wenc, preferred_element_type=jnp.float32) + benc, 0.0)

    # --- fc_mu; eval mode => z = mu (fc_logvar unused in forward outputs) ---
    wmu = w_ref[R_WMU:R_WMU + HIDDEN, L_WMU:L_WMU + Z_DIM]
    bmu = w_ref[R_BMU:R_BMU + 1, L_BMU:L_BMU + Z_DIM].astype(jnp.float32)
    z = jnp.dot(h, wmu, preferred_element_type=jnp.float32) + bmu              # (B, Z_DIM)

    # --- u_embedding via in-kernel one-hot against a pre-projected table (b1 folded into it) ---
    onehot = (u_ref[...] == lax.broadcasted_iota(jnp.int32, (B, N_EMB_PAD), 1)).astype(jnp.float32)

    # --- fused classifier / domain hidden layer (full-width z matmul, zero-padded folded weights) ---
    w1z = w_ref[R_W1Z:R_W1Z + Z_DIM, L_W1Z:L_W1Z + 2 * HIDDEN]
    uproj = w_ref[R_UPROJ:R_UPROJ + N_EMB_PAD, L_UPROJ:L_UPROJ + 2 * HIDDEN]
    hh = jnp.maximum(jnp.dot(z, w1z, preferred_element_type=jnp.float32)
                     + jnp.dot(onehot, uproj, preferred_element_type=jnp.float32), 0.0)

    # --- fused output layer -> single lane-dense (B, 128) unmasked store ---
    w2 = w_ref[R_W2:R_W2 + 2 * HIDDEN, L_W2:L_W2 + OUT_LANES]
    b2 = w_ref[R_B2:R_B2 + 1, L_B2:L_B2 + OUT_LANES].astype(jnp.float32)
    out_ref[...] = jnp.dot(hh, w2, preferred_element_type=jnp.float32) + b2


# ----------------- parameter folding / packing (one-time prep) -----------------
def pack_params(p):
    """Fold eval BatchNorm, conv bias, 1/HW pooling and the classifier/domain biases into the
    matmul weights, and pack everything into one densified (160, 128) bf16 slab (single DMA)."""
    # pack-time layout asserts (review correctness concern)
    assert S1 + S2 + S3 <= Z_DIM <= SLAB_LANES
    assert NUM_CLASSES <= DOM_OFF and DOM_OFF + N_DOMAINS <= OUT_LANES
    assert N_EMB <= N_EMB_PAD and C_IN + 1 <= K_AUG
    assert BHW % N_CHUNKS == 0 and CHUNK % HW == 0

    slab = jnp.zeros((SLAB_ROWS, SLAB_LANES), jnp.float32)

    # fused output layer: label logits -> lanes [0:NUM_CLASSES), domain -> [DOM_OFF:+N_DOMAINS)
    w2 = jnp.zeros((2 * HIDDEN, OUT_LANES), jnp.float32)
    w2 = w2.at[0:HIDDEN, 0:NUM_CLASSES].set(p["wc2"])
    w2 = w2.at[HIDDEN:2 * HIDDEN, DOM_OFF:DOM_OFF + N_DOMAINS].set(p["wd2"])
    slab = slab.at[R_W2:R_W2 + 2 * HIDDEN, L_W2:L_W2 + OUT_LANES].set(w2)
    b2 = jnp.zeros((1, OUT_LANES), jnp.float32)
    b2 = b2.at[:, 0:NUM_CLASSES].set(p["bc2"])
    b2 = b2.at[:, DOM_OFF:DOM_OFF + N_DOMAINS].set(p["bd2"])
    slab = slab.at[R_B2:R_B2 + 1, L_B2:L_B2 + OUT_LANES].set(b2)

    # encoder Linear with eval-BN folded + 1/HW pool-mean folded (kernel pools with a sum)
    slab = slab.at[R_WENC:R_WENC + F_BACKBONE, L_WENC:L_WENC + HIDDEN].set(
        p["wenc"] * p["enc_scale"] * (1.0 / HW))
    slab = slab.at[R_BENC:R_BENC + 1, L_BENC:L_BENC + HIDDEN].set(
        p["benc"] * p["enc_scale"] + p["enc_shift"])

    # backbone 1x1 conv, transposed, with the bias folded in as column C_IN (rest zero pad)
    wconv_aug = jnp.zeros((F_BACKBONE, K_AUG), jnp.float32)
    wconv_aug = wconv_aug.at[:, 0:C_IN].set(p["wconv"].T)
    wconv_aug = wconv_aug.at[:, C_IN].set(p["bconv"][0])
    slab = slab.at[R_WCONV:R_WCONV + F_BACKBONE, L_WCONV:L_WCONV + K_AUG].set(wconv_aug)

    # fc_mu
    slab = slab.at[R_WMU:R_WMU + HIDDEN, L_WMU:L_WMU + Z_DIM].set(p["wmu"])
    slab = slab.at[R_BMU:R_BMU + 1, L_BMU:L_BMU + Z_DIM].set(p["bmu"])

    # fused classifier/domain hidden layer, z part (BN folded, zero-padded to full Z_DIM rows)
    w1z = jnp.zeros((Z_DIM, 2 * HIDDEN), jnp.float32)
    w1z = w1z.at[S1:S1 + S2 + S3, 0:HIDDEN].set(p["wc1_z"] * p["c_scale"])        # [z_s2|z_c1]
    w1z = w1z.at[0:S1 + S2 + S3, HIDDEN:2 * HIDDEN].set(p["wd1"] * p["d_scale"])  # [z_s1|z_s2|z_c1]
    slab = slab.at[R_W1Z:R_W1Z + Z_DIM, L_W1Z:L_W1Z + 2 * HIDDEN].set(w1z)

    # u-embedding projection table: one_hot(u) @ uproj == [emb(u) @ w1u_fold + b1c_fold | b1d_fold]
    uproj = jnp.zeros((N_EMB_PAD, 2 * HIDDEN), jnp.float32)
    cls_rows = p["emb_tab"] @ (p["wc1_u"] * p["c_scale"]) + (p["bc1"] * p["c_scale"] + p["c_shift"])
    dom_rows = jnp.broadcast_to(p["bd1"] * p["d_scale"] + p["d_shift"], (N_EMB, HIDDEN))
    uproj = uproj.at[0:N_EMB, 0:HIDDEN].set(cls_rows)
    uproj = uproj.at[0:N_EMB, HIDDEN:2 * HIDDEN].set(dom_rows)
    slab = slab.at[R_UPROJ:R_UPROJ + N_EMB_PAD, L_UPROJ:L_UPROJ + 2 * HIDDEN].set(uproj)

    return slab.astype(jnp.bfloat16)


# ----------------- wrapper -----------------
_COST = pl.CostEstimate(
    flops=2 * (F_BACKBONE * K_AUG * BHW + F_BACKBONE * BHW * B
               + B * F_BACKBONE * HIDDEN + B * HIDDEN * Z_DIM
               + B * Z_DIM * 2 * HIDDEN + B * N_EMB_PAD * 2 * HIDDEN
               + B * 2 * HIDDEN * OUT_LANES),
    transcendentals=0,
    bytes_accessed=K_AUG * BHW * 2 + B * 4 + SLAB_ROWS * SLAB_LANES * 2 + B * OUT_LANES * 4,
)


@jax.jit
def ivae_forward_packed(x_nchw, u, slab):
    # layout plumbing: NCHW -> lane-dense (K_AUG, B*HW) bf16 with a ones row (folded conv bias).
    xt = jnp.transpose(x_nchw, (1, 0, 2, 3)).reshape(C_IN, BHW).astype(jnp.bfloat16)
    xt_aug = jnp.concatenate(
        [xt, jnp.ones((1, BHW), jnp.bfloat16),
         jnp.zeros((K_AUG - C_IN - 1, BHW), jnp.bfloat16)], axis=0)
    u2 = u.reshape(B, 1).astype(jnp.int32)
    vspec = pl.BlockSpec(memory_space=pltpu.MemorySpace.VMEM)   # small problem: whole arrays in VMEM
    return pl.pallas_call(
        ivae_fwd_kernel,
        out_shape=jax.ShapeDtypeStruct((B, OUT_LANES), jnp.float32),
        in_specs=[vspec, vspec, vspec],
        out_specs=vspec,
        cost_estimate=_COST,
    )(xt_aug, u2, slab)


def ivae_forward(x_nchw, u, slab):
    out = ivae_forward_packed(x_nchw, u, slab)
    # slice at the consumer: keeps the kernel's single lane-dense (B, 128) store
    return out[:, 0:NUM_CLASSES], out[:, DOM_OFF:DOM_OFF + N_DOMAINS]


# ----------------- deterministic parameter init (raw, PyTorch-like) -----------------
def _bn_fold(gamma, beta, mean, var):
    scale = gamma / jnp.sqrt(var + BN_EPS)
    shift = beta - mean * scale
    return scale.reshape(1, -1), shift.reshape(1, -1)


def init_params(key):
    ks = jax.random.split(key, 32)
    n = lambda k, shape, s=0.1: (s * jax.random.normal(k, shape, jnp.float32))

    p = {}
    # backbone 1x1 conv
    p["wconv"] = n(ks[0], (C_IN, F_BACKBONE))
    p["bconv"] = n(ks[1], (1, F_BACKBONE))
    # embedding table
    p["emb_tab"] = n(ks[2], (N_EMB, U_DIM))
    # encoder Linear + BN
    p["wenc"] = n(ks[3], (F_BACKBONE, HIDDEN))
    p["benc"] = n(ks[4], (1, HIDDEN))
    p["enc_scale"], p["enc_shift"] = _bn_fold(
        1.0 + n(ks[5], (HIDDEN,)), n(ks[6], (HIDDEN,)),
        n(ks[7], (HIDDEN,)), 0.5 + jax.random.uniform(ks[8], (HIDDEN,), jnp.float32))
    # fc_mu
    p["wmu"] = n(ks[9], (HIDDEN, Z_DIM))
    p["bmu"] = n(ks[10], (1, Z_DIM))
    # classifier (resnet18 branch): in = s2 + s3 + u_dim
    p["wc1_z"] = n(ks[11], (S2 + S3, HIDDEN))
    p["wc1_u"] = n(ks[12], (U_DIM, HIDDEN))
    p["bc1"] = n(ks[13], (1, HIDDEN))
    p["c_scale"], p["c_shift"] = _bn_fold(
        1.0 + n(ks[14], (HIDDEN,)), n(ks[15], (HIDDEN,)),
        n(ks[16], (HIDDEN,)), 0.5 + jax.random.uniform(ks[17], (HIDDEN,), jnp.float32))
    p["wc2"] = n(ks[18], (HIDDEN, NUM_CLASSES))
    p["bc2"] = n(ks[19], (1, NUM_CLASSES))
    # domain predictor: in = s1 + s2 + s3
    p["wd1"] = n(ks[20], (S1 + S2 + S3, HIDDEN))
    p["bd1"] = n(ks[21], (1, HIDDEN))
    p["d_scale"], p["d_shift"] = _bn_fold(
        1.0 + n(ks[22], (HIDDEN,)), n(ks[23], (HIDDEN,)),
        n(ks[24], (HIDDEN,)), 0.5 + jax.random.uniform(ks[25], (HIDDEN,), jnp.float32))
    p["wd2"] = n(ks[26], (HIDDEN, N_DOMAINS))
    p["bd2"] = n(ks[27], (1, N_DOMAINS))
    return p


# ----------------- pure-JAX reference (for correctness check, from raw f32 params) -----------------
def reference_forward(x_nchw, u, p):
    xf = jnp.transpose(x_nchw, (0, 2, 3, 1)).reshape(B, HW, C_IN)
    f = jnp.maximum(jnp.einsum("bpc,cf->bpf", xf, p["wconv"]) + p["bconv"], 0.0)
    feat = jnp.mean(f, axis=1)                                           # adaptive avg pool
    h = jnp.maximum((feat @ p["wenc"] + p["benc"]) * p["enc_scale"] + p["enc_shift"], 0.0)
    mu = h @ p["wmu"] + p["bmu"]
    z = mu
    emb = p["emb_tab"][u]
    pre = jnp.concatenate([z[:, S1:S1 + S2], z[:, S1 + S2:S1 + S2 + S3], emb], axis=1)
    wc1 = jnp.concatenate([p["wc1_z"], p["wc1_u"]], axis=0)
    hc = jnp.maximum((pre @ wc1 + p["bc1"]) * p["c_scale"] + p["c_shift"], 0.0)
    label = hc @ p["wc2"] + p["bc2"]
    pre_d = jnp.concatenate([z[:, 0:S1], z[:, S1:S1 + S2], z[:, S1 + S2:S1 + S2 + S3]], axis=1)
    hd = jnp.maximum((pre_d @ p["wd1"] + p["bd1"]) * p["d_scale"] + p["d_shift"], 0.0)
    domain = hd @ p["wd2"] + p["bd2"]
    return label, domain


if __name__ == "__main__":
    root = jax.random.PRNGKey(0)
    k_x, k_u, k_p = jax.random.split(root, 3)
    x = jax.random.normal(k_x, (B, C_IN, H, W), jnp.float32)
    u = jax.random.randint(k_u, (B,), 0, N_EMB, dtype=jnp.int32)
    params = init_params(k_p)
    slab = pack_params(params)                       # one-time parameter folding/packing (bf16)

    label, domain = ivae_forward(x, u, slab)
    jax.block_until_ready((label, domain))

    ref_label, ref_domain = reference_forward(x, u, params)
    # tolerance loosened vs. the f32 version because weights/activations are fed to the MXU in bf16
    np.testing.assert_allclose(np.asarray(label), np.asarray(ref_label), rtol=2e-2, atol=2e-2)
    np.testing.assert_allclose(np.asarray(domain), np.asarray(ref_domain), rtol=2e-2, atol=2e-2)
    assert label.shape == (B, NUM_CLASSES) and domain.shape == (B, N_DOMAINS)
    print("KERNEL_OK")
</pallas_src>

<mosaic_0001>
module attributes {stable_mosaic.version = 11 : i64} {
  func.func @ivae_fwd_kernel(%arg0: memref<8x2048xbf16, #tpu.memory_space<vmem>>, %arg1: memref<8x1xi32, #tpu.memory_space<vmem>>, %arg2: memref<160x128xbf16, #tpu.memory_space<vmem>>, %arg3: memref<8x128xf32, #tpu.memory_space<vmem>>) attributes {dimension_semantics = [], scalar_prefetch = 0 : i64, scratch_operands = 0 : i64, tpu.core_type = #tpu.core_type<tc>} {
    %c80 = arith.constant 80 : index
    %c32 = arith.constant 32 : index
    %0 = vector.load %arg2[%c80, %c32] : memref<160x128xbf16, #tpu.memory_space<vmem>>, vector<64x8xbf16>
    %cst = arith.constant 0.000000e+00 : f32
    %1 = vector.broadcast %cst : f32 to vector<64x8xf32>
    %c0 = arith.constant 0 : index
    %c0_0 = arith.constant 0 : index
    %2 = vector.load %arg0[%c0, %c0_0] : memref<8x2048xbf16, #tpu.memory_space<vmem>>, vector<8x512xbf16>
    %cst_1 = arith.constant dense<0.000000e+00> : vector<64x512xf32>
    %3 = tpu.matmul %0, %2, %cst_1 {dimension_numbers = #tpu.dot_dimension_numbers<[1], [0], [0], [1], [0, 0, 1, 1], [], []>} : vector<64x8xbf16>, vector<8x512xbf16>, vector<64x512xf32> -> vector<64x512xf32>
    %cst_2 = arith.constant 0.000000e+00 : f32
    %4 = vector.broadcast %cst_2 : f32 to vector<64x512xf32>
    %5 = arith.maximumf %3, %4 : vector<64x512xf32>
    %6 = tpu.iota {dimensions = array<i32: 0>} : vector<512x8xi32>
    %c0_i32 = arith.constant 0 : i32
    %7 = vector.broadcast %c0_i32 : i32 to vector<512x8xi32>
    %8 = arith.addi %7, %6 : vector<512x8xi32>
    %9 = tpu.iota {dimensions = array<i32: 1>} : vector<512x8xi32>
    %c256_i32 = arith.constant 256 : i32
    %10 = vector.broadcast %c256_i32 : i32 to vector<512x8xi32>
    %11 = arith.muli %9, %10 : vector<512x8xi32>
    %12 = arith.cmpi sge, %8, %11 : vector<512x8xi32>
    %c256_i32_3 = arith.constant 256 : i32
    %13 = vector.broadcast %c256_i32_3 : i32 to vector<512x8xi32>
    %14 = arith.addi %11, %13 : vector<512x8xi32>
    %15 = arith.cmpi slt, %8, %14 : vector<512x8xi32>
    %16 = arith.andi %12, %15 : vector<512x8xi1>
    %17 = arith.extui %16 : vector<512x8xi1> to vector<512x8xi32>
    %18 = arith.sitofp %17 : vector<512x8xi32> to vector<512x8xf32>
    %cst_4 = arith.constant dense<0.000000e+00> : vector<64x8xf32>
    %19 = tpu.matmul %5, %18, %cst_4 {dimension_numbers = #tpu.dot_dimension_numbers<[1], [0], [0], [1], [0, 0, 1, 1], [], []>} : vector<64x512xf32>, vector<512x8xf32>, vector<64x8xf32> -> vector<64x8xf32>
    %20 = arith.addf %1, %19 : vector<64x8xf32>
    %c0_5 = arith.constant 0 : index
    %c512 = arith.constant 512 : index
    %21 = vector.load %arg0[%c0_5, %c512] : memref<8x2048xbf16, #tpu.memory_space<vmem>>, vector<8x512xbf16>
    %cst_6 = arith.constant dense<0.000000e+00> : vector<64x512xf32>
    %22 = tpu.matmul %0, %21, %cst_6 {dimension_numbers = #tpu.dot_dimension_numbers<[1], [0], [0], [1], [0, 0, 1, 1], [], []>} : vector<64x8xbf16>, vector<8x512xbf16>, vector<64x512xf32> -> vector<64x512xf32>
    %cst_7 = arith.constant 0.000000e+00 : f32
    %23 = vector.broadcast %cst_7 : f32 to vector<64x512xf32>
    %24 = arith.maximumf %22, %23 : vector<64x512xf32>
    %25 = tpu.iota {dimensions = array<i32: 0>} : vector<512x8xi32>
    %c512_i32 = arith.constant 512 : i32
    %26 = vector.broadcast %c512_i32 : i32 to vector<512x8xi32>
    %27 = arith.addi %26, %25 : vector<512x8xi32>
    %28 = tpu.iota {dimensions = array<i32: 1>} : vector<512x8xi32>
    %c256_i32_8 = arith.constant 256 : i32
    %29 = vector.broadcast %c256_i32_8 : i32 to vector<512x8xi32>
    %30 = arith.muli %28, %29 : vector<512x8xi32>
    %31 = arith.cmpi sge, %27, %30 : vector<512x8xi32>
    %c256_i32_9 = arith.constant 256 : i32
    %32 = vector.broadcast %c256_i32_9 : i32 to vector<512x8xi32>
    %33 = arith.addi %30, %32 : vector<512x8xi32>
    %34 = arith.cmpi slt, %27, %33 : vector<512x8xi32>
    %35 = arith.andi %31, %34 : vector<512x8xi1>
    %36 = arith.extui %35 : vector<512x8xi1> to vector<512x8xi32>
    %37 = arith.sitofp %36 : vector<512x8xi32> to vector<512x8xf32>
    %cst_10 = arith.constant dense<0.000000e+00> : vector<64x8xf32>
    %38 = tpu.matmul %24, %37, %cst_10 {dimension_numbers = #tpu.dot_dimension_numbers<[1], [0], [0], [1], [0, 0, 1, 1], [], []>} : vector<64x512xf32>, vector<512x8xf32>, vector<64x8xf32> -> vector<64x8xf32>
    %39 = arith.addf %20, %38 : vector<64x8xf32>
    %c0_11 = arith.constant 0 : index
    %c1024 = arith.constant 1024 : index
    %40 = vector.load %arg0[%c0_11, %c1024] : memref<8x2048xbf16, #tpu.memory_space<vmem>>, vector<8x512xbf16>
    %cst_12 = arith.constant dense<0.000000e+00> : vector<64x512xf32>
    %41 = tpu.matmul %0, %40, %cst_12 {dimension_numbers = #tpu.dot_dimension_numbers<[1], [0], [0], [1], [0, 0, 1, 1], [], []>} : vector<64x8xbf16>, vector<8x512xbf16>, vector<64x512xf32> -> vector<64x512xf32>
    %cst_13 = arith.constant 0.000000e+00 : f32
    %42 = vector.broadcast %cst_13 : f32 to vector<64x512xf32>
    %43 = arith.maximumf %41, %42 : vector<64x512xf32>
    %44 = tpu.iota {dimensions = array<i32: 0>} : vector<512x8xi32>
    %c1024_i32 = arith.constant 1024 : i32
    %45 = vector.broadcast %c1024_i32 : i32 to vector<512x8xi32>
    %46 = arith.addi %45, %44 : vector<512x8xi32>
    %47 = tpu.iota {dimensions = array<i32: 1>} : vector<512x8xi32>
    %c256_i32_14 = arith.constant 256 : i32
    %48 = vector.broadcast %c256_i32_14 : i32 to vector<512x8xi32>
    %49 = arith.muli %47, %48 : vector<512x8xi32>
    %50 = arith.cmpi sge, %46, %49 : vector<512x8xi32>
    %c256_i32_15 = arith.constant 256 : i32
    %51 = vector.broadcast %c256_i32_15 : i32 to vector<512x8xi32>
    %52 = arith.addi %49, %51 : vector<512x8xi32>
    %53 = arith.cmpi slt, %46, %52 : vector<512x8xi32>
    %54 = arith.andi %50, %53 : vector<512x8xi1>
    %55 = arith.extui %54 : vector<512x8xi1> to vector<512x8xi32>
    %56 = arith.sitofp %55 : vector<512x8xi32> to vector<512x8xf32>
    %cst_16 = arith.constant dense<0.000000e+00> : vector<64x8xf32>
    %57 = tpu.matmul %43, %56, %cst_16 {dimension_numbers = #tpu.dot_dimension_numbers<[1], [0], [0], [1], [0, 0, 1, 1], [], []>} : vector<64x512xf32>, vector<512x8xf32>, vector<64x8xf32> -> vector<64x8xf32>
    %58 = arith.addf %39, %57 : vector<64x8xf32>
    %c0_17 = arith.constant 0 : index
    %c1536 = arith.constant 1536 : index
    %59 = vector.load %arg0[%c0_17, %c1536] : memref<8x2048xbf16, #tpu.memory_space<vmem>>, vector<8x512xbf16>
    %cst_18 = arith.constant dense<0.000000e+00> : vector<64x512xf32>
    %60 = tpu.matmul %0, %59, %cst_18 {dimension_numbers = #tpu.dot_dimension_numbers<[1], [0], [0], [1], [0, 0, 1, 1], [], []>} : vector<64x8xbf16>, vector<8x512xbf16>, vector<64x512xf32> -> vector<64x512xf32>
    %cst_19 = arith.constant 0.000000e+00 : f32
    %61 = vector.broadcast %cst_19 : f32 to vector<64x512xf32>
    %62 = arith.maximumf %60, %61 : vector<64x512xf32>
    %63 = tpu.iota {dimensions = array<i32: 0>} : vector<512x8xi32>
    %c1536_i32 = arith.constant 1536 : i32
    %64 = vector.broadcast %c1536_i32 : i32 to vector<512x8xi32>
    %65 = arith.addi %64, %63 : vector<512x8xi32>
    %66 = tpu.iota {dimensions = array<i32: 1>} : vector<512x8xi32>
    %c256_i32_20 = arith.constant 256 : i32
    %67 = vector.broadcast %c256_i32_20 : i32 to vector<512x8xi32>
    %68 = arith.muli %66, %67 : vector<512x8xi32>
    %69 = arith.cmpi sge, %65, %68 : vector<512x8xi32>
    %c256_i32_21 = arith.constant 256 : i32
    %70 = vector.broadcast %c256_i32_21 : i32 to vector<512x8xi32>
    %71 = arith.addi %68, %70 : vector<512x8xi32>
    %72 = arith.cmpi slt, %65, %71 : vector<512x8xi32>
    %73 = arith.andi %69, %72 : vector<512x8xi1>
    %74 = arith.extui %73 : vector<512x8xi1> to vector<512x8xi32>
    %75 = arith.sitofp %74 : vector<512x8xi32> to vector<512x8xf32>
    %cst_22 = arith.constant dense<0.000000e+00> : vector<64x8xf32>
    %76 = tpu.matmul %62, %75, %cst_22 {dimension_numbers = #tpu.dot_dimension_numbers<[1], [0], [0], [1], [0, 0, 1, 1], [], []>} : vector<64x512xf32>, vector<512x8xf32>, vector<64x8xf32> -> vector<64x8xf32>
    %77 = arith.addf %58, %76 : vector<64x8xf32>
    %78 = tpu.transpose %77, [1, 0] : vector<64x8xf32> -> vector<8x64xf32>
    %c80_23 = arith.constant 80 : index
    %c0_24 = arith.constant 0 : index
    %79 = vector.load %arg2[%c80_23, %c0_24] : memref<160x128xbf16, #tpu.memory_space<vmem>>, vector<64x32xbf16>
    %c66 = arith.constant 66 : index
    %c0_25 = arith.constant 0 : index
    %80 = vector.load %arg2[%c66, %c0_25] : memref<160x128xbf16, #tpu.memory_space<vmem>>, vector<1x32xbf16>
    %81 = arith.extf %80 : vector<1x32xbf16> to vector<1x32xf32>
    %cst_26 = arith.constant dense<0.000000e+00> : vector<8x32xf32>
    %82 = tpu.matmul %78, %79, %cst_26 {dimension_numbers = #tpu.dot_dimension_numbers<[1], [0], [0], [1], [0, 0, 1, 1], [], []>} : vector<8x64xf32>, vector<64x32xbf16>, vector<8x32xf32> -> vector<8x32xf32>
    %83 = vector.broadcast %81 : vector<1x32xf32> to vector<8x32xf32>
    %84 = arith.addf %82, %83 : vector<8x32xf32>
    %cst_27 = arith.constant 0.000000e+00 : f32
    %85 = vector.broadcast %cst_27 : f32 to vector<8x32xf32>
    %86 = arith.maximumf %84, %85 : vector<8x32xf32>
    %c80_28 = arith.constant 80 : index
    %c64 = arith.constant 64 : index
    %87 = vector.load %arg2[%c80_28, %c64] : memref<160x128xbf16, #tpu.memory_space<vmem>>, vector<32x32xbf16>
    %c66_29 = arith.constant 66 : index
    %c32_30 = arith.constant 32 : index
    %88 = vector.load %arg2[%c66_29, %c32_30] : memref<160x128xbf16, #tpu.memory_space<vmem>>, vector<1x32xbf16>
    %89 = arith.extf %88 : vector<1x32xbf16> to vector<1x32xf32>
    %cst_31 = arith.constant dense<0.000000e+00> : vector<8x32xf32>
    %90 = tpu.matmul %86, %87, %cst_31 {dimension_numbers = #tpu.dot_dimension_numbers<[1], [0], [0], [1], [0, 0, 1, 1], [], []>} : vector<8x32xf32>, vector<32x32xbf16>, vector<8x32xf32> -> vector<8x32xf32>
    %91 = vector.broadcast %89 : vector<1x32xf32> to vector<8x32xf32>
    %92 = arith.addf %90, %91 : vector<8x32xf32>
    %c0_32 = arith.constant 0 : index
    %c0_33 = arith.constant 0 : index
    %93 = vector.load %arg1[%c0_32, %c0_33] : memref<8x1xi32, #tpu.memory_space<vmem>>, vector<8x1xi32>
    %94 = tpu.iota {dimensions = array<i32: 1>} : vector<8x16xi32>
    %95 = vector.broadcast %93 : vector<8x1xi32> to vector<8x16xi32>
    %96 = arith.cmpi eq, %95, %94 : vector<8x16xi32>
    %97 = arith.extui %96 : vector<8x16xi1> to vector<8x16xi32>
    %98 = arith.sitofp %97 : vector<8x16xi32> to vector<8x16xf32>
    %c112 = arith.constant 112 : index
    %c64_34 = arith.constant 64 : index
    %99 = vector.load %arg2[%c112, %c64_34] : memref<160x128xbf16, #tpu.memory_space<vmem>>, vector<32x64xbf16>
    %c144 = arith.constant 144 : index
    %c64_35 = arith.constant 64 : index
    %100 = vector.load %arg2[%c144, %c64_35] : memref<160x128xbf16, #tpu.memory_space<vmem>>, vector<16x64xbf16>
    %cst_36 = arith.constant dense<0.000000e+00> : vector<8x64xf32>
    %101 = tpu.matmul %92, %99, %cst_36 {dimension_numbers = #tpu.dot_dimension_numbers<[1], [0], [0], [1], [0, 0, 1, 1], [], []>} : vector<8x32xf32>, vector<32x64xbf16>, vector<8x64xf32> -> vector<8x64xf32>
    %cst_37 = arith.constant dense<0.000000e+00> : vector<8x64xf32>
    %102 = tpu.matmul %98, %100, %cst_37 {dimension_numbers = #tpu.dot_dimension_numbers<[1], [0], [0], [1], [0, 0, 1, 1], [], []>} : vector<8x16xf32>, vector<16x64xbf16>, vector<8x64xf32> -> vector<8x64xf32>
    %103 = arith.addf %101, %102 : vector<8x64xf32>
    %cst_38 = arith.constant 0.000000e+00 : f32
    %104 = vector.broadcast %cst_38 : f32 to vector<8x64xf32>
    %105 = arith.maximumf %103, %104 : vector<8x64xf32>
    %c0_39 = arith.constant 0 : index
    %c0_40 = arith.constant 0 : index
    %106 = vector.load %arg2[%c0_39, %c0_40] : memref<160x128xbf16, #tpu.memory_space<vmem>>, vector<64x128xbf16>
    %c64_41 = arith.constant 64 : index
    %c0_42 = arith.constant 0 : index
    %107 = vector.load %arg2[%c64_41, %c0_42] : memref<160x128xbf16, #tpu.memory_space<vmem>>, vector<1x128xbf16>
    %108 = arith.extf %107 : vector<1x128xbf16> to vector<1x128xf32>
    %cst_43 = arith.constant dense<0.000000e+00> : vector<8x128xf32>
    %109 = tpu.matmul %105, %106, %cst_43 {dimension_numbers = #tpu.dot_dimension_numbers<[1], [0], [0], [1], [0, 0, 1, 1], [], []>} : vector<8x64xf32>, vector<64x128xbf16>, vector<8x128xf32> -> vector<8x128xf32>
    %110 = vector.broadcast %108 : vector<1x128xf32> to vector<8x128xf32>
    %111 = arith.addf %109, %110 : vector<8x128xf32>
    %c0_44 = arith.constant 0 : index
    %c0_45 = arith.constant 0 : index
    %112 = vector.load %arg3[%c0_44, %c0_45] : memref<8x128xf32, #tpu.memory_space<vmem>>, vector<8x128xf32>
    tpu.vector_store %arg3[%c0_44, %c0_45], %111 {strides = array<i32>} : memref<8x128xf32, #tpu.memory_space<vmem>>, vector<8x128xf32>,
    return
  }
}

</mosaic_0001>

<llo_original>
// kernel: ivae_forward_packed.1
$region0: #{ivae_forward_packed.1}
  #allocation0 [shape = 'u32[]', space=smem, size = 0x4, offset = 0x4, fixed_abs, tag = 'smem constant byte address 0x4 - core index']
  #allocation1 [shape = 'u32[72,128]{1,0:T(1,128)}', space=vmem, size = 0x9000, scoped, tag = 'internal scratch']
  %s0 = inlined_call_operand.vmem [shape: bf16[8,2048], index: 0, kind: input, shape index: {}]
  %s1 = inlined_call_operand.vmem [shape: s32[8,1], index: 1, kind: input, shape index: {}]
  %s2 = inlined_call_operand.vmem [shape: bf16[160,128], index: 2, kind: input, shape index: {}]
  %s3 = inlined_call_operand.hbm [shape: f32[8,128], index: 3, kind: output, shape index: {}]
  %s4 = sld [smem:[#allocation0]]
  $region22: #{ivae_forward_packed.1} parent=0
    _
  %s6 = ssub.s32 1, %s4
  %s7 = scalar_select 0, %s6, %s4
  $region1: #{ivae_forward_packed.1} parent=0
    #allocation2 [shape = 'u8[4096]{0}', space=vmem, size = 0x1000, scoped, tag = 'output window, operand 0, single buffered']
    #allocation3 [shape = 's32[1]{0}', space=sflag, size = 0x4, scoped, tag = 'scoped memory for ivae_forward_packed.1']
    %8 = vsyncpa [#allocation3], 0
    // Predicated region
    $region2: #{ivae_forward_packed.1} parent=1 // pred_check
      _
    $region3: #{ivae_forward_packed.1} parent=1 // pred_check_branch
      %10 = sbr.rel (0) target = $region5
    $region4: #{ivae_forward_packed.1} parent=1 // pred_region
      _
    $region5: #{ivae_forward_packed.1} parent=1 // pred_fallthru
      _
    // Predicated region
    $region6: #{ivae_forward_packed.1} parent=1 // pred_check
      _
    $region7: #{ivae_forward_packed.1} parent=1 // pred_check_branch
      %12 = sbr.rel (0) target = $region9
    $region8: #{ivae_forward_packed.1} parent=1 // pred_region
      _
    $region9: #{ivae_forward_packed.1} parent=1 // pred_fallthru
      _
    // Predicated region
    $region10: #{ivae_forward_packed.1} parent=1 // pred_check
      _
    $region11: #{ivae_forward_packed.1} parent=1 // pred_check_branch
      %14 = sbr.rel (0) target = $region13
    $region12: #{ivae_forward_packed.1} parent=1 // pred_region
      _
    $region13: #{ivae_forward_packed.1} parent=1 // pred_fallthru
      _
    %v16 = vld [vmem:[%s2 + $0x28] sm:$0xf]
    %v17 = vld [vmem:[%s2 + $0x2c] sm:$0xf]
    %v18 = vld [vmem:[%s2 + $0x30] sm:$0xf]
    %v19 = vld [vmem:[%s2 + $0x34] sm:$0xf]
    %v20 = vld [vmem:[%s2 + $0x38] sm:$0xf]
    %v21 = vld [vmem:[%s2 + $0x3c] sm:$0xf]
    %v22 = vld [vmem:[%s2 + $0x40] sm:$0xf]
    %v23 = vld [vmem:[%s2 + $0x44] sm:$0xf]
    %v24 = vld [vmem:[%s0] sm:$0xff]
    %v25 = vld [vmem:[%s0 + $0x8] sm:$0xff]
    %v34 = vunpack.c.l.b16 %v16
    %v35 = vunpack.c.l.b16 %v17
    %v36 = vunpack.c.l.b16 %v18
    %v37 = vunpack.c.l.b16 %v19
    %v38 = vunpack.c.l.b16 %v20
    %v39 = vunpack.c.l.b16 %v21
    %v40 = vunpack.c.l.b16 %v22
    %v41 = vunpack.c.l.b16 %v23
    %v42 = vpack.c.b16 %v35, %v34
    %v43 = vpack.c.b16 %v37, %v36
    %v44 = vpack.c.b16 %v39, %v38
    %v45 = vpack.c.b16 %v41, %v40
    %46 = vrot.lane.b32.xlu0 %v42, 96
    %v47 = vpop.permute.xlu0 %46
    %48 = vrot.lane.b32.xlu0 %v43, 96
    %v49 = vpop.permute.xlu0 %48
    %50 = vrot.lane.b32.xlu0 %v44, 96
    %v51 = vpop.permute.xlu0 %50
    %52 = vrot.lane.b32.xlu0 %v45, 96
    %v53 = vpop.permute.xlu0 %52
    %v56 = vunpack.c.l.b16 %v24
    %v57 = vunpack.c.h.b16 %v24
    %v58 = vunpack.c.l.b16 %v25
    %v59 = vunpack.c.h.b16 %v25
    %v60 = vpack.c.b16 %v56, %v56
    %v61 = vpack.c.b16 %v57, %v57
    %v62 = vpack.c.b16 %v58, %v58
    %v63 = vpack.c.b16 %v59, %v59
    %vm64 = vcmask 64512
    %v66 = vsel %vm64, %v47, 0
    %v69 = vsel %vm64, %v49, 0
    %v72 = vsel %vm64, %v51, 0
    %v75 = vsel %vm64, %v53, 0
    %vm77 = vcmask 1043456
    %v79 = vsel %vm77, %v60, 0
    %v82 = vsel %vm77, %v61, 0
    %v85 = vsel %vm77, %v62, 0
    %v88 = vsel %vm77, %v63, 0
    %90 = vmatpush.bf16.msra.mxu0 0
    %91 = vmatpush.bf16.msra.mxu0 0
    %92 = vmatpush.bf16.msra.mxu0 0
    %93 = vmatpush.bf16.msra.mxu0 0
    %94 = vmatpush.bf16.msra.mxu0 0
    %95 = vmatpush.bf16.msra.mxu0 0
    %96 = vmatpush.bf16.msra.mxu0 0
    %97 = vmatpush.bf16.msra.mxu0 %v79
    %98 = vmatmul.bf16.gmra.mxu0 %v66
    %v99 = vpop.f32.mrf.mxu0
    %v100 = vadd.f32 0.0, %v99
    %v101 = vpop.f32.mrf.mxu0
    %v102 = vadd.f32 0.0, %v101
    %103 = vmatmul.bf16.gmra.mxu0 %v69
    %v104 = vpop.f32.mrf.mxu0
    %v105 = vadd.f32 0.0, %v104
    %v106 = vpop.f32.mrf.mxu0
    %v107 = vadd.f32 0.0, %v106
    %108 = vmatmul.bf16.gmra.mxu0 %v72
    %v109 = vpop.f32.mrf.mxu0
    %v110 = vadd.f32 0.0, %v109
    %v111 = vpop.f32.mrf.mxu0
    %v112 = vadd.f32 0.0, %v111
    %113 = vmatmul.bf16.gmra.mxu0 %v75
    %v114 = vpop.f32.mrf.mxu0
    %v115 = vadd.f32 0.0, %v114
    %v116 = vpop.f32.mrf.mxu0
    %v117 = vadd.f32 0.0, %v116
    %118 = vdwg.mxu0
    %119 = vmatpush.bf16.msra.mxu0 0
    %120 = vmatpush.bf16.msra.mxu0 0
    %121 = vmatpush.bf16.msra.mxu0 0
    %122 = vmatpush.bf16.msra.mxu0 0
    %123 = vmatpush.bf16.msra.mxu0 0
    %124 = vmatpush.bf16.msra.mxu0 0
    %125 = vmatpush.bf16.msra.mxu0 0
    %126 = vmatpush.bf16.msra.mxu0 %v82
    %127 = vmatmul.bf16.gmra.mxu0 %v66
    %v128 = vpop.f32.mrf.mxu0
    %v129 = vadd.f32 0.0, %v128
    %v130 = vpop.f32.mrf.mxu0
    %v131 = vadd.f32 0.0, %v130
    %132 = vmatmul.bf16.gmra.mxu0 %v69
    %v133 = vpop.f32.mrf.mxu0
    %v134 = vadd.f32 0.0, %v133
    %v135 = vpop.f32.mrf.mxu0
    %v136 = vadd.f32 0.0, %v135
    %137 = vmatmul.bf16.gmra.mxu0 %v72
    %v138 = vpop.f32.mrf.mxu0
    %v139 = vadd.f32 0.0, %v138
    %v140 = vpop.f32.mrf.mxu0
    %v141 = vadd.f32 0.0, %v140
    %142 = vmatmul.bf16.gmra.mxu0 %v75
    %v143 = vpop.f32.mrf.mxu0
    %v144 = vadd.f32 0.0, %v143
    %v145 = vpop.f32.mrf.mxu0
    %v146 = vadd.f32 0.0, %v145
    %147 = vdwg.mxu0
    %148 = vmatpush.bf16.msra.mxu0 0
    %149 = vmatpush.bf16.msra.mxu0 0
    %150 = vmatpush.bf16.msra.mxu0 0
    %151 = vmatpush.bf16.msra.mxu0 0
    %152 = vmatpush.bf16.msra.mxu0 0
    %153 = vmatpush.bf16.msra.mxu0 0
    %154 = vmatpush.bf16.msra.mxu0 0
    %155 = vmatpush.bf16.msra.mxu0 %v85
    %156 = vmatmul.bf16.gmra.mxu0 %v66
    %v157 = vpop.f32.mrf.mxu0
    %v158 = vadd.f32 0.0, %v157
    %v159 = vpop.f32.mrf.mxu0
    %v160 = vadd.f32 0.0, %v159
    %161 = vmatmul.bf16.gmra.mxu0 %v69
    %v162 = vpop.f32.mrf.mxu0
    %v163 = vadd.f32 0.0, %v162
    %v164 = vpop.f32.mrf.mxu0
    %v165 = vadd.f32 0.0, %v164
    %166 = vmatmul.bf16.gmra.mxu0 %v72
    %v167 = vpop.f32.mrf.mxu0
    %v168 = vadd.f32 0.0, %v167
    %v169 = vpop.f32.mrf.mxu0
    %v170 = vadd.f32 0.0, %v169
    %171 = vmatmul.bf16.gmra.mxu0 %v75
    %v172 = vpop.f32.mrf.mxu0
    %v173 = vadd.f32 0.0, %v172
    %v174 = vpop.f32.mrf.mxu0
    %v175 = vadd.f32 0.0, %v174
    %176 = vdwg.mxu0
    %177 = vmatpush.bf16.msra.mxu0 0
    %178 = vmatpush.bf16.msra.mxu0 0
    %179 = vmatpush.bf16.msra.mxu0 0
    %180 = vmatpush.bf16.msra.mxu0 0
    %181 = vmatpush.bf16.msra.mxu0 0
    %182 = vmatpush.bf16.msra.mxu0 0
    %183 = vmatpush.bf16.msra.mxu0 0
    %184 = vmatpush.bf16.msra.mxu0 %v88
    %185 = vmatmul.bf16.gmra.mxu0 %v66
    %v186 = vpop.f32.mrf.mxu0
    %v187 = vadd.f32 0.0, %v186
    %v188 = vpop.f32.mrf.mxu0
    %v189 = vadd.f32 0.0, %v188
    %190 = vmatmul.bf16.gmra.mxu0 %v69
    %v191 = vpop.f32.mrf.mxu0
    %v192 = vadd.f32 0.0, %v191
    %v193 = vpop.f32.mrf.mxu0
    %v194 = vadd.f32 0.0, %v193
    %195 = vmatmul.bf16.gmra.mxu0 %v72
    %v196 = vpop.f32.mrf.mxu0
    %v197 = vadd.f32 0.0, %v196
    %v198 = vpop.f32.mrf.mxu0
    %v199 = vadd.f32 0.0, %v198
    %200 = vmatmul.bf16.gmra.mxu0 %v75
    %v201 = vpop.f32.mrf.mxu0
    %v202 = vadd.f32 0.0, %v201
    %v203 = vpop.f32.mrf.mxu0
    %v204 = vadd.f32 0.0, %v203
    %205 = vdwg.mxu0
    %v206 = vmax.f32 %v100, 0.0
    %v207 = vmax.f32 %v129, 0.0
    %v208 = vmax.f32 %v158, 0.0
    %v209 = vmax.f32 %v187, 0.0
    %v210 = vmax.f32 %v102, 0.0
    %v211 = vmax.f32 %v131, 0.0
    %v212 = vmax.f32 %v160, 0.0
    %v213 = vmax.f32 %v189, 0.0
    %v214 = vmax.f32 %v105, 0.0
    %v215 = vmax.f32 %v134, 0.0
    %v216 = vmax.f32 %v163, 0.0
    %v217 = vmax.f32 %v192, 0.0
    %v218 = vmax.f32 %v107, 0.0
    %v219 = vmax.f32 %v136, 0.0
    %v220 = vmax.f32 %v165, 0.0
    %v221 = vmax.f32 %v194, 0.0
    %v222 = vmax.f32 %v110, 0.0
    %v223 = vmax.f32 %v139, 0.0
    %v224 = vmax.f32 %v168, 0.0
    %v225 = vmax.f32 %v197, 0.0
    %v226 = vmax.f32 %v112, 0.0
    %v227 = vmax.f32 %v141, 0.0
    %v228 = vmax.f32 %v170, 0.0
    %v229 = vmax.f32 %v199, 0.0
    %v230 = vmax.f32 %v115, 0.0
    %v231 = vmax.f32 %v144, 0.0
    %v232 = vmax.f32 %v173, 0.0
    %v233 = vmax.f32 %v202, 0.0
    %v234 = vmax.f32 %v117, 0.0
    %v235 = vmax.f32 %v146, 0.0
    %v236 = vmax.f32 %v175, 0.0
    %v237 = vmax.f32 %v204, 0.0
    %v238 = vlaneseq
    %v239 = vshrl.u32 %v238, 7
    %v240 = vadd.s32 %v239, 8
    %v241 = vadd.s32 %v239, 16
    %v242 = vadd.s32 %v239, 24
    %v243 = vadd.s32 %v239, 32
    %v244 = vadd.s32 %v239, 40
    %v245 = vadd.s32 %v239, 48
    %v246 = vadd.s32 %v239, 56
    %v247 = vadd.s32 %v239, 64
    %v248 = vadd.s32 %v239, 72
    %v249 = vadd.s32 %v239, 80
    %v250 = vadd.s32 %v239, 88
    %v251 = vadd.s32 %v239, 96
    %v252 = vadd.s32 %v239, 104
    %v253 = vadd.s32 %v239, 112
    %v254 = vadd.s32 %v239, 120
    %v255 = vadd.s32 %v239, 128
    %v256 = vadd.s32 %v239, 136
    %v257 = vadd.s32 %v239, 144
    %v258 = vadd.s32 %v239, 152
    %v259 = vadd.s32 %v239, 160
    %v260 = vadd.s32 %v239, 168
    %v261 = vadd.s32 %v239, 176
    %v262 = vadd.s32 %v239, 184
    %v263 = vadd.s32 %v239, 192
    %v264 = vadd.s32 %v239, 200
    %v265 = vadd.s32 %v239, 208
    %v266 = vadd.s32 %v239, 216
    %v267 = vadd.s32 %v239, 224
    %v268 = vadd.s32 %v239, 232
    %v269 = vadd.s32 %v239, 240
    %v270 = vadd.s32 %v239, 248
    %v271 = vadd.s32 %v239, 256
    %v272 = vadd.s32 %v239, 264
    %v273 = vadd.s32 %v239, 272
    %v274 = vadd.s32 %v239, 280
    %v275 = vadd.s32 %v239, 288
    %v276 = vadd.s32 %v239, 296
    %v277 = vadd.s32 %v239, 304
    %v278 = vadd.s32 %v239, 312
    %v279 = vadd.s32 %v239, 320
    %v280 = vadd.s32 %v239, 328
    %v281 = vadd.s32 %v239, 336
    %v282 = vadd.s32 %v239, 344
    %v283 = vadd.s32 %v239, 352
    %v284 = vadd.s32 %v239, 360
    %v285 = vadd.s32 %v239, 368
    %v286 = vadd.s32 %v239, 376
    %v287 = vadd.s32 %v239, 384
    %v288 = vadd.s32 %v239, 392
    %v289 = vadd.s32 %v239, 400
    %v290 = vadd.s32 %v239, 408
    %v291 = vadd.s32 %v239, 416
    %v292 = vadd.s32 %v239, 424
    %v293 = vadd.s32 %v239, 432
    %v294 = vadd.s32 %v239, 440
    %v295 = vadd.s32 %v239, 448
    %v296 = vadd.s32 %v239, 456
    %v297 = vadd.s32 %v239, 464
    %v298 = vadd.s32 %v239, 472
    %v299 = vadd.s32 %v239, 480
    %v300 = vadd.s32 %v239, 488
    %v301 = vadd.s32 %v239, 496
    %v302 = vadd.s32 %v239, 504
    %v303 = vlaneseq
    %v304 = vand.u32 %v303, 127
    %v305 = vmul.u32 %v304, 256
    %vm306 = vcmp.ge.s32.totalorder %v239, %v305
    %vm307 = vcmp.ge.s32.totalorder %v240, %v305
    %vm308 = vcmp.ge.s32.totalorder %v241, %v305
    %vm309 = vcmp.ge.s32.totalorder %v242, %v305
    %vm310 = vcmp.ge.s32.totalorder %v243, %v305
    %vm311 = vcmp.ge.s32.totalorder %v244, %v305
    %vm312 = vcmp.ge.s32.totalorder %v245, %v305
    %vm313 = vcmp.ge.s32.totalorder %v246, %v305
    %vm314 = vcmp.ge.s32.totalorder %v247, %v305
    %vm315 = vcmp.ge.s32.totalorder %v248, %v305
    %vm316 = vcmp.ge.s32.totalorder %v249, %v305
    %vm317 = vcmp.ge.s32.totalorder %v250, %v305
    %vm318 = vcmp.ge.s32.totalorder %v251, %v305
    %vm319 = vcmp.ge.s32.totalorder %v252, %v305
    %vm320 = vcmp.ge.s32.totalorder %v253, %v305
    %vm321 = vcmp.ge.s32.totalorder %v254, %v305
    %vm322 = vcmp.ge.s32.totalorder %v255, %v305
    %vm323 = vcmp.ge.s32.totalorder %v256, %v305
    %vm324 = vcmp.ge.s32.totalorder %v257, %v305
    %vm325 = vcmp.ge.s32.totalorder %v258, %v305
    %vm326 = vcmp.ge.s32.totalorder %v259, %v305
    %vm327 = vcmp.ge.s32.totalorder %v260, %v305
    %vm328 = vcmp.ge.s32.totalorder %v261, %v305
    %vm329 = vcmp.ge.s32.totalorder %v262, %v305
    %vm330 = vcmp.ge.s32.totalorder %v263, %v305
    %vm331 = vcmp.ge.s32.totalorder %v264, %v305
    %vm332 = vcmp.ge.s32.totalorder %v265, %v305
    %vm333 = vcmp.ge.s32.totalorder %v266, %v305
    %vm334 = vcmp.ge.s32.totalorder %v267, %v305
    %vm335 = vcmp.ge.s32.totalorder %v268, %v305
    %vm336 = vcmp.ge.s32.totalorder %v269, %v305
    %vm337 = vcmp.ge.s32.totalorder %v270, %v305
    %vm338 = vcmp.ge.s32.totalorder %v271, %v305
    %vm339 = vcmp.ge.s32.totalorder %v272, %v305
    %vm340 = vcmp.ge.s32.totalorder %v273, %v305
    %vm341 = vcmp.ge.s32.totalorder %v274, %v305
    %vm342 = vcmp.ge.s32.totalorder %v275, %v305
    %vm343 = vcmp.ge.s32.totalorder %v276, %v305
    %vm344 = vcmp.ge.s32.totalorder %v277, %v305
    %vm345 = vcmp.ge.s32.totalorder %v278, %v305
    %vm346 = vcmp.ge.s32.totalorder %v279, %v305
    %vm347 = vcmp.ge.s32.totalorder %v280, %v305
    %vm348 = vcmp.ge.s32.totalorder %v281, %v305
    %vm349 = vcmp.ge.s32.totalorder %v282, %v305
    %vm350 = vcmp.ge.s32.totalorder %v283, %v305
    %vm351 = vcmp.ge.s32.totalorder %v284, %v305
    %vm352 = vcmp.ge.s32.totalorder %v285, %v305
    %vm353 = vcmp.ge.s32.totalorder %v286, %v305
    %vm354 = vcmp.ge.s32.totalorder %v287, %v305
    %vm355 = vcmp.ge.s32.totalorder %v288, %v305
    %vm356 = vcmp.ge.s32.totalorder %v289, %v305
    %vm357 = vcmp.ge.s32.totalorder %v290, %v305
    %vm358 = vcmp.ge.s32.totalorder %v291, %v305
    %vm359 = vcmp.ge.s32.totalorder %v292, %v305
    %vm360 = vcmp.ge.s32.totalorder %v293, %v305
    %vm361 = vcmp.ge.s32.totalorder %v294, %v305
    %vm362 = vcmp.ge.s32.totalorder %v295, %v305
    %vm363 = vcmp.ge.s32.totalorder %v296, %v305
    %vm364 = vcmp.ge.s32.totalorder %v297, %v305
    %vm365 = vcmp.ge.s32.totalorder %v298, %v305
    %vm366 = vcmp.ge.s32.totalorder %v299, %v305
    %vm367 = vcmp.ge.s32.totalorder %v300, %v305
    %vm368 = vcmp.ge.s32.totalorder %v301, %v305
    %vm369 = vcmp.ge.s32.totalorder %v302, %v305
    %v370 = vadd.s32 %v305, 256
    %vm371 = vcmp.lt.s32.totalorder %v239, %v370
    %vm372 = vcmp.lt.s32.totalorder %v240, %v370
    %vm373 = vcmp.lt.s32.totalorder %v241, %v370
    %vm374 = vcmp.lt.s32.totalorder %v242, %v370
    %vm375 = vcmp.lt.s32.totalorder %v243, %v370
    %vm376 = vcmp.lt.s32.totalorder %v244, %v370
    %vm377 = vcmp.lt.s32.totalorder %v245, %v370
    %vm378 = vcmp.lt.s32.totalorder %v246, %v370
    %vm379 = vcmp.lt.s32.totalorder %v247, %v370
    %vm380 = vcmp.lt.s32.totalorder %v248, %v370
    %vm381 = vcmp.lt.s32.totalorder %v249, %v370
    %vm382 = vcmp.lt.s32.totalorder %v250, %v370
    %vm383 = vcmp.lt.s32.totalorder %v251, %v370
    %vm384 = vcmp.lt.s32.totalorder %v252, %v370
    %vm385 = vcmp.lt.s32.totalorder %v253, %v370
    %vm386 = vcmp.lt.s32.totalorder %v254, %v370
    %vm387 = vcmp.lt.s32.totalorder %v255, %v370
    %vm388 = vcmp.lt.s32.totalorder %v256, %v370
    %vm389 = vcmp.lt.s32.totalorder %v257, %v370
    %vm390 = vcmp.lt.s32.totalorder %v258, %v370
    %vm391 = vcmp.lt.s32.totalorder %v259, %v370
    %vm392 = vcmp.lt.s32.totalorder %v260, %v370
    %vm393 = vcmp.lt.s32.totalorder %v261, %v370
    %vm394 = vcmp.lt.s32.totalorder %v262, %v370
    %vm395 = vcmp.lt.s32.totalorder %v263, %v370
    %vm396 = vcmp.lt.s32.totalorder %v264, %v370
    %vm397 = vcmp.lt.s32.totalorder %v265, %v370
    %vm398 = vcmp.lt.s32.totalorder %v266, %v370
    %vm399 = vcmp.lt.s32.totalorder %v267, %v370
    %vm400 = vcmp.lt.s32.totalorder %v268, %v370
    %vm401 = vcmp.lt.s32.totalorder %v269, %v370
    %vm402 = vcmp.lt.s32.totalorder %v270, %v370
    %vm403 = vcmp.lt.s32.totalorder %v271, %v370
    %vm404 = vcmp.lt.s32.totalorder %v272, %v370
    %vm405 = vcmp.lt.s32.totalorder %v273, %v370
    %vm406 = vcmp.lt.s32.totalorder %v274, %v370
    %vm407 = vcmp.lt.s32.totalorder %v275, %v370
    %vm408 = vcmp.lt.s32.totalorder %v276, %v370
    %vm409 = vcmp.lt.s32.totalorder %v277, %v370
    %vm410 = vcmp.lt.s32.totalorder %v278, %v370
    %vm411 = vcmp.lt.s32.totalorder %v279, %v370
    %vm412 = vcmp.lt.s32.totalorder %v280, %v370
    %vm413 = vcmp.lt.s32.totalorder %v281, %v370
    %vm414 = vcmp.lt.s32.totalorder %v282, %v370
    %vm415 = vcmp.lt.s32.totalorder %v283, %v370
    %vm416 = vcmp.lt.s32.totalorder %v284, %v370
    %vm417 = vcmp.lt.s32.totalorder %v285, %v370
    %vm418 = vcmp.lt.s32.totalorder %v286, %v370
    %vm419 = vcmp.lt.s32.totalorder %v287, %v370
    %vm420 = vcmp.lt.s32.totalorder %v288, %v370
    %vm421 = vcmp.lt.s32.totalorder %v289, %v370
    %vm422 = vcmp.lt.s32.totalorder %v290, %v370
    %vm423 = vcmp.lt.s32.totalorder %v291, %v370
    %vm424 = vcmp.lt.s32.totalorder %v292, %v370
    %vm425 = vcmp.lt.s32.totalorder %v293, %v370
    %vm426 = vcmp.lt.s32.totalorder %v294, %v370
    %vm427 = vcmp.lt.s32.totalorder %v295, %v370
    %vm428 = vcmp.lt.s32.totalorder %v296, %v370
    %vm429 = vcmp.lt.s32.totalorder %v297, %v370
    %vm430 = vcmp.lt.s32.totalorder %v298, %v370
    %vm431 = vcmp.lt.s32.totalorder %v299, %v370
    %vm432 = vcmp.lt.s32.totalorder %v300, %v370
    %vm433 = vcmp.lt.s32.totalorder %v301, %v370
    %vm434 = vcmp.lt.s32.totalorder %v302, %v370
    %vm435 = vmand %vm306, %vm371
    %vm436 = vmand %vm307, %vm372
    %vm437 = vmand %vm308, %vm373
    %vm438 = vmand %vm309, %vm374
    %vm439 = vmand %vm310, %vm375
    %vm440 = vmand %vm311, %vm376
    %vm441 = vmand %vm312, %vm377
    %vm442 = vmand %vm313, %vm378
    %vm443 = vmand %vm314, %vm379
    %vm444 = vmand %vm315, %vm380
    %vm445 = vmand %vm316, %vm381
    %vm446 = vmand %vm317, %vm382
    %vm447 = vmand %vm318, %vm383
    %vm448 = vmand %vm319, %vm384
    %vm449 = vmand %vm320, %vm385
    %vm450 = vmand %vm321, %vm386
    %vm451 = vmand %vm322, %vm387
    %vm452 = vmand %vm323, %vm388
    %vm453 = vmand %vm324, %vm389
    %vm454 = vmand %vm325, %vm390
    %vm455 = vmand %vm326, %vm391
    %vm456 = vmand %vm327, %vm392
    %vm457 = vmand %vm328, %vm393
    %vm458 = vmand %vm329, %vm394
    %vm459 = vmand %vm330, %vm395
    %vm460 = vmand %vm331, %vm396
    %vm461 = vmand %vm332, %vm397
    %vm462 = vmand %vm333, %vm398
    %vm463 = vmand %vm334, %vm399
    %vm464 = vmand %vm335, %vm400
    %vm465 = vmand %vm336, %vm401
    %vm466 = vmand %vm337, %vm402
    %vm467 = vmand %vm338, %vm403
    %vm468 = vmand %vm339, %vm404
    %vm469 = vmand %vm340, %vm405
    %vm470 = vmand %vm341, %vm406
    %vm471 = vmand %vm342, %vm407
    %vm472 = vmand %vm343, %vm408
    %vm473 = vmand %vm344, %vm409
    %vm474 = vmand %vm345, %vm410
    %vm475 = vmand %vm346, %vm411
    %vm476 = vmand %vm347, %vm412
    %vm477 = vmand %vm348, %vm413
    %vm478 = vmand %vm349, %vm414
    %vm479 = vmand %vm350, %vm415
    %vm480 = vmand %vm351, %vm416
    %vm481 = vmand %vm352, %vm417
    %vm482 = vmand %vm353, %vm418
    %vm483 = vmand %vm354, %vm419
    %vm484 = vmand %vm355, %vm420
    %vm485 = vmand %vm356, %vm421
    %vm486 = vmand %vm357, %vm422
    %vm487 = vmand %vm358, %vm423
    %vm488 = vmand %vm359, %vm424
    %vm489 = vmand %vm360, %vm425
    %vm490 = vmand %vm361, %vm426
    %vm491 = vmand %vm362, %vm427
    %vm492 = vmand %vm363, %vm428
    %vm493 = vmand %vm364, %vm429
    %vm494 = vmand %vm365, %vm430
    %vm495 = vmand %vm366, %vm431
    %vm496 = vmand %vm367, %vm432
    %vm497 = vmand %vm368, %vm433
    %vm498 = vmand %vm369, %vm434
    %v499 = vsel %vm435, 1, 0
    %v500 = vsel %vm436, 1, 0
    %v501 = vsel %vm437, 1, 0
    %v502 = vsel %vm438, 1, 0
    %v503 = vsel %vm439, 1, 0
    %v504 = vsel %vm440, 1, 0
    %v505 = vsel %vm441, 1, 0
    %v506 = vsel %vm442, 1, 0
    %v507 = vsel %vm443, 1, 0
    %v508 = vsel %vm444, 1, 0
    %v509 = vsel %vm445, 1, 0
    %v510 = vsel %vm446, 1, 0
    %v511 = vsel %vm447, 1, 0
    %v512 = vsel %vm448, 1, 0
    %v513 = vsel %vm449, 1, 0
    %v514 = vsel %vm450, 1, 0
    %v515 = vsel %vm451, 1, 0
    %v516 = vsel %vm452, 1, 0
    %v517 = vsel %vm453, 1, 0
    %v518 = vsel %vm454, 1, 0
    %v519 = vsel %vm455, 1, 0
    %v520 = vsel %vm456, 1, 0
    %v521 = vsel %vm457, 1, 0
    %v522 = vsel %vm458, 1, 0
    %v523 = vsel %vm459, 1, 0
    %v524 = vsel %vm460, 1, 0
    %v525 = vsel %vm461, 1, 0
    %v526 = vsel %vm462, 1, 0
    %v527 = vsel %vm463, 1, 0
    %v528 = vsel %vm464, 1, 0
    %v529 = vsel %vm465, 1, 0
    %v530 = vsel %vm466, 1, 0
    %v531 = vsel %vm467, 1, 0
    %v532 = vsel %vm468, 1, 0
    %v533 = vsel %vm469, 1, 0
    %v534 = vsel %vm470, 1, 0
    %v535 = vsel %vm471, 1, 0
    %v536 = vsel %vm472, 1, 0
    %v537 = vsel %vm473, 1, 0
    %v538 = vsel %vm474, 1, 0
    %v539 = vsel %vm475, 1, 0
    %v540 = vsel %vm476, 1, 0
    %v541 = vsel %vm477, 1, 0
    %v542 = vsel %vm478, 1, 0
    %v543 = vsel %vm479, 1, 0
    %v544 = vsel %vm480, 1, 0
    %v545 = vsel %vm481, 1, 0
    %v546 = vsel %vm482, 1, 0
    %v547 = vsel %vm483, 1, 0
    %v548 = vsel %vm484, 1, 0
    %v549 = vsel %vm485, 1, 0
    %v550 = vsel %vm486, 1, 0
    %v551 = vsel %vm487, 1, 0
    %v552 = vsel %vm488, 1, 0
    %v553 = vsel %vm489, 1, 0
    %v554 = vsel %vm490, 1, 0
    %v555 = vsel %vm491, 1, 0
    %v556 = vsel %vm492, 1, 0
    %v557 = vsel %vm493, 1, 0
    %v558 = vsel %vm494, 1, 0
    %v559 = vsel %vm495, 1, 0
    %v560 = vsel %vm496, 1, 0
    %v561 = vsel %vm497, 1, 0
    %v562 = vsel %vm498, 1, 0
    %v563 = vcvt.s32.f32 %v499
    %v564 = vcvt.s32.f32 %v500
    %v565 = vcvt.s32.f32 %v501
    %v566 = vcvt.s32.f32 %v502
    %v567 = vcvt.s32.f32 %v503
    %v568 = vcvt.s32.f32 %v504
    %v569 = vcvt.s32.f32 %v505
    %v570 = vcvt.s32.f32 %v506
    %v571 = vcvt.s32.f32 %v507
    %v572 = vcvt.s32.f32 %v508
    %v573 = vcvt.s32.f32 %v509
    %v574 = vcvt.s32.f32 %v510
    %v575 = vcvt.s32.f32 %v511
    %v576 = vcvt.s32.f32 %v512
    %v577 = vcvt.s32.f32 %v513
    %v578 = vcvt.s32.f32 %v514
    %v579 = vcvt.s32.f32 %v515
    %v580 = vcvt.s32.f32 %v516
    %v581 = vcvt.s32.f32 %v517
    %v582 = vcvt.s32.f32 %v518
    %v583 = vcvt.s32.f32 %v519
    %v584 = vcvt.s32.f32 %v520
    %v585 = vcvt.s32.f32 %v521
    %v586 = vcvt.s32.f32 %v522
    %v587 = vcvt.s32.f32 %v523
    %v588 = vcvt.s32.f32 %v524
    %v589 = vcvt.s32.f32 %v525
    %v590 = vcvt.s32.f32 %v526
    %v591 = vcvt.s32.f32 %v527
    %v592 = vcvt.s32.f32 %v528
    %v593 = vcvt.s32.f32 %v529
    %v594 = vcvt.s32.f32 %v530
    %v595 = vcvt.s32.f32 %v531
    %v596 = vcvt.s32.f32 %v532
    %v597 = vcvt.s32.f32 %v533
    %v598 = vcvt.s32.f32 %v534
    %v599 = vcvt.s32.f32 %v535
    %v600 = vcvt.s32.f32 %v536
    %v601 = vcvt.s32.f32 %v537
    %v602 = vcvt.s32.f32 %v538
    %v603 = vcvt.s32.f32 %v539
    %v604 = vcvt.s32.f32 %v540
    %v605 = vcvt.s32.f32 %v541
    %v606 = vcvt.s32.f32 %v542
    %v607 = vcvt.s32.f32 %v543
    %v608 = vcvt.s32.f32 %v544
    %v609 = vcvt.s32.f32 %v545
    %v610 = vcvt.s32.f32 %v546
    %v611 = vcvt.s32.f32 %v547
    %v612 = vcvt.s32.f32 %v548
    %v613 = vcvt.s32.f32 %v549
    %v614 = vcvt.s32.f32 %v550
    %v615 = vcvt.s32.f32 %v551
    %v616 = vcvt.s32.f32 %v552
    %v617 = vcvt.s32.f32 %v553
    %v618 = vcvt.s32.f32 %v554
    %v619 = vcvt.s32.f32 %v555
    %v620 = vcvt.s32.f32 %v556
    %v621 = vcvt.s32.f32 %v557
    %v622 = vcvt.s32.f32 %v558
    %v623 = vcvt.s32.f32 %v559
    %v624 = vcvt.s32.f32 %v560
    %v625 = vcvt.s32.f32 %v561
    %v626 = vcvt.s32.f32 %v562
    %v627 = vld [vmem:[%s0 + $0x10] sm:$0xff]
    %v628 = vld [vmem:[%s0 + $0x18] sm:$0xff]
    %v631 = vunpack.c.l.b16 %v627
    %v632 = vunpack.c.h.b16 %v627
    %v633 = vunpack.c.l.b16 %v628
    %v634 = vunpack.c.h.b16 %v628
    %v635 = vpack.c.b16 %v631, %v631
    %v636 = vpack.c.b16 %v632, %v632
    %v637 = vpack.c.b16 %v633, %v633
    %v638 = vpack.c.b16 %v634, %v634
    %v640 = vsel %vm77, %v635, 0
    %v643 = vsel %vm77, %v636, 0
    %v646 = vsel %vm77, %v637, 0
    %v649 = vsel %vm77, %v638, 0
    %651 = vmatpush.bf16.msra.mxu0 0
    %652 = vmatpush.bf16.msra.mxu0 0
    %653 = vmatpush.bf16.msra.mxu0 0
    %654 = vmatpush.bf16.msra.mxu0 0
    %655 = vmatpush.bf16.msra.mxu0 0
    %656 = vmatpush.bf16.msra.mxu0 0
    %657 = vmatpush.bf16.msra.mxu0 0
    %658 = vmatpush.bf16.msra.mxu0 %v640
    %659 = vmatmul.bf16.gmra.mxu0 %v66
    %v660 = vpop.f32.mrf.mxu0
    %v661 = vadd.f32 0.0, %v660
    %v662 = vpop.f32.mrf.mxu0
    %v663 = vadd.f32 0.0, %v662
    %664 = vmatmul.bf16.gmra.mxu0 %v69
    %v665 = vpop.f32.mrf.mxu0
    %v666 = vadd.f32 0.0, %v665
    %v667 = vpop.f32.mrf.mxu0
    %v668 = vadd.f32 0.0, %v667
    %669 = vmatmul.bf16.gmra.mxu0 %v72
    %v670 = vpop.f32.mrf.mxu0
    %v671 = vadd.f32 0.0, %v670
    %v672 = vpop.f32.mrf.mxu0
    %v673 = vadd.f32 0.0, %v672
    %674 = vmatmul.bf16.gmra.mxu0 %v75
    %v675 = vpop.f32.mrf.mxu0
    %v676 = vadd.f32 0.0, %v675
    %v677 = vpop.f32.mrf.mxu0
    %v678 = vadd.f32 0.0, %v677
    %679 = vdwg.mxu0
    %680 = vmatpush.bf16.msra.mxu0 0
    %681 = vmatpush.bf16.msra.mxu0 0
    %682 = vmatpush.bf16.msra.mxu0 0
    %683 = vmatpush.bf16.msra.mxu0 0
    %684 = vmatpush.bf16.msra.mxu0 0
    %685 = vmatpush.bf16.msra.mxu0 0
    %686 = vmatpush.bf16.msra.mxu0 0
    %687 = vmatpush.bf16.msra.mxu0 %v643
    %688 = vmatmul.bf16.gmra.mxu0 %v66
    %v689 = vpop.f32.mrf.mxu0
    %v690 = vadd.f32 0.0, %v689
    %v691 = vpop.f32.mrf.mxu0
    %v692 = vadd.f32 0.0, %v691
    %693 = vmatmul.bf16.gmra.mxu0 %v69
    %v694 = vpop.f32.mrf.mxu0
    %v695 = vadd.f32 0.0, %v694
    %v696 = vpop.f32.mrf.mxu0
    %v697 = vadd.f32 0.0, %v696
    %698 = vmatmul.bf16.gmra.mxu0 %v72
    %v699 = vpop.f32.mrf.mxu0
    %v700 = vadd.f32 0.0, %v699
    %v701 = vpop.f32.mrf.mxu0
    %v702 = vadd.f32 0.0, %v701
    %703 = vmatmul.bf16.gmra.mxu0 %v75
    %v704 = vpop.f32.mrf.mxu0
    %v705 = vadd.f32 0.0, %v704
    %v706 = vpop.f32.mrf.mxu0
    %v707 = vadd.f32 0.0, %v706
    %708 = vdwg.mxu0
    %709 = vmatpush.bf16.msra.mxu0 0
    %710 = vmatpush.bf16.msra.mxu0 0
    %711 = vmatpush.bf16.msra.mxu0 0
    %712 = vmatpush.bf16.msra.mxu0 0
    %713 = vmatpush.bf16.msra.mxu0 0
    %714 = vmatpush.bf16.msra.mxu0 0
    %715 = vmatpush.bf16.msra.mxu0 0
    %716 = vmatpush.bf16.msra.mxu0 %v646
    %717 = vmatmul.bf16.gmra.mxu0 %v66
    %v718 = vpop.f32.mrf.mxu0
    %v719 = vadd.f32 0.0, %v718
    %v720 = vpop.f32.mrf.mxu0
    %v721 = vadd.f32 0.0, %v720
    %722 = vmatmul.bf16.gmra.mxu0 %v69
    %v723 = vpop.f32.mrf.mxu0
    %v724 = vadd.f32 0.0, %v723
    %v725 = vpop.f32.mrf.mxu0
    %v726 = vadd.f32 0.0, %v725
    %727 = vmatmul.bf16.gmra.mxu0 %v72
    %v728 = vpop.f32.mrf.mxu0
    %v729 = vadd.f32 0.0, %v728
    %v730 = vpop.f32.mrf.mxu0
    %v731 = vadd.f32 0.0, %v730
    %732 = vmatmul.bf16.gmra.mxu0 %v75
    %v733 = vpop.f32.mrf.mxu0
    %v734 = vadd.f32 0.0, %v733
    %v735 = vpop.f32.mrf.mxu0
    %v736 = vadd.f32 0.0, %v735
    %737 = vdwg.mxu0
    %738 = vmatpush.bf16.msra.mxu0 0
    %739 = vmatpush.bf16.msra.mxu0 0
    %740 = vmatpush.bf16.msra.mxu0 0
    %741 = vmatpush.bf16.msra.mxu0 0
    %742 = vmatpush.bf16.msra.mxu0 0
    %743 = vmatpush.bf16.msra.mxu0 0
    %744 = vmatpush.bf16.msra.mxu0 0
    %745 = vmatpush.bf16.msra.mxu0 %v649
    %746 = vmatmul.bf16.gmra.mxu0 %v66
    %v747 = vpop.f32.mrf.mxu0
    %v748 = vadd.f32 0.0, %v747
    %v749 = vpop.f32.mrf.mxu0
    %v750 = vadd.f32 0.0, %v749
    %751 = vmatmul.bf16.gmra.mxu0 %v69
    %v752 = vpop.f32.mrf.mxu0
    %v753 = vadd.f32 0.0, %v752
    %v754 = vpop.f32.mrf.mxu0
    %v755 = vadd.f32 0.0, %v754
    %756 = vmatmul.bf16.gmra.mxu0 %v72
    %v757 = vpop.f32.mrf.mxu0
    %v758 = vadd.f32 0.0, %v757
    %v759 = vpop.f32.mrf.mxu0
    %v760 = vadd.f32 0.0, %v759
    %761 = vmatmul.bf16.gmra.mxu0 %v75
    %v762 = vpop.f32.mrf.mxu0
    %v763 = vadd.f32 0.0, %v762
    %v764 = vpop.f32.mrf.mxu0
    %v765 = vadd.f32 0.0, %v764
    %766 = vdwg.mxu0
    %v767 = vmax.f32 %v661, 0.0
    %v768 = vmax.f32 %v690, 0.0
    %v769 = vmax.f32 %v719, 0.0
    %v770 = vmax.f32 %v748, 0.0
    %v771 = vmax.f32 %v663, 0.0
    %v772 = vmax.f32 %v692, 0.0
    %v773 = vmax.f32 %v721, 0.0
    %v774 = vmax.f32 %v750, 0.0
    %v775 = vmax.f32 %v666, 0.0
    %v776 = vmax.f32 %v695, 0.0
    %v777 = vmax.f32 %v724, 0.0
    %v778 = vmax.f32 %v753, 0.0
    %v779 = vmax.f32 %v668, 0.0
    %v780 = vmax.f32 %v697, 0.0
    %v781 = vmax.f32 %v726, 0.0
    %v782 = vmax.f32 %v755, 0.0
    %v783 = vmax.f32 %v671, 0.0
    %v784 = vmax.f32 %v700, 0.0
    %v785 = vmax.f32 %v729, 0.0
    %v786 = vmax.f32 %v758, 0.0
    %v787 = vmax.f32 %v673, 0.0
    %v788 = vmax.f32 %v702, 0.0
    %v789 = vmax.f32 %v731, 0.0
    %v790 = vmax.f32 %v760, 0.0
    %v791 = vmax.f32 %v676, 0.0
    %v792 = vmax.f32 %v705, 0.0
    %v793 = vmax.f32 %v734, 0.0
    %v794 = vmax.f32 %v763, 0.0
    %v795 = vmax.f32 %v678, 0.0
    %v796 = vmax.f32 %v707, 0.0
    %v797 = vmax.f32 %v736, 0.0
    %v798 = vmax.f32 %v765, 0.0
    %v799 = vadd.s32 %v239, 512
    %v800 = vadd.s32 %v240, 512
    %v801 = vadd.s32 %v241, 512
    %v802 = vadd.s32 %v242, 512
    %v803 = vadd.s32 %v243, 512
    %v804 = vadd.s32 %v244, 512
    %v805 = vadd.s32 %v245, 512
    %v806 = vadd.s32 %v246, 512
    %v807 = vadd.s32 %v247, 512
    %v808 = vadd.s32 %v248, 512
    %v809 = vadd.s32 %v249, 512
    %v810 = vadd.s32 %v250, 512
    %v811 = vadd.s32 %v251, 512
    %v812 = vadd.s32 %v252, 512
    %v813 = vadd.s32 %v253, 512
    %v814 = vadd.s32 %v254, 512
    %v815 = vadd.s32 %v255, 512
    %v816 = vadd.s32 %v256, 512
    %v817 = vadd.s32 %v257, 512
    %v818 = vadd.s32 %v258, 512
    %v819 = vadd.s32 %v259, 512
    %v820 = vadd.s32 %v260, 512
    %v821 = vadd.s32 %v261, 512
    %v822 = vadd.s32 %v262, 512
    %v823 = vadd.s32 %v263, 512
    %v824 = vadd.s32 %v264, 512
    %v825 = vadd.s32 %v265, 512
    %v826 = vadd.s32 %v266, 512
    %v827 = vadd.s32 %v267, 512
    %v828 = vadd.s32 %v268, 512
    %v829 = vadd.s32 %v269, 512
    %v830 = vadd.s32 %v270, 512
    %v831 = vadd.s32 %v271, 512
    %v832 = vadd.s32 %v272, 512
    %v833 = vadd.s32 %v273, 512
    %v834 = vadd.s32 %v274, 512
    %v835 = vadd.s32 %v275, 512
    %v836 = vadd.s32 %v276, 512
    %v837 = vadd.s32 %v277, 512
    %v838 = vadd.s32 %v278, 512
    %v839 = vadd.s32 %v279, 512
    %v840 = vadd.s32 %v280, 512
    %v841 = vadd.s32 %v281, 512
    %v842 = vadd.s32 %v282, 512
    %v843 = vadd.s32 %v283, 512
    %v844 = vadd.s32 %v284, 512
    %v845 = vadd.s32 %v285, 512
    %v846 = vadd.s32 %v286, 512
    %v847 = vadd.s32 %v287, 512
    %v848 = vadd.s32 %v288, 512
    %v849 = vadd.s32 %v289, 512
    %v850 = vadd.s32 %v290, 512
    %v851 = vadd.s32 %v291, 512
    %v852 = vadd.s32 %v292, 512
    %v853 = vadd.s32 %v293, 512
    %v854 = vadd.s32 %v294, 512
    %v855 = vadd.s32 %v295, 512
    %v856 = vadd.s32 %v296, 512
    %v857 = vadd.s32 %v297, 512
    %v858 = vadd.s32 %v298, 512
    %v859 = vadd.s32 %v299, 512
    %v860 = vadd.s32 %v300, 512
    %v861 = vadd.s32 %v301, 512
    %v862 = vadd.s32 %v302, 512
    %vm863 = vcmp.ge.s32.totalorder %v799, %v305
    %vm864 = vcmp.ge.s32.totalorder %v800, %v305
    %vm865 = vcmp.ge.s32.totalorder %v801, %v305
    %vm866 = vcmp.ge.s32.totalorder %v802, %v305
    %vm867 = vcmp.ge.s32.totalorder %v803, %v305
    %vm868 = vcmp.ge.s32.totalorder %v804, %v305
    %vm869 = vcmp.ge.s32.totalorder %v805, %v305
    %vm870 = vcmp.ge.s32.totalorder %v806, %v305
    %vm871 = vcmp.ge.s32.totalorder %v807, %v305
    %vm872 = vcmp.ge.s32.totalorder %v808, %v305
    %vm873 = vcmp.ge.s32.totalorder %v809, %v305
    %vm874 = vcmp.ge.s32.totalorder %v810, %v305
    %vm875 = vcmp.ge.s32.totalorder %v811, %v305
    %vm876 = vcmp.ge.s32.totalorder %v812, %v305
    %vm877 = vcmp.ge.s32.totalorder %v813, %v305
    %vm878 = vcmp.ge.s32.totalorder %v814, %v305
    %vm879 = vcmp.ge.s32.totalorder %v815, %v305
    %vm880 = vcmp.ge.s32.totalorder %v816, %v305
    %vm881 = vcmp.ge.s32.totalorder %v817, %v305
    %vm882 = vcmp.ge.s32.totalorder %v818, %v305
    %vm883 = vcmp.ge.s32.totalorder %v819, %v305
    %vm884 = vcmp.ge.s32.totalorder %v820, %v305
    %vm885 = vcmp.ge.s32.totalorder %v821, %v305
    %vm886 = vcmp.ge.s32.totalorder %v822, %v305
    %vm887 = vcmp.ge.s32.totalorder %v823, %v305
    %vm888 = vcmp.ge.s32.totalorder %v824, %v305
    %vm889 = vcmp.ge.s32.totalorder %v825, %v305
    %vm890 = vcmp.ge.s32.totalorder %v826, %v305
    %vm891 = vcmp.ge.s32.totalorder %v827, %v305
    %vm892 = vcmp.ge.s32.totalorder %v828, %v305
    %vm893 = vcmp.ge.s32.totalorder %v829, %v305
    %vm894 = vcmp.ge.s32.totalorder %v830, %v305
    %vm895 = vcmp.ge.s32.totalorder %v831, %v305
    %vm896 = vcmp.ge.s32.totalorder %v832, %v305
    %vm897 = vcmp.ge.s32.totalorder %v833, %v305
    %vm898 = vcmp.ge.s32.totalorder %v834, %v305
    %vm899 = vcmp.ge.s32.totalorder %v835, %v305
    %vm900 = vcmp.ge.s32.totalorder %v836, %v305
    %vm901 = vcmp.ge.s32.totalorder %v837, %v305
    %vm902 = vcmp.ge.s32.totalorder %v838, %v305
    %vm903 = vcmp.ge.s32.totalorder %v839, %v305
    %vm904 = vcmp.ge.s32.totalorder %v840, %v305
    %vm905 = vcmp.ge.s32.totalorder %v841, %v305
    %vm906 = vcmp.ge.s32.totalorder %v842, %v305
    %vm907 = vcmp.ge.s32.totalorder %v843, %v305
    %vm908 = vcmp.ge.s32.totalorder %v844, %v305
    %vm909 = vcmp.ge.s32.totalorder %v845, %v305
    %vm910 = vcmp.ge.s32.totalorder %v846, %v305
    %vm911 = vcmp.ge.s32.totalorder %v847, %v305
    %vm912 = vcmp.ge.s32.totalorder %v848, %v305
    %vm913 = vcmp.ge.s32.totalorder %v849, %v305
    %vm914 = vcmp.ge.s32.totalorder %v850, %v305
    %vm915 = vcmp.ge.s32.totalorder %v851, %v305
    %vm916 = vcmp.ge.s32.totalorder %v852, %v305
    %vm917 = vcmp.ge.s32.totalorder %v853, %v305
    %vm918 = vcmp.ge.s32.totalorder %v854, %v305
    %vm919 = vcmp.ge.s32.totalorder %v855, %v305
    %vm920 = vcmp.ge.s32.totalorder %v856, %v305
    %vm921 = vcmp.ge.s32.totalorder %v857, %v305
    %vm922 = vcmp.ge.s32.totalorder %v858, %v305
    %vm923 = vcmp.ge.s32.totalorder %v859, %v305
    %vm924 = vcmp.ge.s32.totalorder %v860, %v305
    %vm925 = vcmp.ge.s32.totalorder %v861, %v305
    %vm926 = vcmp.ge.s32.totalorder %v862, %v305
    %vm927 = vcmp.lt.s32.totalorder %v799, %v370
    %vm928 = vcmp.lt.s32.totalorder %v800, %v370
    %vm929 = vcmp.lt.s32.totalorder %v801, %v370
    %vm930 = vcmp.lt.s32.totalorder %v802, %v370
    %vm931 = vcmp.lt.s32.totalorder %v803, %v370
    %vm932 = vcmp.lt.s32.totalorder %v804, %v370
    %vm933 = vcmp.lt.s32.totalorder %v805, %v370
    %vm934 = vcmp.lt.s32.totalorder %v806, %v370
    %vm935 = vcmp.lt.s32.totalorder %v807, %v370
    %vm936 = vcmp.lt.s32.totalorder %v808, %v370
    %vm937 = vcmp.lt.s32.totalorder %v809, %v370
    %vm938 = vcmp.lt.s32.totalorder %v810, %v370
    %vm939 = vcmp.lt.s32.totalorder %v811, %v370
    %vm940 = vcmp.lt.s32.totalorder %v812, %v370
    %vm941 = vcmp.lt.s32.totalorder %v813, %v370
    %vm942 = vcmp.lt.s32.totalorder %v814, %v370
    %vm943 = vcmp.lt.s32.totalorder %v815, %v370
    %vm944 = vcmp.lt.s32.totalorder %v816, %v370
    %vm945 = vcmp.lt.s32.totalorder %v817, %v370
    %vm946 = vcmp.lt.s32.totalorder %v818, %v370
    %vm947 = vcmp.lt.s32.totalorder %v819, %v370
    %vm948 = vcmp.lt.s32.totalorder %v820, %v370
    %vm949 = vcmp.lt.s32.totalorder %v821, %v370
    %vm950 = vcmp.lt.s32.totalorder %v822, %v370
    %vm951 = vcmp.lt.s32.totalorder %v823, %v370
    %vm952 = vcmp.lt.s32.totalorder %v824, %v370
    %vm953 = vcmp.lt.s32.totalorder %v825, %v370
    %vm954 = vcmp.lt.s32.totalorder %v826, %v370
    %vm955 = vcmp.lt.s32.totalorder %v827, %v370
    %vm956 = vcmp.lt.s32.totalorder %v828, %v370
    %vm957 = vcmp.lt.s32.totalorder %v829, %v370
    %vm958 = vcmp.lt.s32.totalorder %v830, %v370
    %vm959 = vcmp.lt.s32.totalorder %v831, %v370
    %vm960 = vcmp.lt.s32.totalorder %v832, %v370
    %vm961 = vcmp.lt.s32.totalorder %v833, %v370
    %vm962 = vcmp.lt.s32.totalorder %v834, %v370
    %vm963 = vcmp.lt.s32.totalorder %v835, %v370
    %vm964 = vcmp.lt.s32.totalorder %v836, %v370
    %vm965 = vcmp.lt.s32.totalorder %v837, %v370
    %vm966 = vcmp.lt.s32.totalorder %v838, %v370
    %vm967 = vcmp.lt.s32.totalorder %v839, %v370
    %vm968 = vcmp.lt.s32.totalorder %v840, %v370
    %vm969 = vcmp.lt.s32.totalorder %v841, %v370
    %vm970 = vcmp.lt.s32.totalorder %v842, %v370
    %vm971 = vcmp.lt.s32.totalorder %v843, %v370
    %vm972 = vcmp.lt.s32.totalorder %v844, %v370
    %vm973 = vcmp.lt.s32.totalorder %v845, %v370
    %vm974 = vcmp.lt.s32.totalorder %v846, %v370
    %vm975 = vcmp.lt.s32.totalorder %v847, %v370
    %vm976 = vcmp.lt.s32.totalorder %v848, %v370
    %vm977 = vcmp.lt.s32.totalorder %v849, %v370
    %vm978 = vcmp.lt.s32.totalorder %v850, %v370
    %vm979 = vcmp.lt.s32.totalorder %v851, %v370
    %vm980 = vcmp.lt.s32.totalorder %v852, %v370
    %vm981 = vcmp.lt.s32.totalorder %v853, %v370
    %vm982 = vcmp.lt.s32.totalorder %v854, %v370
    %vm983 = vcmp.lt.s32.totalorder %v855, %v370
    %vm984 = vcmp.lt.s32.totalorder %v856, %v370
    %vm985 = vcmp.lt.s32.totalorder %v857, %v370
    %vm986 = vcmp.lt.s32.totalorder %v858, %v370
    %vm987 = vcmp.lt.s32.totalorder %v859, %v370
    %vm988 = vcmp.lt.s32.totalorder %v860, %v370
    %vm989 = vcmp.lt.s32.totalorder %v861, %v370
    %vm990 = vcmp.lt.s32.totalorder %v862, %v370
    %vm991 = vmand %vm863, %vm927
    %vm992 = vmand %vm864, %vm928
    %vm993 = vmand %vm865, %vm929
    %vm994 = vmand %vm866, %vm930
    %vm995 = vmand %vm867, %vm931
    %vm996 = vmand %vm868, %vm932
    %vm997 = vmand %vm869, %vm933
    %vm998 = vmand %vm870, %vm934
    %vm999 = vmand %vm871, %vm935
    %vm1000 = vmand %vm872, %vm936
    %vm1001 = vmand %vm873, %vm937
    %vm1002 = vmand %vm874, %vm938
    %vm1003 = vmand %vm875, %vm939
    %vm1004 = vmand %vm876, %vm940
    %vm1005 = vmand %vm877, %vm941
    %vm1006 = vmand %vm878, %vm942
    %vm1007 = vmand %vm879, %vm943
    %vm1008 = vmand %vm880, %vm944
    %vm1009 = vmand %vm881, %vm945
    %vm1010 = vmand %vm882, %vm946
    %vm1011 = vmand %vm883, %vm947
    %vm1012 = vmand %vm884, %vm948
    %vm1013 = vmand %vm885, %vm949
    %vm1014 = vmand %vm886, %vm950
    %vm1015 = vmand %vm887, %vm951
    %vm1016 = vmand %vm888, %vm952
    %vm1017 = vmand %vm889, %vm953
    %vm1018 = vmand %vm890, %vm954
    %vm1019 = vmand %vm891, %vm955
    %vm1020 = vmand %vm892, %vm956
    %vm1021 = vmand %vm893, %vm957
    %vm1022 = vmand %vm894, %vm958
    %vm1023 = vmand %vm895, %vm959
    %vm1024 = vmand %vm896, %vm960
    %vm1025 = vmand %vm897, %vm961
    %vm1026 = vmand %vm898, %vm962
    %vm1027 = vmand %vm899, %vm963
    %vm1028 = vmand %vm900, %vm964
    %vm1029 = vmand %vm901, %vm965
    %vm1030 = vmand %vm902, %vm966
    %vm1031 = vmand %vm903, %vm967
    %vm1032 = vmand %vm904, %vm968
    %vm1033 = vmand %vm905, %vm969
    %vm1034 = vmand %vm906, %vm970
    %vm1035 = vmand %vm907, %vm971
    %vm1036 = vmand %vm908, %vm972
    %vm1037 = vmand %vm909, %vm973
    %vm1038 = vmand %vm910, %vm974
    %vm1039 = vmand %vm911, %vm975
    %vm1040 = vmand %vm912, %vm976
    %vm1041 = vmand %vm913, %vm977
    %vm1042 = vmand %vm914, %vm978
    %vm1043 = vmand %vm915, %vm979
    %vm1044 = vmand %vm916, %vm980
    %vm1045 = vmand %vm917, %vm981
    %vm1046 = vmand %vm918, %vm982
    %vm1047 = vmand %vm919, %vm983
    %vm1048 = vmand %vm920, %vm984
    %vm1049 = vmand %vm921, %vm985
    %vm1050 = vmand %vm922, %vm986
    %vm1051 = vmand %vm923, %vm987
    %vm1052 = vmand %vm924, %vm988
    %vm1053 = vmand %vm925, %vm989
    %vm1054 = vmand %vm926, %vm990
    %v1055 = vsel %vm991, 1, 0
    %v1056 = vsel %vm992, 1, 0
    %v1057 = vsel %vm993, 1, 0
    %v1058 = vsel %vm994, 1, 0
    %v1059 = vsel %vm995, 1, 0
    %v1060 = vsel %vm996, 1, 0
    %v1061 = vsel %vm997, 1, 0
    %v1062 = vsel %vm998, 1, 0
    %v1063 = vsel %vm999, 1, 0
    %v1064 = vsel %vm1000, 1, 0
    %v1065 = vsel %vm1001, 1, 0
    %v1066 = vsel %vm1002, 1, 0
    %v1067 = vsel %vm1003, 1, 0
    %v1068 = vsel %vm1004, 1, 0
    %v1069 = vsel %vm1005, 1, 0
    %v1070 = vsel %vm1006, 1, 0
    %v1071 = vsel %vm1007, 1, 0
    %v1072 = vsel %vm1008, 1, 0
    %v1073 = vsel %vm1009, 1, 0
    %v1074 = vsel %vm1010, 1, 0
    %v1075 = vsel %vm1011, 1, 0
    %v1076 = vsel %vm1012, 1, 0
    %v1077 = vsel %vm1013, 1, 0
    %v1078 = vsel %vm1014, 1, 0
    %v1079 = vsel %vm1015, 1, 0
    %v1080 = vsel %vm1016, 1, 0
    %v1081 = vsel %vm1017, 1, 0
    %v1082 = vsel %vm1018, 1, 0
    %v1083 = vsel %vm1019, 1, 0
    %v1084 = vsel %vm1020, 1, 0
    %v1085 = vsel %vm1021, 1, 0
    %v1086 = vsel %vm1022, 1, 0
    %v1087 = vsel %vm1023, 1, 0
    %v1088 = vsel %vm1024, 1, 0
    %v1089 = vsel %vm1025, 1, 0
    %v1090 = vsel %vm1026, 1, 0
    %v1091 = vsel %vm1027, 1, 0
    %v1092 = vsel %vm1028, 1, 0
    %v1093 = vsel %vm1029, 1, 0
    %v1094 = vsel %vm1030, 1, 0
    %v1095 = vsel %vm1031, 1, 0
    %v1096 = vsel %vm1032, 1, 0
    %v1097 = vsel %vm1033, 1, 0
    %v1098 = vsel %vm1034, 1, 0
    %v1099 = vsel %vm1035, 1, 0
    %v1100 = vsel %vm1036, 1, 0
    %v1101 = vsel %vm1037, 1, 0
    %v1102 = vsel %vm1038, 1, 0
    %v1103 = vsel %vm1039, 1, 0
    %v1104 = vsel %vm1040, 1, 0
    %v1105 = vsel %vm1041, 1, 0
    %v1106 = vsel %vm1042, 1, 0
    %v1107 = vsel %vm1043, 1, 0
    %v1108 = vsel %vm1044, 1, 0
    %v1109 = vsel %vm1045, 1, 0
    %v1110 = vsel %vm1046, 1, 0
    %v1111 = vsel %vm1047, 1, 0
    %v1112 = vsel %vm1048, 1, 0
    %v1113 = vsel %vm1049, 1, 0
    %v1114 = vsel %vm1050, 1, 0
    %v1115 = vsel %vm1051, 1, 0
    %v1116 = vsel %vm1052, 1, 0
    %v1117 = vsel %vm1053, 1, 0
    %v1118 = vsel %vm1054, 1, 0
    %v1119 = vcvt.s32.f32 %v1055
    %v1120 = vcvt.s32.f32 %v1056
    %v1121 = vcvt.s32.f32 %v1057
    %v1122 = vcvt.s32.f32 %v1058
    %v1123 = vcvt.s32.f32 %v1059
    %v1124 = vcvt.s32.f32 %v1060
    %v1125 = vcvt.s32.f32 %v1061
    %v1126 = vcvt.s32.f32 %v1062
    %v1127 = vcvt.s32.f32 %v1063
    %v1128 = vcvt.s32.f32 %v1064
    %v1129 = vcvt.s32.f32 %v1065
    %v1130 = vcvt.s32.f32 %v1066
    %v1131 = vcvt.s32.f32 %v1067
    %v1132 = vcvt.s32.f32 %v1068
    %v1133 = vcvt.s32.f32 %v1069
    %v1134 = vcvt.s32.f32 %v1070
    %v1135 = vcvt.s32.f32 %v1071
    %v1136 = vcvt.s32.f32 %v1072
    %v1137 = vcvt.s32.f32 %v1073
    %v1138 = vcvt.s32.f32 %v1074
    %v1139 = vcvt.s32.f32 %v1075
    %v1140 = vcvt.s32.f32 %v1076
    %v1141 = vcvt.s32.f32 %v1077
    %v1142 = vcvt.s32.f32 %v1078
    %v1143 = vcvt.s32.f32 %v1079
    %v1144 = vcvt.s32.f32 %v1080
    %v1145 = vcvt.s32.f32 %v1081
    %v1146 = vcvt.s32.f32 %v1082
    %v1147 = vcvt.s32.f32 %v1083
    %v1148 = vcvt.s32.f32 %v1084
    %v1149 = vcvt.s32.f32 %v1085
    %v1150 = vcvt.s32.f32 %v1086
    %v1151 = vcvt.s32.f32 %v1087
    %v1152 = vcvt.s32.f32 %v1088
    %v1153 = vcvt.s32.f32 %v1089
    %v1154 = vcvt.s32.f32 %v1090
    %v1155 = vcvt.s32.f32 %v1091
    %v1156 = vcvt.s32.f32 %v1092
    %v1157 = vcvt.s32.f32 %v1093
    %v1158 = vcvt.s32.f32 %v1094
    %v1159 = vcvt.s32.f32 %v1095
    %v1160 = vcvt.s32.f32 %v1096
    %v1161 = vcvt.s32.f32 %v1097
    %v1162 = vcvt.s32.f32 %v1098
    %v1163 = vcvt.s32.f32 %v1099
    %v1164 = vcvt.s32.f32 %v1100
    %v1165 = vcvt.s32.f32 %v1101
    %v1166 = vcvt.s32.f32 %v1102
    %v1167 = vcvt.s32.f32 %v1103
    %v1168 = vcvt.s32.f32 %v1104
    %v1169 = vcvt.s32.f32 %v1105
    %v1170 = vcvt.s32.f32 %v1106
    %v1171 = vcvt.s32.f32 %v1107
    %v1172 = vcvt.s32.f32 %v1108
    %v1173 = vcvt.s32.f32 %v1109
    %v1174 = vcvt.s32.f32 %v1110
    %v1175 = vcvt.s32.f32 %v1111
    %v1176 = vcvt.s32.f32 %v1112
    %v1177 = vcvt.s32.f32 %v1113
    %v1178 = vcvt.s32.f32 %v1114
    %v1179 = vcvt.s32.f32 %v1115
    %v1180 = vcvt.s32.f32 %v1116
    %v1181 = vcvt.s32.f32 %v1117
    %v1182 = vcvt.s32.f32 %v1118
    %1183 = vmatpush.msra.mxu0 %v1134
    %1184 = vmatpush.msra.mxu0 %v1133
    %1185 = vmatpush.msra.mxu0 %v1132
    %1186 = vmatpush.msra.mxu0 %v1131
    %1187 = vmatpush.msra.mxu0 %v1130
    %1188 = vmatpush.msra.mxu0 %v1129
    %1189 = vmatpush.msra.mxu0 %v1128
    %1190 = vmatpush.msra.mxu0 %v1127
    %1191 = vmatpush.msra.mxu0 %v1126
    %1192 = vmatpush.msra.mxu0 %v1125
    %1193 = vmatpush.msra.mxu0 %v1124
    %1194 = vmatpush.msra.mxu0 %v1123
    %1195 = vmatpush.msra.mxu0 %v1122
    %1196 = vmatpush.msra.mxu0 %v1121
    %1197 = vmatpush.msra.mxu0 %v1120
    %1198 = vmatpush.msra.mxu0 %v1119
    %1199 = vmatmul.f32.gmra.mxu0 %v767
    %v1200 = vpop.f32.mrf.mxu0
    %v1201 = vadd.f32 0.0, %v1200
    %1202 = vmatmul.f32.gmra.mxu0 %v771
    %v1203 = vpop.f32.mrf.mxu0
    %v1204 = vadd.f32 0.0, %v1203
    %1205 = vmatmul.f32.gmra.mxu0 %v775
    %v1206 = vpop.f32.mrf.mxu0
    %v1207 = vadd.f32 0.0, %v1206
    %1208 = vmatmul.f32.gmra.mxu0 %v779
    %v1209 = vpop.f32.mrf.mxu0
    %v1210 = vadd.f32 0.0, %v1209
    %1211 = vmatmul.f32.gmra.mxu0 %v783
    %v1212 = vpop.f32.mrf.mxu0
    %v1213 = vadd.f32 0.0, %v1212
    %1214 = vmatmul.f32.gmra.mxu0 %v787
    %v1215 = vpop.f32.mrf.mxu0
    %v1216 = vadd.f32 0.0, %v1215
    %1217 = vmatmul.f32.gmra.mxu0 %v791
    %v1218 = vpop.f32.mrf.mxu0
    %v1219 = vadd.f32 0.0, %v1218
    %1220 = vmatmul.f32.gmra.mxu0 %v795
    %v1221 = vpop.f32.mrf.mxu0
    %v1222 = vadd.f32 0.0, %v1221
    %1223 = vdwg.mxu0
    %1224 = vmatpush.msra.mxu0 %v1150
    %1225 = vmatpush.msra.mxu0 %v1149
    %1226 = vmatpush.msra.mxu0 %v1148
    %1227 = vmatpush.msra.mxu0 %v1147
    %1228 = vmatpush.msra.mxu0 %v1146
    %1229 = vmatpush.msra.mxu0 %v1145
    %1230 = vmatpush.msra.mxu0 %v1144
    %1231 = vmatpush.msra.mxu0 %v1143
    %1232 = vmatpush.msra.mxu0 %v1142
    %1233 = vmatpush.msra.mxu0 %v1141
    %1234 = vmatpush.msra.mxu0 %v1140
    %1235 = vmatpush.msra.mxu0 %v1139
    %1236 = vmatpush.msra.mxu0 %v1138
    %1237 = vmatpush.msra.mxu0 %v1137
    %1238 = vmatpush.msra.mxu0 %v1136
    %1239 = vmatpush.msra.mxu0 %v1135
    %1240 = vmatmul.f32.gmra.mxu0 %v768
    %v1241 = vpop.f32.mrf.mxu0
    %v1242 = vadd.f32 %v1201, %v1241
    %1243 = vmatmul.f32.gmra.mxu0 %v772
    %v1244 = vpop.f32.mrf.mxu0
    %v1245 = vadd.f32 %v1204, %v1244
    %1246 = vmatmul.f32.gmra.mxu0 %v776
    %v1247 = vpop.f32.mrf.mxu0
    %v1248 = vadd.f32 %v1207, %v1247
    %1249 = vmatmul.f32.gmra.mxu0 %v780
    %v1250 = vpop.f32.mrf.mxu0
    %v1251 = vadd.f32 %v1210, %v1250
    %1252 = vmatmul.f32.gmra.mxu0 %v784
    %v1253 = vpop.f32.mrf.mxu0
    %v1254 = vadd.f32 %v1213, %v1253
    %1255 = vmatmul.f32.gmra.mxu0 %v788
    %v1256 = vpop.f32.mrf.mxu0
    %v1257 = vadd.f32 %v1216, %v1256
    %1258 = vmatmul.f32.gmra.mxu0 %v792
    %v1259 = vpop.f32.mrf.mxu0
    %v1260 = vadd.f32 %v1219, %v1259
    %1261 = vmatmul.f32.gmra.mxu0 %v796
    %v1262 = vpop.f32.mrf.mxu0
    %v1263 = vadd.f32 %v1222, %v1262
    %1264 = vdwg.mxu0
    %1265 = vmatpush.msra.mxu0 %v1166
    %1266 = vmatpush.msra.mxu0 %v1165
    %1267 = vmatpush.msra.mxu0 %v1164
    %1268 = vmatpush.msra.mxu0 %v1163
    %1269 = vmatpush.msra.mxu0 %v1162
    %1270 = vmatpush.msra.mxu0 %v1161
    %1271 = vmatpush.msra.mxu0 %v1160
    %1272 = vmatpush.msra.mxu0 %v1159
    %1273 = vmatpush.msra.mxu0 %v1158
    %1274 = vmatpush.msra.mxu0 %v1157
    %1275 = vmatpush.msra.mxu0 %v1156
    %1276 = vmatpush.msra.mxu0 %v1155
    %1277 = vmatpush.msra.mxu0 %v1154
    %1278 = vmatpush.msra.mxu0 %v1153
    %1279 = vmatpush.msra.mxu0 %v1152
    %1280 = vmatpush.msra.mxu0 %v1151
    %1281 = vmatmul.f32.gmra.mxu0 %v769
    %v1282 = vpop.f32.mrf.mxu0
    %v1283 = vadd.f32 %v1242, %v1282
    %1284 = vmatmul.f32.gmra.mxu0 %v773
    %v1285 = vpop.f32.mrf.mxu0
    %v1286 = vadd.f32 %v1245, %v1285
    %1287 = vmatmul.f32.gmra.mxu0 %v777
    %v1288 = vpop.f32.mrf.mxu0
    %v1289 = vadd.f32 %v1248, %v1288
    %1290 = vmatmul.f32.gmra.mxu0 %v781
    %v1291 = vpop.f32.mrf.mxu0
    %v1292 = vadd.f32 %v1251, %v1291
    %1293 = vmatmul.f32.gmra.mxu0 %v785
    %v1294 = vpop.f32.mrf.mxu0
    %v1295 = vadd.f32 %v1254, %v1294
    %1296 = vmatmul.f32.gmra.mxu0 %v789
    %v1297 = vpop.f32.mrf.mxu0
    %v1298 = vadd.f32 %v1257, %v1297
    %1299 = vmatmul.f32.gmra.mxu0 %v793
    %v1300 = vpop.f32.mrf.mxu0
    %v1301 = vadd.f32 %v1260, %v1300
    %1302 = vmatmul.f32.gmra.mxu0 %v797
    %v1303 = vpop.f32.mrf.mxu0
    %v1304 = vadd.f32 %v1263, %v1303
    %1305 = vdwg.mxu0
    %1306 = vmatpush.msra.mxu0 %v1182
    %1307 = vmatpush.msra.mxu0 %v1181
    %1308 = vmatpush.msra.mxu0 %v1180
    %1309 = vmatpush.msra.mxu0 %v1179
    %1310 = vmatpush.msra.mxu0 %v1178
    %1311 = vmatpush.msra.mxu0 %v1177
    %1312 = vmatpush.msra.mxu0 %v1176
    %1313 = vmatpush.msra.mxu0 %v1175
    %1314 = vmatpush.msra.mxu0 %v1174
    %1315 = vmatpush.msra.mxu0 %v1173
    %1316 = vmatpush.msra.mxu0 %v1172
    %1317 = vmatpush.msra.mxu0 %v1171
    %1318 = vmatpush.msra.mxu0 %v1170
    %1319 = vmatpush.msra.mxu0 %v1169
    %1320 = vmatpush.msra.mxu0 %v1168
    %1321 = vmatpush.msra.mxu0 %v1167
    %1322 = vmatmul.f32.gmra.mxu0 %v770
    %v1323 = vpop.f32.mrf.mxu0
    %v1324 = vadd.f32 %v1283, %v1323
    %1325 = vmatmul.f32.gmra.mxu0 %v774
    %v1326 = vpop.f32.mrf.mxu0
    %v1327 = vadd.f32 %v1286, %v1326
    %1328 = vmatmul.f32.gmra.mxu0 %v778
    %v1329 = vpop.f32.mrf.mxu0
    %v1330 = vadd.f32 %v1289, %v1329
    %1331 = vmatmul.f32.gmra.mxu0 %v782
    %v1332 = vpop.f32.mrf.mxu0
    %v1333 = vadd.f32 %v1292, %v1332
    %1334 = vmatmul.f32.gmra.mxu0 %v786
    %v1335 = vpop.f32.mrf.mxu0
    %v1336 = vadd.f32 %v1295, %v1335
    %1337 = vmatmul.f32.gmra.mxu0 %v790
    %v1338 = vpop.f32.mrf.mxu0
    %v1339 = vadd.f32 %v1298, %v1338
    %1340 = vmatmul.f32.gmra.mxu0 %v794
    %v1341 = vpop.f32.mrf.mxu0
    %v1342 = vadd.f32 %v1301, %v1341
    %1343 = vmatmul.f32.gmra.mxu0 %v798
    %v1344 = vpop.f32.mrf.mxu0
    %v1345 = vadd.f32 %v1304, %v1344
    %1346 = vdwg.mxu0
    %1347 = vmatpush.msra.mxu0 %v578
    %1348 = vmatpush.msra.mxu0 %v577
    %1349 = vmatpush.msra.mxu0 %v576
    %1350 = vmatpush.msra.mxu0 %v575
    %1351 = vmatpush.msra.mxu0 %v574
    %1352 = vmatpush.msra.mxu0 %v573
    %1353 = vmatpush.msra.mxu0 %v572
    %1354 = vmatpush.msra.mxu0 %v571
    %1355 = vmatpush.msra.mxu0 %v570
    %1356 = vmatpush.msra.mxu0 %v569
    %1357 = vmatpush.msra.mxu0 %v568
    %1358 = vmatpush.msra.mxu0 %v567
    %1359 = vmatpush.msra.mxu0 %v566
    %1360 = vmatpush.msra.mxu0 %v565
    %1361 = vmatpush.msra.mxu0 %v564
    %1362 = vmatpush.msra.mxu0 %v563
    %1363 = vmatmul.f32.gmra.mxu0 %v206
    %v1364 = vpop.f32.mrf.mxu0
    %v1365 = vadd.f32 %v1324, %v1364
    %1366 = vmatmul.f32.gmra.mxu0 %v210
    %v1367 = vpop.f32.mrf.mxu0
    %v1368 = vadd.f32 %v1327, %v1367
    %1369 = vmatmul.f32.gmra.mxu0 %v214
    %v1370 = vpop.f32.mrf.mxu0
    %v1371 = vadd.f32 %v1330, %v1370
    %1372 = vmatmul.f32.gmra.mxu0 %v218
    %v1373 = vpop.f32.mrf.mxu0
    %v1374 = vadd.f32 %v1333, %v1373
    %1375 = vmatmul.f32.gmra.mxu0 %v222
    %v1376 = vpop.f32.mrf.mxu0
    %v1377 = vadd.f32 %v1336, %v1376
    %1378 = vmatmul.f32.gmra.mxu0 %v226
    %v1379 = vpop.f32.mrf.mxu0
    %v1380 = vadd.f32 %v1339, %v1379
    %1381 = vmatmul.f32.gmra.mxu0 %v230
    %v1382 = vpop.f32.mrf.mxu0
    %v1383 = vadd.f32 %v1342, %v1382
    %1384 = vmatmul.f32.gmra.mxu0 %v234
    %v1385 = vpop.f32.mrf.mxu0
    %v1386 = vadd.f32 %v1345, %v1385
    %1387 = vdwg.mxu0
    %1388 = vmatpush.msra.mxu0 %v594
    %1389 = vmatpush.msra.mxu0 %v593
    %1390 = vmatpush.msra.mxu0 %v592
    %1391 = vmatpush.msra.mxu0 %v591
    %1392 = vmatpush.msra.mxu0 %v590
    %1393 = vmatpush.msra.mxu0 %v589
    %1394 = vmatpush.msra.mxu0 %v588
    %1395 = vmatpush.msra.mxu0 %v587
    %1396 = vmatpush.msra.mxu0 %v586
    %1397 = vmatpush.msra.mxu0 %v585
    %1398 = vmatpush.msra.mxu0 %v584
    %1399 = vmatpush.msra.mxu0 %v583
    %1400 = vmatpush.msra.mxu0 %v582
    %1401 = vmatpush.msra.mxu0 %v581
    %1402 = vmatpush.msra.mxu0 %v580
    %1403 = vmatpush.msra.mxu0 %v579
    %1404 = vmatmul.f32.gmra.mxu0 %v207
    %v1405 = vpop.f32.mrf.mxu0
    %v1406 = vadd.f32 %v1365, %v1405
    %1407 = vmatmul.f32.gmra.mxu0 %v211
    %v1408 = vpop.f32.mrf.mxu0
    %v1409 = vadd.f32 %v1368, %v1408
    %1410 = vmatmul.f32.gmra.mxu0 %v215
    %v1411 = vpop.f32.mrf.mxu0
    %v1412 = vadd.f32 %v1371, %v1411
    %1413 = vmatmul.f32.gmra.mxu0 %v219
    %v1414 = vpop.f32.mrf.mxu0
    %v1415 = vadd.f32 %v1374, %v1414
    %1416 = vmatmul.f32.gmra.mxu0 %v223
    %v1417 = vpop.f32.mrf.mxu0
    %v1418 = vadd.f32 %v1377, %v1417
    %1419 = vmatmul.f32.gmra.mxu0 %v227
    %v1420 = vpop.f32.mrf.mxu0
    %v1421 = vadd.f32 %v1380, %v1420
    %1422 = vmatmul.f32.gmra.mxu0 %v231
    %v1423 = vpop.f32.mrf.mxu0
    %v1424 = vadd.f32 %v1383, %v1423
    %1425 = vmatmul.f32.gmra.mxu0 %v235
    %v1426 = vpop.f32.mrf.mxu0
    %v1427 = vadd.f32 %v1386, %v1426
    %1428 = vdwg.mxu0
    %1429 = vmatpush.msra.mxu0 %v610
    %1430 = vmatpush.msra.mxu0 %v609
    %1431 = vmatpush.msra.mxu0 %v608
    %1432 = vmatpush.msra.mxu0 %v607
    %1433 = vmatpush.msra.mxu0 %v606
    %1434 = vmatpush.msra.mxu0 %v605
    %1435 = vmatpush.msra.mxu0 %v604
    %1436 = vmatpush.msra.mxu0 %v603
    %1437 = vmatpush.msra.mxu0 %v602
    %1438 = vmatpush.msra.mxu0 %v601
    %1439 = vmatpush.msra.mxu0 %v600
    %1440 = vmatpush.msra.mxu0 %v599
    %1441 = vmatpush.msra.mxu0 %v598
    %1442 = vmatpush.msra.mxu0 %v597
    %1443 = vmatpush.msra.mxu0 %v596
    %1444 = vmatpush.msra.mxu0 %v595
    %1445 = vmatmul.f32.gmra.mxu0 %v208
    %v1446 = vpop.f32.mrf.mxu0
    %v1447 = vadd.f32 %v1406, %v1446
    %1448 = vmatmul.f32.gmra.mxu0 %v212
    %v1449 = vpop.f32.mrf.mxu0
    %v1450 = vadd.f32 %v1409, %v1449
    %1451 = vmatmul.f32.gmra.mxu0 %v216
    %v1452 = vpop.f32.mrf.mxu0
    %v1453 = vadd.f32 %v1412, %v1452
    %1454 = vmatmul.f32.gmra.mxu0 %v220
    %v1455 = vpop.f32.mrf.mxu0
    %v1456 = vadd.f32 %v1415, %v1455
    %1457 = vmatmul.f32.gmra.mxu0 %v224
    %v1458 = vpop.f32.mrf.mxu0
    %v1459 = vadd.f32 %v1418, %v1458
    %1460 = vmatmul.f32.gmra.mxu0 %v228
    %v1461 = vpop.f32.mrf.mxu0
    %v1462 = vadd.f32 %v1421, %v1461
    %1463 = vmatmul.f32.gmra.mxu0 %v232
    %v1464 = vpop.f32.mrf.mxu0
    %v1465 = vadd.f32 %v1424, %v1464
    %1466 = vmatmul.f32.gmra.mxu0 %v236
    %v1467 = vpop.f32.mrf.mxu0
    %v1468 = vadd.f32 %v1427, %v1467
    %1469 = vdwg.mxu0
    %1470 = vmatpush.msra.mxu0 %v626
    %1471 = vmatpush.msra.mxu0 %v625
    %1472 = vmatpush.msra.mxu0 %v624
    %1473 = vmatpush.msra.mxu0 %v623
    %1474 = vmatpush.msra.mxu0 %v622
    %1475 = vmatpush.msra.mxu0 %v621
    %1476 = vmatpush.msra.mxu0 %v620
    %1477 = vmatpush.msra.mxu0 %v619
    %1478 = vmatpush.msra.mxu0 %v618
    %1479 = vmatpush.msra.mxu0 %v617
    %1480 = vmatpush.msra.mxu0 %v616
    %1481 = vmatpush.msra.mxu0 %v615
    %1482 = vmatpush.msra.mxu0 %v614
    %1483 = vmatpush.msra.mxu0 %v613
    %1484 = vmatpush.msra.mxu0 %v612
    %1485 = vmatpush.msra.mxu0 %v611
    %1486 = vmatmul.f32.gmra.mxu0 %v209
    %v1487 = vpop.f32.mrf.mxu0
    %v1488 = vadd.f32 %v1447, %v1487
    %1489 = vmatmul.f32.gmra.mxu0 %v213
    %v1490 = vpop.f32.mrf.mxu0
    %v1491 = vadd.f32 %v1450, %v1490
    %1492 = vmatmul.f32.gmra.mxu0 %v217
    %v1493 = vpop.f32.mrf.mxu0
    %v1494 = vadd.f32 %v1453, %v1493
    %1495 = vmatmul.f32.gmra.mxu0 %v221
    %v1496 = vpop.f32.mrf.mxu0
    %v1497 = vadd.f32 %v1456, %v1496
    %1498 = vmatmul.f32.gmra.mxu0 %v225
    %v1499 = vpop.f32.mrf.mxu0
    %v1500 = vadd.f32 %v1459, %v1499
    %1501 = vmatmul.f32.gmra.mxu0 %v229
    %v1502 = vpop.f32.mrf.mxu0
    %v1503 = vadd.f32 %v1462, %v1502
    %1504 = vmatmul.f32.gmra.mxu0 %v233
    %v1505 = vpop.f32.mrf.mxu0
    %v1506 = vadd.f32 %v1465, %v1505
    %1507 = vmatmul.f32.gmra.mxu0 %v237
    %v1508 = vpop.f32.mrf.mxu0
    %v1509 = vadd.f32 %v1468, %v1508
    %1510 = vdwg.mxu0
    %v1511 = vld [vmem:[%s0 + $0x20] sm:$0xff]
    %v1512 = vld [vmem:[%s0 + $0x28] sm:$0xff]
    %v1515 = vunpack.c.l.b16 %v1511
    %v1516 = vunpack.c.h.b16 %v1511
    %v1517 = vunpack.c.l.b16 %v1512
    %v1518 = vunpack.c.h.b16 %v1512
    %v1519 = vpack.c.b16 %v1515, %v1515
    %v1520 = vpack.c.b16 %v1516, %v1516
    %v1521 = vpack.c.b16 %v1517, %v1517
    %v1522 = vpack.c.b16 %v1518, %v1518
    %v1524 = vsel %vm77, %v1519, 0
    %v1527 = vsel %vm77, %v1520, 0
    %v1530 = vsel %vm77, %v1521, 0
    %v1533 = vsel %vm77, %v1522, 0
    %1535 = vmatpush.bf16.msra.mxu0 0
    %1536 = vmatpush.bf16.msra.mxu0 0
    %1537 = vmatpush.bf16.msra.mxu0 0
    %1538 = vmatpush.bf16.msra.mxu0 0
    %1539 = vmatpush.bf16.msra.mxu0 0
    %1540 = vmatpush.bf16.msra.mxu0 0
    %1541 = vmatpush.bf16.msra.mxu0 0
    %1542 = vmatpush.bf16.msra.mxu0 %v1524
    %1543 = vmatmul.bf16.gmra.mxu0 %v66
    %v1544 = vpop.f32.mrf.mxu0
    %v1545 = vadd.f32 0.0, %v1544
    %v1546 = vpop.f32.mrf.mxu0
    %v1547 = vadd.f32 0.0, %v1546
    %1548 = vmatmul.bf16.gmra.mxu0 %v69
    %v1549 = vpop.f32.mrf.mxu0
    %v1550 = vadd.f32 0.0, %v1549
    %v1551 = vpop.f32.mrf.mxu0
    %v1552 = vadd.f32 0.0, %v1551
    %1553 = vmatmul.bf16.gmra.mxu0 %v72
    %v1554 = vpop.f32.mrf.mxu0
    %v1555 = vadd.f32 0.0, %v1554
    %v1556 = vpop.f32.mrf.mxu0
    %v1557 = vadd.f32 0.0, %v1556
    %1558 = vmatmul.bf16.gmra.mxu0 %v75
    %v1559 = vpop.f32.mrf.mxu0
    %v1560 = vadd.f32 0.0, %v1559
    %v1561 = vpop.f32.mrf.mxu0
    %v1562 = vadd.f32 0.0, %v1561
    %1563 = vdwg.mxu0
    %1564 = vmatpush.bf16.msra.mxu0 0
    %1565 = vmatpush.bf16.msra.mxu0 0
    %1566 = vmatpush.bf16.msra.mxu0 0
    %1567 = vmatpush.bf16.msra.mxu0 0
    %1568 = vmatpush.bf16.msra.mxu0 0
    %1569 = vmatpush.bf16.msra.mxu0 0
    %1570 = vmatpush.bf16.msra.mxu0 0
    %1571 = vmatpush.bf16.msra.mxu0 %v1527
    %1572 = vmatmul.bf16.gmra.mxu0 %v66
    %v1573 = vpop.f32.mrf.mxu0
    %v1574 = vadd.f32 0.0, %v1573
    %v1575 = vpop.f32.mrf.mxu0
    %v1576 = vadd.f32 0.0, %v1575
    %1577 = vmatmul.bf16.gmra.mxu0 %v69
    %v1578 = vpop.f32.mrf.mxu0
    %v1579 = vadd.f32 0.0, %v1578
    %v1580 = vpop.f32.mrf.mxu0
    %v1581 = vadd.f32 0.0, %v1580
    %1582 = vmatmul.bf16.gmra.mxu0 %v72
    %v1583 = vpop.f32.mrf.mxu0
    %v1584 = vadd.f32 0.0, %v1583
    %v1585 = vpop.f32.mrf.mxu0
    %v1586 = vadd.f32 0.0, %v1585
    %1587 = vmatmul.bf16.gmra.mxu0 %v75
    %v1588 = vpop.f32.mrf.mxu0
    %v1589 = vadd.f32 0.0, %v1588
    %v1590 = vpop.f32.mrf.mxu0
    %v1591 = vadd.f32 0.0, %v1590
    %1592 = vdwg.mxu0
    %1593 = vmatpush.bf16.msra.mxu0 0
    %1594 = vmatpush.bf16.msra.mxu0 0
    %1595 = vmatpush.bf16.msra.mxu0 0
    %1596 = vmatpush.bf16.msra.mxu0 0
    %1597 = vmatpush.bf16.msra.mxu0 0
    %1598 = vmatpush.bf16.msra.mxu0 0
    %1599 = vmatpush.bf16.msra.mxu0 0
    %1600 = vmatpush.bf16.msra.mxu0 %v1530
    %1601 = vmatmul.bf16.gmra.mxu0 %v66
    %v1602 = vpop.f32.mrf.mxu0
    %v1603 = vadd.f32 0.0, %v1602
    %v1604 = vpop.f32.mrf.mxu0
    %v1605 = vadd.f32 0.0, %v1604
    %1606 = vmatmul.bf16.gmra.mxu0 %v69
    %v1607 = vpop.f32.mrf.mxu0
    %v1608 = vadd.f32 0.0, %v1607
    %v1609 = vpop.f32.mrf.mxu0
    %v1610 = vadd.f32 0.0, %v1609
    %1611 = vmatmul.bf16.gmra.mxu0 %v72
    %v1612 = vpop.f32.mrf.mxu0
    %v1613 = vadd.f32 0.0, %v1612
    %v1614 = vpop.f32.mrf.mxu0
    %v1615 = vadd.f32 0.0, %v1614
    %1616 = vmatmul.bf16.gmra.mxu0 %v75
    %v1617 = vpop.f32.mrf.mxu0
    %v1618 = vadd.f32 0.0, %v1617
    %v1619 = vpop.f32.mrf.mxu0
    %v1620 = vadd.f32 0.0, %v1619
    %1621 = vdwg.mxu0
    %1622 = vmatpush.bf16.msra.mxu0 0
    %1623 = vmatpush.bf16.msra.mxu0 0
    %1624 = vmatpush.bf16.msra.mxu0 0
    %1625 = vmatpush.bf16.msra.mxu0 0
    %1626 = vmatpush.bf16.msra.mxu0 0
    %1627 = vmatpush.bf16.msra.mxu0 0
    %1628 = vmatpush.bf16.msra.mxu0 0
    %1629 = vmatpush.bf16.msra.mxu0 %v1533
    %1630 = vmatmul.bf16.gmra.mxu0 %v66
    %v1631 = vpop.f32.mrf.mxu0
    %v1632 = vadd.f32 0.0, %v1631
    %v1633 = vpop.f32.mrf.mxu0
    %v1634 = vadd.f32 0.0, %v1633
    %1635 = vmatmul.bf16.gmra.mxu0 %v69
    %v1636 = vpop.f32.mrf.mxu0
    %v1637 = vadd.f32 0.0, %v1636
    %v1638 = vpop.f32.mrf.mxu0
    %v1639 = vadd.f32 0.0, %v1638
    %1640 = vmatmul.bf16.gmra.mxu0 %v72
    %v1641 = vpop.f32.mrf.mxu0
    %v1642 = vadd.f32 0.0, %v1641
    %v1643 = vpop.f32.mrf.mxu0
    %v1644 = vadd.f32 0.0, %v1643
    %1645 = vmatmul.bf16.gmra.mxu0 %v75
    %v1646 = vpop.f32.mrf.mxu0
    %v1647 = vadd.f32 0.0, %v1646
    %v1648 = vpop.f32.mrf.mxu0
    %v1649 = vadd.f32 0.0, %v1648
    %1650 = vdwg.mxu0
    %v1651 = vmax.f32 %v1545, 0.0
    %v1652 = vmax.f32 %v1574, 0.0
    %v1653 = vmax.f32 %v1603, 0.0
    %v1654 = vmax.f32 %v1632, 0.0
    %v1655 = vmax.f32 %v1547, 0.0
    %v1656 = vmax.f32 %v1576, 0.0
    %v1657 = vmax.f32 %v1605, 0.0
    %v1658 = vmax.f32 %v1634, 0.0
    %v1659 = vmax.f32 %v1550, 0.0
    %v1660 = vmax.f32 %v1579, 0.0
    %v1661 = vmax.f32 %v1608, 0.0
    %v1662 = vmax.f32 %v1637, 0.0
    %v1663 = vmax.f32 %v1552, 0.0
    %v1664 = vmax.f32 %v1581, 0.0
    %v1665 = vmax.f32 %v1610, 0.0
    %v1666 = vmax.f32 %v1639, 0.0
    %v1667 = vmax.f32 %v1555, 0.0
    %v1668 = vmax.f32 %v1584, 0.0
    %v1669 = vmax.f32 %v1613, 0.0
    %v1670 = vmax.f32 %v1642, 0.0
    %v1671 = vmax.f32 %v1557, 0.0
    %v1672 = vmax.f32 %v1586, 0.0
    %v1673 = vmax.f32 %v1615, 0.0
    %v1674 = vmax.f32 %v1644, 0.0
    %v1675 = vmax.f32 %v1560, 0.0
    %v1676 = vmax.f32 %v1589, 0.0
    %v1677 = vmax.f32 %v1618, 0.0
    %v1678 = vmax.f32 %v1647, 0.0
    %v1679 = vmax.f32 %v1562, 0.0
    %v1680 = vmax.f32 %v1591, 0.0
    %v1681 = vmax.f32 %v1620, 0.0
    %v1682 = vmax.f32 %v1649, 0.0
    %v1683 = vadd.s32 %v239, 1024
    %v1684 = vadd.s32 %v240, 1024
    %v1685 = vadd.s32 %v241, 1024
    %v1686 = vadd.s32 %v242, 1024
    %v1687 = vadd.s32 %v243, 1024
    %v1688 = vadd.s32 %v244, 1024
    %v1689 = vadd.s32 %v245, 1024
    %v1690 = vadd.s32 %v246, 1024
    %v1691 = vadd.s32 %v247, 1024
    %v1692 = vadd.s32 %v248, 1024
    %v1693 = vadd.s32 %v249, 1024
    %v1694 = vadd.s32 %v250, 1024
    %v1695 = vadd.s32 %v251, 1024
    %v1696 = vadd.s32 %v252, 1024
    %v1697 = vadd.s32 %v253, 1024
    %v1698 = vadd.s32 %v254, 1024
    %v1699 = vadd.s32 %v255, 1024
    %v1700 = vadd.s32 %v256, 1024
    %v1701 = vadd.s32 %v257, 1024
    %v1702 = vadd.s32 %v258, 1024
    %v1703 = vadd.s32 %v259, 1024
    %v1704 = vadd.s32 %v260, 1024
    %v1705 = vadd.s32 %v261, 1024
    %v1706 = vadd.s32 %v262, 1024
    %v1707 = vadd.s32 %v263, 1024
    %v1708 = vadd.s32 %v264, 1024
    %v1709 = vadd.s32 %v265, 1024
    %v1710 = vadd.s32 %v266, 1024
    %v1711 = vadd.s32 %v267, 1024
    %v1712 = vadd.s32 %v268, 1024
    %v1713 = vadd.s32 %v269, 1024
    %v1714 = vadd.s32 %v270, 1024
    %v1715 = vadd.s32 %v271, 1024
    %v1716 = vadd.s32 %v272, 1024
    %v1717 = vadd.s32 %v273, 1024
    %v1718 = vadd.s32 %v274, 1024
    %v1719 = vadd.s32 %v275, 1024
    %v1720 = vadd.s32 %v276, 1024
    %v1721 = vadd.s32 %v277, 1024
    %v1722 = vadd.s32 %v278, 1024
    %v1723 = vadd.s32 %v279, 1024
    %v1724 = vadd.s32 %v280, 1024
    %v1725 = vadd.s32 %v281, 1024
    %v1726 = vadd.s32 %v282, 1024
    %v1727 = vadd.s32 %v283, 1024
    %v1728 = vadd.s32 %v284, 1024
    %v1729 = vadd.s32 %v285, 1024
    %v1730 = vadd.s32 %v286, 1024
    %v1731 = vadd.s32 %v287, 1024
    %v1732 = vadd.s32 %v288, 1024
    %v1733 = vadd.s32 %v289, 1024
    %v1734 = vadd.s32 %v290, 1024
    %v1735 = vadd.s32 %v291, 1024
    %v1736 = vadd.s32 %v292, 1024
    %v1737 = vadd.s32 %v293, 1024
    %v1738 = vadd.s32 %v294, 1024
    %v1739 = vadd.s32 %v295, 1024
    %v1740 = vadd.s32 %v296, 1024
    %v1741 = vadd.s32 %v297, 1024
    %v1742 = vadd.s32 %v298, 1024
    %v1743 = vadd.s32 %v299, 1024
    %v1744 = vadd.s32 %v300, 1024
    %v1745 = vadd.s32 %v301, 1024
    %v1746 = vadd.s32 %v302, 1024
    %vm1747 = vcmp.ge.s32.totalorder %v1683, %v305
    %vm1748 = vcmp.ge.s32.totalorder %v1684, %v305
    %vm1749 = vcmp.ge.s32.totalorder %v1685, %v305
    %vm1750 = vcmp.ge.s32.totalorder %v1686, %v305
    %vm1751 = vcmp.ge.s32.totalorder %v1687, %v305
    %vm1752 = vcmp.ge.s32.totalorder %v1688, %v305
    %vm1753 = vcmp.ge.s32.totalorder %v1689, %v305
    %vm1754 = vcmp.ge.s32.totalorder %v1690, %v305
    %vm1755 = vcmp.ge.s32.totalorder %v1691, %v305
    %vm1756 = vcmp.ge.s32.totalorder %v1692, %v305
    %vm1757 = vcmp.ge.s32.totalorder %v1693, %v305
    %vm1758 = vcmp.ge.s32.totalorder %v1694, %v305
    %vm1759 = vcmp.ge.s32.totalorder %v1695, %v305
    %vm1760 = vcmp.ge.s32.totalorder %v1696, %v305
    %vm1761 = vcmp.ge.s32.totalorder %v1697, %v305
    %vm1762 = vcmp.ge.s32.totalorder %v1698, %v305
    %vm1763 = vcmp.ge.s32.totalorder %v1699, %v305
    %vm1764 = vcmp.ge.s32.totalorder %v1700, %v305
    %vm1765 = vcmp.ge.s32.totalorder %v1701, %v305
    %vm1766 = vcmp.ge.s32.totalorder %v1702, %v305
    %vm1767 = vcmp.ge.s32.totalorder %v1703, %v305
    %vm1768 = vcmp.ge.s32.totalorder %v1704, %v305
    %vm1769 = vcmp.ge.s32.totalorder %v1705, %v305
    %vm1770 = vcmp.ge.s32.totalorder %v1706, %v305
    %vm1771 = vcmp.ge.s32.totalorder %v1707, %v305
    %vm1772 = vcmp.ge.s32.totalorder %v1708, %v305
    %vm1773 = vcmp.ge.s32.totalorder %v1709, %v305
    %vm1774 = vcmp.ge.s32.totalorder %v1710, %v305
    %vm1775 = vcmp.ge.s32.totalorder %v1711, %v305
    %vm1776 = vcmp.ge.s32.totalorder %v1712, %v305
    %vm1777 = vcmp.ge.s32.totalorder %v1713, %v305
    %vm1778 = vcmp.ge.s32.totalorder %v1714, %v305
    %vm1779 = vcmp.ge.s32.totalorder %v1715, %v305
    %vm1780 = vcmp.ge.s32.totalorder %v1716, %v305
    %vm1781 = vcmp.ge.s32.totalorder %v1717, %v305
    %vm1782 = vcmp.ge.s32.totalorder %v1718, %v305
    %vm1783 = vcmp.ge.s32.totalorder %v1719, %v305
    %vm1784 = vcmp.ge.s32.totalorder %v1720, %v305
    %vm1785 = vcmp.ge.s32.totalorder %v1721, %v305
    %vm1786 = vcmp.ge.s32.totalorder %v1722, %v305
    %vm1787 = vcmp.ge.s32.totalorder %v1723, %v305
    %vm1788 = vcmp.ge.s32.totalorder %v1724, %v305
    %vm1789 = vcmp.ge.s32.totalorder %v1725, %v305
    %vm1790 = vcmp.ge.s32.totalorder %v1726, %v305
    %vm1791 = vcmp.ge.s32.totalorder %v1727, %v305
    %vm1792 = vcmp.ge.s32.totalorder %v1728, %v305
    %vm1793 = vcmp.ge.s32.totalorder %v1729, %v305
    %vm1794 = vcmp.ge.s32.totalorder %v1730, %v305
    %vm1795 = vcmp.ge.s32.totalorder %v1731, %v305
    %vm1796 = vcmp.ge.s32.totalorder %v1732, %v305
    %vm1797 = vcmp.ge.s32.totalorder %v1733, %v305
    %vm1798 = vcmp.ge.s32.totalorder %v1734, %v305
    %vm1799 = vcmp.ge.s32.totalorder %v1735, %v305
    %vm1800 = vcmp.ge.s32.totalorder %v1736, %v305
    %vm1801 = vcmp.ge.s32.totalorder %v1737, %v305
    %vm1802 = vcmp.ge.s32.totalorder %v1738, %v305
    %vm1803 = vcmp.ge.s32.totalorder %v1739, %v305
    %vm1804 = vcmp.ge.s32.totalorder %v1740, %v305
    %vm1805 = vcmp.ge.s32.totalorder %v1741, %v305
    %vm1806 = vcmp.ge.s32.totalorder %v1742, %v305
    %vm1807 = vcmp.ge.s32.totalorder %v1743, %v305
    %vm1808 = vcmp.ge.s32.totalorder %v1744, %v305
    %vm1809 = vcmp.ge.s32.totalorder %v1745, %v305
    %vm1810 = vcmp.ge.s32.totalorder %v1746, %v305
    %vm1811 = vcmp.lt.s32.totalorder %v1683, %v370
    %vm1812 = vcmp.lt.s32.totalorder %v1684, %v370
    %vm1813 = vcmp.lt.s32.totalorder %v1685, %v370
    %vm1814 = vcmp.lt.s32.totalorder %v1686, %v370
    %vm1815 = vcmp.lt.s32.totalorder %v1687, %v370
    %vm1816 = vcmp.lt.s32.totalorder %v1688, %v370
    %vm1817 = vcmp.lt.s32.totalorder %v1689, %v370
    %vm1818 = vcmp.lt.s32.totalorder %v1690, %v370
    %vm1819 = vcmp.lt.s32.totalorder %v1691, %v370
    %vm1820 = vcmp.lt.s32.totalorder %v1692, %v370
    %vm1821 = vcmp.lt.s32.totalorder %v1693, %v370
    %vm1822 = vcmp.lt.s32.totalorder %v1694, %v370
    %vm1823 = vcmp.lt.s32.totalorder %v1695, %v370
    %vm1824 = vcmp.lt.s32.totalorder %v1696, %v370
    %vm1825 = vcmp.lt.s32.totalorder %v1697, %v370
    %vm1826 = vcmp.lt.s32.totalorder %v1698, %v370
    %vm1827 = vcmp.lt.s32.totalorder %v1699, %v370
    %vm1828 = vcmp.lt.s32.totalorder %v1700, %v370
    %vm1829 = vcmp.lt.s32.totalorder %v1701, %v370
    %vm1830 = vcmp.lt.s32.totalorder %v1702, %v370
    %vm1831 = vcmp.lt.s32.totalorder %v1703, %v370
    %vm1832 = vcmp.lt.s32.totalorder %v1704, %v370
    %vm1833 = vcmp.lt.s32.totalorder %v1705, %v370
    %vm1834 = vcmp.lt.s32.totalorder %v1706, %v370
    %vm1835 = vcmp.lt.s32.totalorder %v1707, %v370
    %vm1836 = vcmp.lt.s32.totalorder %v1708, %v370
    %vm1837 = vcmp.lt.s32.totalorder %v1709, %v370
    %vm1838 = vcmp.lt.s32.totalorder %v1710, %v370
    %vm1839 = vcmp.lt.s32.totalorder %v1711, %v370
    %vm1840 = vcmp.lt.s32.totalorder %v1712, %v370
    %vm1841 = vcmp.lt.s32.totalorder %v1713, %v370
    %vm1842 = vcmp.lt.s32.totalorder %v1714, %v370
    %vm1843 = vcmp.lt.s32.totalorder %v1715, %v370
    %vm1844 = vcmp.lt.s32.totalorder %v1716, %v370
    %vm1845 = vcmp.lt.s32.totalorder %v1717, %v370
    %vm1846 = vcmp.lt.s32.totalorder %v1718, %v370
    %vm1847 = vcmp.lt.s32.totalorder %v1719, %v370
    %vm1848 = vcmp.lt.s32.totalorder %v1720, %v370
    %vm1849 = vcmp.lt.s32.totalorder %v1721, %v370
    %vm1850 = vcmp.lt.s32.totalorder %v1722, %v370
    %vm1851 = vcmp.lt.s32.totalorder %v1723, %v370
    %vm1852 = vcmp.lt.s32.totalorder %v1724, %v370
    %vm1853 = vcmp.lt.s32.totalorder %v1725, %v370
    %vm1854 = vcmp.lt.s32.totalorder %v1726, %v370
    %vm1855 = vcmp.lt.s32.totalorder %v1727, %v370
    %vm1856 = vcmp.lt.s32.totalorder %v1728, %v370
    %vm1857 = vcmp.lt.s32.totalorder %v1729, %v370
    %vm1858 = vcmp.lt.s32.totalorder %v1730, %v370
    %vm1859 = vcmp.lt.s32.totalorder %v1731, %v370
    %vm1860 = vcmp.lt.s32.totalorder %v1732, %v370
    %vm1861 = vcmp.lt.s32.totalorder %v1733, %v370
    %vm1862 = vcmp.lt.s32.totalorder %v1734, %v370
    %vm1863 = vcmp.lt.s32.totalorder %v1735, %v370
    %vm1864 = vcmp.lt.s32.totalorder %v1736, %v370
    %vm1865 = vcmp.lt.s32.totalorder %v1737, %v370
    %vm1866 = vcmp.lt.s32.totalorder %v1738, %v370
    %vm1867 = vcmp.lt.s32.totalorder %v1739, %v370
    %vm1868 = vcmp.lt.s32.totalorder %v1740, %v370
    %vm1869 = vcmp.lt.s32.totalorder %v1741, %v370
    %vm1870 = vcmp.lt.s32.totalorder %v1742, %v370
    %vm1871 = vcmp.lt.s32.totalorder %v1743, %v370
    %vm1872 = vcmp.lt.s32.totalorder %v1744, %v370
    %vm1873 = vcmp.lt.s32.totalorder %v1745, %v370
    %vm1874 = vcmp.lt.s32.totalorder %v1746, %v370
    %vm1875 = vmand %vm1747, %vm1811
    %vm1876 = vmand %vm1748, %vm1812
    %vm1877 = vmand %vm1749, %vm1813
    %vm1878 = vmand %vm1750, %vm1814
    %vm1879 = vmand %vm1751, %vm1815
    %vm1880 = vmand %vm1752, %vm1816
    %vm1881 = vmand %vm1753, %vm1817
    %vm1882 = vmand %vm1754, %vm1818
    %vm1883 = vmand %vm1755, %vm1819
    %vm1884 = vmand %vm1756, %vm1820
    %vm1885 = vmand %vm1757, %vm1821
    %vm1886 = vmand %vm1758, %vm1822
    %vm1887 = vmand %vm1759, %vm1823
    %vm1888 = vmand %vm1760, %vm1824
    %vm1889 = vmand %vm1761, %vm1825
    %vm1890 = vmand %vm1762, %vm1826
    %vm1891 = vmand %vm1763, %vm1827
    %vm1892 = vmand %vm1764, %vm1828
    %vm1893 = vmand %vm1765, %vm1829
    %vm1894 = vmand %vm1766, %vm1830
    %vm1895 = vmand %vm1767, %vm1831
    %vm1896 = vmand %vm1768, %vm1832
    %vm1897 = vmand %vm1769, %vm1833
    %vm1898 = vmand %vm1770, %vm1834
    %vm1899 = vmand %vm1771, %vm1835
    %vm1900 = vmand %vm1772, %vm1836
    %vm1901 = vmand %vm1773, %vm1837
    %vm1902 = vmand %vm1774, %vm1838
    %vm1903 = vmand %vm1775, %vm1839
    %vm1904 = vmand %vm1776, %vm1840
    %vm1905 = vmand %vm1777, %vm1841
    %vm1906 = vmand %vm1778, %vm1842
    %vm1907 = vmand %vm1779, %vm1843
    %vm1908 = vmand %vm1780, %vm1844
    %vm1909 = vmand %vm1781, %vm1845
    %vm1910 = vmand %vm1782, %vm1846
    %vm1911 = vmand %vm1783, %vm1847
    %vm1912 = vmand %vm1784, %vm1848
    %vm1913 = vmand %vm1785, %vm1849
    %vm1914 = vmand %vm1786, %vm1850
    %vm1915 = vmand %vm1787, %vm1851
    %vm1916 = vmand %vm1788, %vm1852
    %vm1917 = vmand %vm1789, %vm1853
    %vm1918 = vmand %vm1790, %vm1854
    %vm1919 = vmand %vm1791, %vm1855
    %vm1920 = vmand %vm1792, %vm1856
    %vm1921 = vmand %vm1793, %vm1857
    %vm1922 = vmand %vm1794, %vm1858
    %vm1923 = vmand %vm1795, %vm1859
    %vm1924 = vmand %vm1796, %vm1860
    %vm1925 = vmand %vm1797, %vm1861
    %vm1926 = vmand %vm1798, %vm1862
    %vm1927 = vmand %vm1799, %vm1863
    %vm1928 = vmand %vm1800, %vm1864
    %vm1929 = vmand %vm1801, %vm1865
    %vm1930 = vmand %vm1802, %vm1866
    %vm1931 = vmand %vm1803, %vm1867
    %vm1932 = vmand %vm1804, %vm1868
    %vm1933 = vmand %vm1805, %vm1869
    %vm1934 = vmand %vm1806, %vm1870
    %vm1935 = vmand %vm1807, %vm1871
    %vm1936 = vmand %vm1808, %vm1872
    %vm1937 = vmand %vm1809, %vm1873
    %vm1938 = vmand %vm1810, %vm1874
    %v1939 = vsel %vm1875, 1, 0
    %v1940 = vsel %vm1876, 1, 0
    %v1941 = vsel %vm1877, 1, 0
    %v1942 = vsel %vm1878, 1, 0
    %v1943 = vsel %vm1879, 1, 0
    %v1944 = vsel %vm1880, 1, 0
    %v1945 = vsel %vm1881, 1, 0
    %v1946 = vsel %vm1882, 1, 0
    %v1947 = vsel %vm1883, 1, 0
    %v1948 = vsel %vm1884, 1, 0
    %v1949 = vsel %vm1885, 1, 0
    %v1950 = vsel %vm1886, 1, 0
    %v1951 = vsel %vm1887, 1, 0
    %v1952 = vsel %vm1888, 1, 0
    %v1953 = vsel %vm1889, 1, 0
    %v1954 = vsel %vm1890, 1, 0
    %v1955 = vsel %vm1891, 1, 0
    %v1956 = vsel %vm1892, 1, 0
    %v1957 = vsel %vm1893, 1, 0
    %v1958 = vsel %vm1894, 1, 0
    %v1959 = vsel %vm1895, 1, 0
    %v1960 = vsel %vm1896, 1, 0
    %v1961 = vsel %vm1897, 1, 0
    %v1962 = vsel %vm1898, 1, 0
    %v1963 = vsel %vm1899, 1, 0
    %v1964 = vsel %vm1900, 1, 0
    %v1965 = vsel %vm1901, 1, 0
    %v1966 = vsel %vm1902, 1, 0
    %v1967 = vsel %vm1903, 1, 0
    %v1968 = vsel %vm1904, 1, 0
    %v1969 = vsel %vm1905, 1, 0
    %v1970 = vsel %vm1906, 1, 0
    %v1971 = vsel %vm1907, 1, 0
    %v1972 = vsel %vm1908, 1, 0
    %v1973 = vsel %vm1909, 1, 0
    %v1974 = vsel %vm1910, 1, 0
    %v1975 = vsel %vm1911, 1, 0
    %v1976 = vsel %vm1912, 1, 0
    %v1977 = vsel %vm1913, 1, 0
    %v1978 = vsel %vm1914, 1, 0
    %v1979 = vsel %vm1915, 1, 0
    %v1980 = vsel %vm1916, 1, 0
    %v1981 = vsel %vm1917, 1, 0
    %v1982 = vsel %vm1918, 1, 0
    %v1983 = vsel %vm1919, 1, 0
    %v1984 = vsel %vm1920, 1, 0
    %v1985 = vsel %vm1921, 1, 0
    %v1986 = vsel %vm1922, 1, 0
    %v1987 = vsel %vm1923, 1, 0
    %v1988 = vsel %vm1924, 1, 0
    %v1989 = vsel %vm1925, 1, 0
    %v1990 = vsel %vm1926, 1, 0
    %v1991 = vsel %vm1927, 1, 0
    %v1992 = vsel %vm1928, 1, 0
    %v1993 = vsel %vm1929, 1, 0
    %v1994 = vsel %vm1930, 1, 0
    %v1995 = vsel %vm1931, 1, 0
    %v1996 = vsel %vm1932, 1, 0
    %v1997 = vsel %vm1933, 1, 0
    %v1998 = vsel %vm1934, 1, 0
    %v1999 = vsel %vm1935, 1, 0
    %v2000 = vsel %vm1936, 1, 0
    %v2001 = vsel %vm1937, 1, 0
    %v2002 = vsel %vm1938, 1, 0
    %v2003 = vcvt.s32.f32 %v1939
    %v2004 = vcvt.s32.f32 %v1940
    %v2005 = vcvt.s32.f32 %v1941
    %v2006 = vcvt.s32.f32 %v1942
    %v2007 = vcvt.s32.f32 %v1943
    %v2008 = vcvt.s32.f32 %v1944
    %v2009 = vcvt.s32.f32 %v1945
    %v2010 = vcvt.s32.f32 %v1946
    %v2011 = vcvt.s32.f32 %v1947
    %v2012 = vcvt.s32.f32 %v1948
    %v2013 = vcvt.s32.f32 %v1949
    %v2014 = vcvt.s32.f32 %v1950
    %v2015 = vcvt.s32.f32 %v1951
    %v2016 = vcvt.s32.f32 %v1952
    %v2017 = vcvt.s32.f32 %v1953
    %v2018 = vcvt.s32.f32 %v1954
    %v2019 = vcvt.s32.f32 %v1955
    %v2020 = vcvt.s32.f32 %v1956
    %v2021 = vcvt.s32.f32 %v1957
    %v2022 = vcvt.s32.f32 %v1958
    %v2023 = vcvt.s32.f32 %v1959
    %v2024 = vcvt.s32.f32 %v1960
    %v2025 = vcvt.s32.f32 %v1961
    %v2026 = vcvt.s32.f32 %v1962
    %v2027 = vcvt.s32.f32 %v1963
    %v2028 = vcvt.s32.f32 %v1964
    %v2029 = vcvt.s32.f32 %v1965
    %v2030 = vcvt.s32.f32 %v1966
    %v2031 = vcvt.s32.f32 %v1967
    %v2032 = vcvt.s32.f32 %v1968
    %v2033 = vcvt.s32.f32 %v1969
    %v2034 = vcvt.s32.f32 %v1970
    %v2035 = vcvt.s32.f32 %v1971
    %v2036 = vcvt.s32.f32 %v1972
    %v2037 = vcvt.s32.f32 %v1973
    %v2038 = vcvt.s32.f32 %v1974
    %v2039 = vcvt.s32.f32 %v1975
    %v2040 = vcvt.s32.f32 %v1976
    %v2041 = vcvt.s32.f32 %v1977
    %v2042 = vcvt.s32.f32 %v1978
    %v2043 = vcvt.s32.f32 %v1979
    %v2044 = vcvt.s32.f32 %v1980
    %v2045 = vcvt.s32.f32 %v1981
    %v2046 = vcvt.s32.f32 %v1982
    %v2047 = vcvt.s32.f32 %v1983
    %v2048 = vcvt.s32.f32 %v1984
    %v2049 = vcvt.s32.f32 %v1985
    %v2050 = vcvt.s32.f32 %v1986
    %v2051 = vcvt.s32.f32 %v1987
    %v2052 = vcvt.s32.f32 %v1988
    %v2053 = vcvt.s32.f32 %v1989
    %v2054 = vcvt.s32.f32 %v1990
    %v2055 = vcvt.s32.f32 %v1991
    %v2056 = vcvt.s32.f32 %v1992
    %v2057 = vcvt.s32.f32 %v1993
    %v2058 = vcvt.s32.f32 %v1994
    %v2059 = vcvt.s32.f32 %v1995
    %v2060 = vcvt.s32.f32 %v1996
    %v2061 = vcvt.s32.f32 %v1997
    %v2062 = vcvt.s32.f32 %v1998
    %v2063 = vcvt.s32.f32 %v1999
    %v2064 = vcvt.s32.f32 %v2000
    %v2065 = vcvt.s32.f32 %v2001
    %v2066 = vcvt.s32.f32 %v2002
    %2067 = vmatpush.msra.mxu0 %v2018
    %2068 = vmatpush.msra.mxu0 %v2017
    %2069 = vmatpush.msra.mxu0 %v2016
    %2070 = vmatpush.msra.mxu0 %v2015
    %2071 = vmatpush.msra.mxu0 %v2014
    %2072 = vmatpush.msra.mxu0 %v2013
    %2073 = vmatpush.msra.mxu0 %v2012
    %2074 = vmatpush.msra.mxu0 %v2011
    %2075 = vmatpush.msra.mxu0 %v2010
    %2076 = vmatpush.msra.mxu0 %v2009
    %2077 = vmatpush.msra.mxu0 %v2008
    %2078 = vmatpush.msra.mxu0 %v2007
    %2079 = vmatpush.msra.mxu0 %v2006
    %2080 = vmatpush.msra.mxu0 %v2005
    %2081 = vmatpush.msra.mxu0 %v2004
    %2082 = vmatpush.msra.mxu0 %v2003
    %2083 = vmatmul.f32.gmra.mxu0 %v1651
    %v2084 = vpop.f32.mrf.mxu0
    %v2085 = vadd.f32 0.0, %v2084
    %2086 = vmatmul.f32.gmra.mxu0 %v1655
    %v2087 = vpop.f32.mrf.mxu0
    %v2088 = vadd.f32 0.0, %v2087
    %2089 = vmatmul.f32.gmra.mxu0 %v1659
    %v2090 = vpop.f32.mrf.mxu0
    %v2091 = vadd.f32 0.0, %v2090
    %2092 = vmatmul.f32.gmra.mxu0 %v1663
    %v2093 = vpop.f32.mrf.mxu0
    %v2094 = vadd.f32 0.0, %v2093
    %2095 = vmatmul.f32.gmra.mxu0 %v1667
    %v2096 = vpop.f32.mrf.mxu0
    %v2097 = vadd.f32 0.0, %v2096
    %2098 = vmatmul.f32.gmra.mxu0 %v1671
    %v2099 = vpop.f32.mrf.mxu0
    %v2100 = vadd.f32 0.0, %v2099
    %2101 = vmatmul.f32.gmra.mxu0 %v1675
    %v2102 = vpop.f32.mrf.mxu0
    %v2103 = vadd.f32 0.0, %v2102
    %2104 = vmatmul.f32.gmra.mxu0 %v1679
    %v2105 = vpop.f32.mrf.mxu0
    %v2106 = vadd.f32 0.0, %v2105
    %2107 = vdwg.mxu0
    %2108 = vmatpush.msra.mxu0 %v2034
    %2109 = vmatpush.msra.mxu0 %v2033
    %2110 = vmatpush.msra.mxu0 %v2032
    %2111 = vmatpush.msra.mxu0 %v2031
    %2112 = vmatpush.msra.mxu0 %v2030
    %2113 = vmatpush.msra.mxu0 %v2029
    %2114 = vmatpush.msra.mxu0 %v2028
    %2115 = vmatpush.msra.mxu0 %v2027
    %2116 = vmatpush.msra.mxu0 %v2026
    %2117 = vmatpush.msra.mxu0 %v2025
    %2118 = vmatpush.msra.mxu0 %v2024
    %2119 = vmatpush.msra.mxu0 %v2023
    %2120 = vmatpush.msra.mxu0 %v2022
    %2121 = vmatpush.msra.mxu0 %v2021
    %2122 = vmatpush.msra.mxu0 %v2020
    %2123 = vmatpush.msra.mxu0 %v2019
    %2124 = vmatmul.f32.gmra.mxu0 %v1652
    %v2125 = vpop.f32.mrf.mxu0
    %v2126 = vadd.f32 %v2085, %v2125
    %2127 = vmatmul.f32.gmra.mxu0 %v1656
    %v2128 = vpop.f32.mrf.mxu0
    %v2129 = vadd.f32 %v2088, %v2128
    %2130 = vmatmul.f32.gmra.mxu0 %v1660
    %v2131 = vpop.f32.mrf.mxu0
    %v2132 = vadd.f32 %v2091, %v2131
    %2133 = vmatmul.f32.gmra.mxu0 %v1664
    %v2134 = vpop.f32.mrf.mxu0
    %v2135 = vadd.f32 %v2094, %v2134
    %2136 = vmatmul.f32.gmra.mxu0 %v1668
    %v2137 = vpop.f32.mrf.mxu0
    %v2138 = vadd.f32 %v2097, %v2137
    %2139 = vmatmul.f32.gmra.mxu0 %v1672
    %v2140 = vpop.f32.mrf.mxu0
    %v2141 = vadd.f32 %v2100, %v2140
    %2142 = vmatmul.f32.gmra.mxu0 %v1676
    %v2143 = vpop.f32.mrf.mxu0
    %v2144 = vadd.f32 %v2103, %v2143
    %2145 = vmatmul.f32.gmra.mxu0 %v1680
    %v2146 = vpop.f32.mrf.mxu0
    %v2147 = vadd.f32 %v2106, %v2146
    %2148 = vdwg.mxu0
    %2149 = vmatpush.msra.mxu0 %v2050
    %2150 = vmatpush.msra.mxu0 %v2049
    %2151 = vmatpush.msra.mxu0 %v2048
    %2152 = vmatpush.msra.mxu0 %v2047
    %2153 = vmatpush.msra.mxu0 %v2046
    %2154 = vmatpush.msra.mxu0 %v2045
    %2155 = vmatpush.msra.mxu0 %v2044
    %2156 = vmatpush.msra.mxu0 %v2043
    %2157 = vmatpush.msra.mxu0 %v2042
    %2158 = vmatpush.msra.mxu0 %v2041
    %2159 = vmatpush.msra.mxu0 %v2040
    %2160 = vmatpush.msra.mxu0 %v2039
    %2161 = vmatpush.msra.mxu0 %v2038
    %2162 = vmatpush.msra.mxu0 %v2037
    %2163 = vmatpush.msra.mxu0 %v2036
    %2164 = vmatpush.msra.mxu0 %v2035
    %2165 = vmatmul.f32.gmra.mxu0 %v1653
    %v2166 = vpop.f32.mrf.mxu0
    %v2167 = vadd.f32 %v2126, %v2166
    %2168 = vmatmul.f32.gmra.mxu0 %v1657
    %v2169 = vpop.f32.mrf.mxu0
    %v2170 = vadd.f32 %v2129, %v2169
    %2171 = vmatmul.f32.gmra.mxu0 %v1661
    %v2172 = vpop.f32.mrf.mxu0
    %v2173 = vadd.f32 %v2132, %v2172
    %2174 = vmatmul.f32.gmra.mxu0 %v1665
    %v2175 = vpop.f32.mrf.mxu0
    %v2176 = vadd.f32 %v2135, %v2175
    %2177 = vmatmul.f32.gmra.mxu0 %v1669
    %v2178 = vpop.f32.mrf.mxu0
    %v2179 = vadd.f32 %v2138, %v2178
    %2180 = vmatmul.f32.gmra.mxu0 %v1673
    %v2181 = vpop.f32.mrf.mxu0
    %v2182 = vadd.f32 %v2141, %v2181
    %2183 = vmatmul.f32.gmra.mxu0 %v1677
    %v2184 = vpop.f32.mrf.mxu0
    %v2185 = vadd.f32 %v2144, %v2184
    %2186 = vmatmul.f32.gmra.mxu0 %v1681
    %v2187 = vpop.f32.mrf.mxu0
    %v2188 = vadd.f32 %v2147, %v2187
    %2189 = vdwg.mxu0
    %2190 = vmatpush.msra.mxu0 %v2066
    %2191 = vmatpush.msra.mxu0 %v2065
    %2192 = vmatpush.msra.mxu0 %v2064
    %2193 = vmatpush.msra.mxu0 %v2063
    %2194 = vmatpush.msra.mxu0 %v2062
    %2195 = vmatpush.msra.mxu0 %v2061
    %2196 = vmatpush.msra.mxu0 %v2060
    %2197 = vmatpush.msra.mxu0 %v2059
    %2198 = vmatpush.msra.mxu0 %v2058
    %2199 = vmatpush.msra.mxu0 %v2057
    %2200 = vmatpush.msra.mxu0 %v2056
    %2201 = vmatpush.msra.mxu0 %v2055
    %2202 = vmatpush.msra.mxu0 %v2054
    %2203 = vmatpush.msra.mxu0 %v2053
    %2204 = vmatpush.msra.mxu0 %v2052
    %2205 = vmatpush.msra.mxu0 %v2051
    %2206 = vmatmul.f32.gmra.mxu0 %v1654
    %v2207 = vpop.f32.mrf.mxu0
    %v2208 = vadd.f32 %v2167, %v2207
    %2209 = vmatmul.f32.gmra.mxu0 %v1658
    %v2210 = vpop.f32.mrf.mxu0
    %v2211 = vadd.f32 %v2170, %v2210
    %2212 = vmatmul.f32.gmra.mxu0 %v1662
    %v2213 = vpop.f32.mrf.mxu0
    %v2214 = vadd.f32 %v2173, %v2213
    %2215 = vmatmul.f32.gmra.mxu0 %v1666
    %v2216 = vpop.f32.mrf.mxu0
    %v2217 = vadd.f32 %v2176, %v2216
    %2218 = vmatmul.f32.gmra.mxu0 %v1670
    %v2219 = vpop.f32.mrf.mxu0
    %v2220 = vadd.f32 %v2179, %v2219
    %2221 = vmatmul.f32.gmra.mxu0 %v1674
    %v2222 = vpop.f32.mrf.mxu0
    %v2223 = vadd.f32 %v2182, %v2222
    %2224 = vmatmul.f32.gmra.mxu0 %v1678
    %v2225 = vpop.f32.mrf.mxu0
    %v2226 = vadd.f32 %v2185, %v2225
    %2227 = vmatmul.f32.gmra.mxu0 %v1682
    %v2228 = vpop.f32.mrf.mxu0
    %v2229 = vadd.f32 %v2188, %v2228
    %2230 = vdwg.mxu0
    %v2231 = vadd.f32 %v1488, %v2208
    %v2232 = vadd.f32 %v1491, %v2211
    %v2233 = vadd.f32 %v1494, %v2214
    %v2234 = vadd.f32 %v1497, %v2217
    %v2235 = vadd.f32 %v1500, %v2220
    %v2236 = vadd.f32 %v1503, %v2223
    %v2237 = vadd.f32 %v1506, %v2226
    %v2238 = vadd.f32 %v1509, %v2229
    %v2239 = vld [vmem:[%s0 + $0x30] sm:$0xff]
    %v2240 = vld [vmem:[%s0 + $0x38] sm:$0xff]
    %v2243 = vunpack.c.l.b16 %v2239
    %v2244 = vunpack.c.h.b16 %v2239
    %v2245 = vunpack.c.l.b16 %v2240
    %v2246 = vunpack.c.h.b16 %v2240
    %v2247 = vpack.c.b16 %v2243, %v2243
    %v2248 = vpack.c.b16 %v2244, %v2244
    %v2249 = vpack.c.b16 %v2245, %v2245
    %v2250 = vpack.c.b16 %v2246, %v2246
    %v2252 = vsel %vm77, %v2247, 0
    %v2255 = vsel %vm77, %v2248, 0
    %v2258 = vsel %vm77, %v2249, 0
    %v2261 = vsel %vm77, %v2250, 0
    %2263 = vmatpush.bf16.msra.mxu0 0
    %2264 = vmatpush.bf16.msra.mxu0 0
    %2265 = vmatpush.bf16.msra.mxu0 0
    %2266 = vmatpush.bf16.msra.mxu0 0
    %2267 = vmatpush.bf16.msra.mxu0 0
    %2268 = vmatpush.bf16.msra.mxu0 0
    %2269 = vmatpush.bf16.msra.mxu0 0
    %2270 = vmatpush.bf16.msra.mxu0 %v2252
    %2271 = vmatmul.bf16.gmra.mxu0 %v66
    %v2272 = vpop.f32.mrf.mxu0
    %v2273 = vadd.f32 0.0, %v2272
    %v2274 = vpop.f32.mrf.mxu0
    %v2275 = vadd.f32 0.0, %v2274
    %2276 = vmatmul.bf16.gmra.mxu0 %v69
    %v2277 = vpop.f32.mrf.mxu0
    %v2278 = vadd.f32 0.0, %v2277
    %v2279 = vpop.f32.mrf.mxu0
    %v2280 = vadd.f32 0.0, %v2279
    %2281 = vmatmul.bf16.gmra.mxu0 %v72
    %v2282 = vpop.f32.mrf.mxu0
    %v2283 = vadd.f32 0.0, %v2282
    %v2284 = vpop.f32.mrf.mxu0
    %v2285 = vadd.f32 0.0, %v2284
    %2286 = vmatmul.bf16.gmra.mxu0 %v75
    %v2287 = vpop.f32.mrf.mxu0
    %v2288 = vadd.f32 0.0, %v2287
    %v2289 = vpop.f32.mrf.mxu0
    %v2290 = vadd.f32 0.0, %v2289
    %2291 = vdwg.mxu0
    %2292 = vmatpush.bf16.msra.mxu0 0
    %2293 = vmatpush.bf16.msra.mxu0 0
    %2294 = vmatpush.bf16.msra.mxu0 0
    %2295 = vmatpush.bf16.msra.mxu0 0
    %2296 = vmatpush.bf16.msra.mxu0 0
    %2297 = vmatpush.bf16.msra.mxu0 0
    %2298 = vmatpush.bf16.msra.mxu0 0
    %2299 = vmatpush.bf16.msra.mxu0 %v2255
    %2300 = vmatmul.bf16.gmra.mxu0 %v66
    %v2301 = vpop.f32.mrf.mxu0
    %v2302 = vadd.f32 0.0, %v2301
    %v2303 = vpop.f32.mrf.mxu0
    %v2304 = vadd.f32 0.0, %v2303
    %2305 = vmatmul.bf16.gmra.mxu0 %v69
    %v2306 = vpop.f32.mrf.mxu0
    %v2307 = vadd.f32 0.0, %v2306
    %v2308 = vpop.f32.mrf.mxu0
    %v2309 = vadd.f32 0.0, %v2308
    %2310 = vmatmul.bf16.gmra.mxu0 %v72
    %v2311 = vpop.f32.mrf.mxu0
    %v2312 = vadd.f32 0.0, %v2311
    %v2313 = vpop.f32.mrf.mxu0
    %v2314 = vadd.f32 0.0, %v2313
    %2315 = vmatmul.bf16.gmra.mxu0 %v75
    %v2316 = vpop.f32.mrf.mxu0
    %v2317 = vadd.f32 0.0, %v2316
    %v2318 = vpop.f32.mrf.mxu0
    %v2319 = vadd.f32 0.0, %v2318
    %2320 = vdwg.mxu0
    %2321 = vmatpush.bf16.msra.mxu0 0
    %2322 = vmatpush.bf16.msra.mxu0 0
    %2323 = vmatpush.bf16.msra.mxu0 0
    %2324 = vmatpush.bf16.msra.mxu0 0
    %2325 = vmatpush.bf16.msra.mxu0 0
    %2326 = vmatpush.bf16.msra.mxu0 0
    %2327 = vmatpush.bf16.msra.mxu0 0
    %2328 = vmatpush.bf16.msra.mxu0 %v2258
    %2329 = vmatmul.bf16.gmra.mxu0 %v66
    %v2330 = vpop.f32.mrf.mxu0
    %v2331 = vadd.f32 0.0, %v2330
    %v2332 = vpop.f32.mrf.mxu0
    %v2333 = vadd.f32 0.0, %v2332
    %2334 = vmatmul.bf16.gmra.mxu0 %v69
    %v2335 = vpop.f32.mrf.mxu0
    %v2336 = vadd.f32 0.0, %v2335
    %v2337 = vpop.f32.mrf.mxu0
    %v2338 = vadd.f32 0.0, %v2337
    %2339 = vmatmul.bf16.gmra.mxu0 %v72
    %v2340 = vpop.f32.mrf.mxu0
    %v2341 = vadd.f32 0.0, %v2340
    %v2342 = vpop.f32.mrf.mxu0
    %v2343 = vadd.f32 0.0, %v2342
    %2344 = vmatmul.bf16.gmra.mxu0 %v75
    %v2345 = vpop.f32.mrf.mxu0
    %v2346 = vadd.f32 0.0, %v2345
    %v2347 = vpop.f32.mrf.mxu0
    %v2348 = vadd.f32 0.0, %v2347
    %2349 = vdwg.mxu0
    %2350 = vmatpush.bf16.msra.mxu0 0
    %2351 = vmatpush.bf16.msra.mxu0 0
    %2352 = vmatpush.bf16.msra.mxu0 0
    %2353 = vmatpush.bf16.msra.mxu0 0
    %2354 = vmatpush.bf16.msra.mxu0 0
    %2355 = vmatpush.bf16.msra.mxu0 0
    %2356 = vmatpush.bf16.msra.mxu0 0
    %2357 = vmatpush.bf16.msra.mxu0 %v2261
    %2358 = vmatmul.bf16.gmra.mxu0 %v66
    %v2359 = vpop.f32.mrf.mxu0
    %v2360 = vadd.f32 0.0, %v2359
    %v2361 = vpop.f32.mrf.mxu0
    %v2362 = vadd.f32 0.0, %v2361
    %2363 = vmatmul.bf16.gmra.mxu0 %v69
    %v2364 = vpop.f32.mrf.mxu0
    %v2365 = vadd.f32 0.0, %v2364
    %v2366 = vpop.f32.mrf.mxu0
    %v2367 = vadd.f32 0.0, %v2366
    %2368 = vmatmul.bf16.gmra.mxu0 %v72
    %v2369 = vpop.f32.mrf.mxu0
    %v2370 = vadd.f32 0.0, %v2369
    %v2371 = vpop.f32.mrf.mxu0
    %v2372 = vadd.f32 0.0, %v2371
    %2373 = vmatmul.bf16.gmra.mxu0 %v75
    %v2374 = vpop.f32.mrf.mxu0
    %v2375 = vadd.f32 0.0, %v2374
    %v2376 = vpop.f32.mrf.mxu0
    %v2377 = vadd.f32 0.0, %v2376
    %2378 = vdwg.mxu0
    %v2379 = vmax.f32 %v2273, 0.0
    %v2380 = vmax.f32 %v2302, 0.0
    %v2381 = vmax.f32 %v2331, 0.0
    %v2382 = vmax.f32 %v2360, 0.0
    %v2383 = vmax.f32 %v2275, 0.0
    %v2384 = vmax.f32 %v2304, 0.0
    %v2385 = vmax.f32 %v2333, 0.0
    %v2386 = vmax.f32 %v2362, 0.0
    %v2387 = vmax.f32 %v2278, 0.0
    %v2388 = vmax.f32 %v2307, 0.0
    %v2389 = vmax.f32 %v2336, 0.0
    %v2390 = vmax.f32 %v2365, 0.0
    %v2391 = vmax.f32 %v2280, 0.0
    %v2392 = vmax.f32 %v2309, 0.0
    %v2393 = vmax.f32 %v2338, 0.0
    %v2394 = vmax.f32 %v2367, 0.0
    %v2395 = vmax.f32 %v2283, 0.0
    %v2396 = vmax.f32 %v2312, 0.0
    %v2397 = vmax.f32 %v2341, 0.0
    %v2398 = vmax.f32 %v2370, 0.0
    %v2399 = vmax.f32 %v2285, 0.0
    %v2400 = vmax.f32 %v2314, 0.0
    %v2401 = vmax.f32 %v2343, 0.0
    %v2402 = vmax.f32 %v2372, 0.0
    %v2403 = vmax.f32 %v2288, 0.0
    %v2404 = vmax.f32 %v2317, 0.0
    %v2405 = vmax.f32 %v2346, 0.0
    %v2406 = vmax.f32 %v2375, 0.0
    %v2407 = vmax.f32 %v2290, 0.0
    %v2408 = vmax.f32 %v2319, 0.0
    %v2409 = vmax.f32 %v2348, 0.0
    %v2410 = vmax.f32 %v2377, 0.0
    %v2411 = vadd.s32 %v239, 1536
    %v2412 = vadd.s32 %v240, 1536
    %v2413 = vadd.s32 %v241, 1536
    %v2414 = vadd.s32 %v242, 1536
    %v2415 = vadd.s32 %v243, 1536
    %v2416 = vadd.s32 %v244, 1536
    %v2417 = vadd.s32 %v245, 1536
    %v2418 = vadd.s32 %v246, 1536
    %v2419 = vadd.s32 %v247, 1536
    %v2420 = vadd.s32 %v248, 1536
    %v2421 = vadd.s32 %v249, 1536
    %v2422 = vadd.s32 %v250, 1536
    %v2423 = vadd.s32 %v251, 1536
    %v2424 = vadd.s32 %v252, 1536
    %v2425 = vadd.s32 %v253, 1536
    %v2426 = vadd.s32 %v254, 1536
    %v2427 = vadd.s32 %v255, 1536
    %v2428 = vadd.s32 %v256, 1536
    %v2429 = vadd.s32 %v257, 1536
    %v2430 = vadd.s32 %v258, 1536
    %v2431 = vadd.s32 %v259, 1536
    %v2432 = vadd.s32 %v260, 1536
    %v2433 = vadd.s32 %v261, 1536
    %v2434 = vadd.s32 %v262, 1536
    %v2435 = vadd.s32 %v263, 1536
    %v2436 = vadd.s32 %v264, 1536
    %v2437 = vadd.s32 %v265, 1536
    %v2438 = vadd.s32 %v266, 1536
    %v2439 = vadd.s32 %v267, 1536
    %v2440 = vadd.s32 %v268, 1536
    %v2441 = vadd.s32 %v269, 1536
    %v2442 = vadd.s32 %v270, 1536
    %v2443 = vadd.s32 %v271, 1536
    %v2444 = vadd.s32 %v272, 1536
    %v2445 = vadd.s32 %v273, 1536
    %v2446 = vadd.s32 %v274, 1536
    %v2447 = vadd.s32 %v275, 1536
    %v2448 = vadd.s32 %v276, 1536
    %v2449 = vadd.s32 %v277, 1536
    %v2450 = vadd.s32 %v278, 1536
    %v2451 = vadd.s32 %v279, 1536
    %v2452 = vadd.s32 %v280, 1536
    %v2453 = vadd.s32 %v281, 1536
    %v2454 = vadd.s32 %v282, 1536
    %v2455 = vadd.s32 %v283, 1536
    %v2456 = vadd.s32 %v284, 1536
    %v2457 = vadd.s32 %v285, 1536
    %v2458 = vadd.s32 %v286, 1536
    %v2459 = vadd.s32 %v287, 1536
    %v2460 = vadd.s32 %v288, 1536
    %v2461 = vadd.s32 %v289, 1536
    %v2462 = vadd.s32 %v290, 1536
    %v2463 = vadd.s32 %v291, 1536
    %v2464 = vadd.s32 %v292, 1536
    %v2465 = vadd.s32 %v293, 1536
    %v2466 = vadd.s32 %v294, 1536
    %v2467 = vadd.s32 %v295, 1536
    %v2468 = vadd.s32 %v296, 1536
    %v2469 = vadd.s32 %v297, 1536
    %v2470 = vadd.s32 %v298, 1536
    %v2471 = vadd.s32 %v299, 1536
    %v2472 = vadd.s32 %v300, 1536
    %v2473 = vadd.s32 %v301, 1536
    %v2474 = vadd.s32 %v302, 1536
    %vm2475 = vcmp.ge.s32.totalorder %v2411, %v305
    %vm2476 = vcmp.ge.s32.totalorder %v2412, %v305
    %vm2477 = vcmp.ge.s32.totalorder %v2413, %v305
    %vm2478 = vcmp.ge.s32.totalorder %v2414, %v305
    %vm2479 = vcmp.ge.s32.totalorder %v2415, %v305
    %vm2480 = vcmp.ge.s32.totalorder %v2416, %v305
    %vm2481 = vcmp.ge.s32.totalorder %v2417, %v305
    %vm2482 = vcmp.ge.s32.totalorder %v2418, %v305
    %vm2483 = vcmp.ge.s32.totalorder %v2419, %v305
    %vm2484 = vcmp.ge.s32.totalorder %v2420, %v305
    %vm2485 = vcmp.ge.s32.totalorder %v2421, %v305
    %vm2486 = vcmp.ge.s32.totalorder %v2422, %v305
    %vm2487 = vcmp.ge.s32.totalorder %v2423, %v305
    %vm2488 = vcmp.ge.s32.totalorder %v2424, %v305
    %vm2489 = vcmp.ge.s32.totalorder %v2425, %v305
    %vm2490 = vcmp.ge.s32.totalorder %v2426, %v305
    %vm2491 = vcmp.ge.s32.totalorder %v2427, %v305
    %vm2492 = vcmp.ge.s32.totalorder %v2428, %v305
    %vm2493 = vcmp.ge.s32.totalorder %v2429, %v305
    %vm2494 = vcmp.ge.s32.totalorder %v2430, %v305
    %vm2495 = vcmp.ge.s32.totalorder %v2431, %v305
    %vm2496 = vcmp.ge.s32.totalorder %v2432, %v305
    %vm2497 = vcmp.ge.s32.totalorder %v2433, %v305
    %vm2498 = vcmp.ge.s32.totalorder %v2434, %v305
    %vm2499 = vcmp.ge.s32.totalorder %v2435, %v305
    %vm2500 = vcmp.ge.s32.totalorder %v2436, %v305
    %vm2501 = vcmp.ge.s32.totalorder %v2437, %v305
    %vm2502 = vcmp.ge.s32.totalorder %v2438, %v305
    %vm2503 = vcmp.ge.s32.totalorder %v2439, %v305
    %vm2504 = vcmp.ge.s32.totalorder %v2440, %v305
    %vm2505 = vcmp.ge.s32.totalorder %v2441, %v305
    %vm2506 = vcmp.ge.s32.totalorder %v2442, %v305
    %vm2507 = vcmp.ge.s32.totalorder %v2443, %v305
    %vm2508 = vcmp.ge.s32.totalorder %v2444, %v305
    %vm2509 = vcmp.ge.s32.totalorder %v2445, %v305
    %vm2510 = vcmp.ge.s32.totalorder %v2446, %v305
    %vm2511 = vcmp.ge.s32.totalorder %v2447, %v305
    %vm2512 = vcmp.ge.s32.totalorder %v2448, %v305
    %vm2513 = vcmp.ge.s32.totalorder %v2449, %v305
    %vm2514 = vcmp.ge.s32.totalorder %v2450, %v305
    %vm2515 = vcmp.ge.s32.totalorder %v2451, %v305
    %vm2516 = vcmp.ge.s32.totalorder %v2452, %v305
    %vm2517 = vcmp.ge.s32.totalorder %v2453, %v305
    %vm2518 = vcmp.ge.s32.totalorder %v2454, %v305
    %vm2519 = vcmp.ge.s32.totalorder %v2455, %v305
    %vm2520 = vcmp.ge.s32.totalorder %v2456, %v305
    %vm2521 = vcmp.ge.s32.totalorder %v2457, %v305
    %vm2522 = vcmp.ge.s32.totalorder %v2458, %v305
    %vm2523 = vcmp.ge.s32.totalorder %v2459, %v305
    %vm2524 = vcmp.ge.s32.totalorder %v2460, %v305
    %vm2525 = vcmp.ge.s32.totalorder %v2461, %v305
    %vm2526 = vcmp.ge.s32.totalorder %v2462, %v305
    %vm2527 = vcmp.ge.s32.totalorder %v2463, %v305
    %vm2528 = vcmp.ge.s32.totalorder %v2464, %v305
    %vm2529 = vcmp.ge.s32.totalorder %v2465, %v305
    %vm2530 = vcmp.ge.s32.totalorder %v2466, %v305
    %vm2531 = vcmp.ge.s32.totalorder %v2467, %v305
    %vm2532 = vcmp.ge.s32.totalorder %v2468, %v305
    %vm2533 = vcmp.ge.s32.totalorder %v2469, %v305
    %vm2534 = vcmp.ge.s32.totalorder %v2470, %v305
    %vm2535 = vcmp.ge.s32.totalorder %v2471, %v305
    %vm2536 = vcmp.ge.s32.totalorder %v2472, %v305
    %vm2537 = vcmp.ge.s32.totalorder %v2473, %v305
    %vm2538 = vcmp.ge.s32.totalorder %v2474, %v305
    %vm2539 = vcmp.lt.s32.totalorder %v2411, %v370
    %vm2540 = vcmp.lt.s32.totalorder %v2412, %v370
    %vm2541 = vcmp.lt.s32.totalorder %v2413, %v370
    %vm2542 = vcmp.lt.s32.totalorder %v2414, %v370
    %vm2543 = vcmp.lt.s32.totalorder %v2415, %v370
    %vm2544 = vcmp.lt.s32.totalorder %v2416, %v370
    %vm2545 = vcmp.lt.s32.totalorder %v2417, %v370
    %vm2546 = vcmp.lt.s32.totalorder %v2418, %v370
    %vm2547 = vcmp.lt.s32.totalorder %v2419, %v370
    %vm2548 = vcmp.lt.s32.totalorder %v2420, %v370
    %vm2549 = vcmp.lt.s32.totalorder %v2421, %v370
    %vm2550 = vcmp.lt.s32.totalorder %v2422, %v370
    %vm2551 = vcmp.lt.s32.totalorder %v2423, %v370
    %vm2552 = vcmp.lt.s32.totalorder %v2424, %v370
    %vm2553 = vcmp.lt.s32.totalorder %v2425, %v370
    %vm2554 = vcmp.lt.s32.totalorder %v2426, %v370
    %vm2555 = vcmp.lt.s32.totalorder %v2427, %v370
    %vm2556 = vcmp.lt.s32.totalorder %v2428, %v370
    %vm2557 = vcmp.lt.s32.totalorder %v2429, %v370
    %vm2558 = vcmp.lt.s32.totalorder %v2430, %v370
    %vm2559 = vcmp.lt.s32.totalorder %v2431, %v370
    %vm2560 = vcmp.lt.s32.totalorder %v2432, %v370
    %vm2561 = vcmp.lt.s32.totalorder %v2433, %v370
    %vm2562 = vcmp.lt.s32.totalorder %v2434, %v370
    %vm2563 = vcmp.lt.s32.totalorder %v2435, %v370
    %vm2564 = vcmp.lt.s32.totalorder %v2436, %v370
    %vm2565 = vcmp.lt.s32.totalorder %v2437, %v370
    %vm2566 = vcmp.lt.s32.totalorder %v2438, %v370
    %vm2567 = vcmp.lt.s32.totalorder %v2439, %v370
    %vm2568 = vcmp.lt.s32.totalorder %v2440, %v370
    %vm2569 = vcmp.lt.s32.totalorder %v2441, %v370
    %vm2570 = vcmp.lt.s32.totalorder %v2442, %v370
    %vm2571 = vcmp.lt.s32.totalorder %v2443, %v370
    %vm2572 = vcmp.lt.s32.totalorder %v2444, %v370
    %vm2573 = vcmp.lt.s32.totalorder %v2445, %v370
    %vm2574 = vcmp.lt.s32.totalorder %v2446, %v370
    %vm2575 = vcmp.lt.s32.totalorder %v2447, %v370
    %vm2576 = vcmp.lt.s32.totalorder %v2448, %v370
    %vm2577 = vcmp.lt.s32.totalorder %v2449, %v370
    %vm2578 = vcmp.lt.s32.totalorder %v2450, %v370
    %vm2579 = vcmp.lt.s32.totalorder %v2451, %v370
    %vm2580 = vcmp.lt.s32.totalorder %v2452, %v370
    %vm2581 = vcmp.lt.s32.totalorder %v2453, %v370
    %vm2582 = vcmp.lt.s32.totalorder %v2454, %v370
    %vm2583 = vcmp.lt.s32.totalorder %v2455, %v370
    %vm2584 = vcmp.lt.s32.totalorder %v2456, %v370
    %vm2585 = vcmp.lt.s32.totalorder %v2457, %v370
    %vm2586 = vcmp.lt.s32.totalorder %v2458, %v370
    %vm2587 = vcmp.lt.s32.totalorder %v2459, %v370
    %vm2588 = vcmp.lt.s32.totalorder %v2460, %v370
    %vm2589 = vcmp.lt.s32.totalorder %v2461, %v370
    %vm2590 = vcmp.lt.s32.totalorder %v2462, %v370
    %vm2591 = vcmp.lt.s32.totalorder %v2463, %v370
    %vm2592 = vcmp.lt.s32.totalorder %v2464, %v370
    %vm2593 = vcmp.lt.s32.totalorder %v2465, %v370
    %vm2594 = vcmp.lt.s32.totalorder %v2466, %v370
    %vm2595 = vcmp.lt.s32.totalorder %v2467, %v370
    %vm2596 = vcmp.lt.s32.totalorder %v2468, %v370
    %vm2597 = vcmp.lt.s32.totalorder %v2469, %v370
    %vm2598 = vcmp.lt.s32.totalorder %v2470, %v370
    %vm2599 = vcmp.lt.s32.totalorder %v2471, %v370
    %vm2600 = vcmp.lt.s32.totalorder %v2472, %v370
    %vm2601 = vcmp.lt.s32.totalorder %v2473, %v370
    %vm2602 = vcmp.lt.s32.totalorder %v2474, %v370
    %vm2603 = vmand %vm2475, %vm2539
    %vm2604 = vmand %vm2476, %vm2540
    %vm2605 = vmand %vm2477, %vm2541
    %vm2606 = vmand %vm2478, %vm2542
    %vm2607 = vmand %vm2479, %vm2543
    %vm2608 = vmand %vm2480, %vm2544
    %vm2609 = vmand %vm2481, %vm2545
    %vm2610 = vmand %vm2482, %vm2546
    %vm2611 = vmand %vm2483, %vm2547
    %vm2612 = vmand %vm2484, %vm2548
    %vm2613 = vmand %vm2485, %vm2549
    %vm2614 = vmand %vm2486, %vm2550
    %vm2615 = vmand %vm2487, %vm2551
    %vm2616 = vmand %vm2488, %vm2552
    %vm2617 = vmand %vm2489, %vm2553
    %vm2618 = vmand %vm2490, %vm2554
    %vm2619 = vmand %vm2491, %vm2555
    %vm2620 = vmand %vm2492, %vm2556
    %vm2621 = vmand %vm2493, %vm2557
    %vm2622 = vmand %vm2494, %vm2558
    %vm2623 = vmand %vm2495, %vm2559
    %vm2624 = vmand %vm2496, %vm2560
    %vm2625 = vmand %vm2497, %vm2561
    %vm2626 = vmand %vm2498, %vm2562
    %vm2627 = vmand %vm2499, %vm2563
    %vm2628 = vmand %vm2500, %vm2564
    %vm2629 = vmand %vm2501, %vm2565
    %vm2630 = vmand %vm2502, %vm2566
    %vm2631 = vmand %vm2503, %vm2567
    %vm2632 = vmand %vm2504, %vm2568
    %vm2633 = vmand %vm2505, %vm2569
    %vm2634 = vmand %vm2506, %vm2570
    %vm2635 = vmand %vm2507, %vm2571
    %vm2636 = vmand %vm2508, %vm2572
    %vm2637 = vmand %vm2509, %vm2573
    %vm2638 = vmand %vm2510, %vm2574
    %vm2639 = vmand %vm2511, %vm2575
    %vm2640 = vmand %vm2512, %vm2576
    %vm2641 = vmand %vm2513, %vm2577
    %vm2642 = vmand %vm2514, %vm2578
    %vm2643 = vmand %vm2515, %vm2579
    %vm2644 = vmand %vm2516, %vm2580
    %vm2645 = vmand %vm2517, %vm2581
    %vm2646 = vmand %vm2518, %vm2582
    %vm2647 = vmand %vm2519, %vm2583
    %vm2648 = vmand %vm2520, %vm2584
    %vm2649 = vmand %vm2521, %vm2585
    %vm2650 = vmand %vm2522, %vm2586
    %vm2651 = vmand %vm2523, %vm2587
    %vm2652 = vmand %vm2524, %vm2588
    %vm2653 = vmand %vm2525, %vm2589
    %vm2654 = vmand %vm2526, %vm2590
    %vm2655 = vmand %vm2527, %vm2591
    %vm2656 = vmand %vm2528, %vm2592
    %vm2657 = vmand %vm2529, %vm2593
    %vm2658 = vmand %vm2530, %vm2594
    %vm2659 = vmand %vm2531, %vm2595
    %vm2660 = vmand %vm2532, %vm2596
    %vm2661 = vmand %vm2533, %vm2597
    %vm2662 = vmand %vm2534, %vm2598
    %vm2663 = vmand %vm2535, %vm2599
    %vm2664 = vmand %vm2536, %vm2600
    %vm2665 = vmand %vm2537, %vm2601
    %vm2666 = vmand %vm2538, %vm2602
    %v2667 = vsel %vm2603, 1, 0
    %v2668 = vsel %vm2604, 1, 0
    %v2669 = vsel %vm2605, 1, 0
    %v2670 = vsel %vm2606, 1, 0
    %v2671 = vsel %vm2607, 1, 0
    %v2672 = vsel %vm2608, 1, 0
    %v2673 = vsel %vm2609, 1, 0
    %v2674 = vsel %vm2610, 1, 0
    %v2675 = vsel %vm2611, 1, 0
    %v2676 = vsel %vm2612, 1, 0
    %v2677 = vsel %vm2613, 1, 0
    %v2678 = vsel %vm2614, 1, 0
    %v2679 = vsel %vm2615, 1, 0
    %v2680 = vsel %vm2616, 1, 0
    %v2681 = vsel %vm2617, 1, 0
    %v2682 = vsel %vm2618, 1, 0
    %v2683 = vsel %vm2619, 1, 0
    %v2684 = vsel %vm2620, 1, 0
    %v2685 = vsel %vm2621, 1, 0
    %v2686 = vsel %vm2622, 1, 0
    %v2687 = vsel %vm2623, 1, 0
    %v2688 = vsel %vm2624, 1, 0
    %v2689 = vsel %vm2625, 1, 0
    %v2690 = vsel %vm2626, 1, 0
    %v2691 = vsel %vm2627, 1, 0
    %v2692 = vsel %vm2628, 1, 0
    %v2693 = vsel %vm2629, 1, 0
    %v2694 = vsel %vm2630, 1, 0
    %v2695 = vsel %vm2631, 1, 0
    %v2696 = vsel %vm2632, 1, 0
    %v2697 = vsel %vm2633, 1, 0
    %v2698 = vsel %vm2634, 1, 0
    %v2699 = vsel %vm2635, 1, 0
    %v2700 = vsel %vm2636, 1, 0
    %v2701 = vsel %vm2637, 1, 0
    %v2702 = vsel %vm2638, 1, 0
    %v2703 = vsel %vm2639, 1, 0
    %v2704 = vsel %vm2640, 1, 0
    %v2705 = vsel %vm2641, 1, 0
    %v2706 = vsel %vm2642, 1, 0
    %v2707 = vsel %vm2643, 1, 0
    %v2708 = vsel %vm2644, 1, 0
    %v2709 = vsel %vm2645, 1, 0
    %v2710 = vsel %vm2646, 1, 0
    %v2711 = vsel %vm2647, 1, 0
    %v2712 = vsel %vm2648, 1, 0
    %v2713 = vsel %vm2649, 1, 0
    %v2714 = vsel %vm2650, 1, 0
    %v2715 = vsel %vm2651, 1, 0
    %v2716 = vsel %vm2652, 1, 0
    %v2717 = vsel %vm2653, 1, 0
    %v2718 = vsel %vm2654, 1, 0
    %v2719 = vsel %vm2655, 1, 0
    %v2720 = vsel %vm2656, 1, 0
    %v2721 = vsel %vm2657, 1, 0
    %v2722 = vsel %vm2658, 1, 0
    %v2723 = vsel %vm2659, 1, 0
    %v2724 = vsel %vm2660, 1, 0
    %v2725 = vsel %vm2661, 1, 0
    %v2726 = vsel %vm2662, 1, 0
    %v2727 = vsel %vm2663, 1, 0
    %v2728 = vsel %vm2664, 1, 0
    %v2729 = vsel %vm2665, 1, 0
    %v2730 = vsel %vm2666, 1, 0
    %v2731 = vcvt.s32.f32 %v2667
    %v2732 = vcvt.s32.f32 %v2668
    %v2733 = vcvt.s32.f32 %v2669
    %v2734 = vcvt.s32.f32 %v2670
    %v2735 = vcvt.s32.f32 %v2671
    %v2736 = vcvt.s32.f32 %v2672
    %v2737 = vcvt.s32.f32 %v2673
    %v2738 = vcvt.s32.f32 %v2674
    %v2739 = vcvt.s32.f32 %v2675
    %v2740 = vcvt.s32.f32 %v2676
    %v2741 = vcvt.s32.f32 %v2677
    %v2742 = vcvt.s32.f32 %v2678
    %v2743 = vcvt.s32.f32 %v2679
    %v2744 = vcvt.s32.f32 %v2680
    %v2745 = vcvt.s32.f32 %v2681
    %v2746 = vcvt.s32.f32 %v2682
    %v2747 = vcvt.s32.f32 %v2683
    %v2748 = vcvt.s32.f32 %v2684
    %v2749 = vcvt.s32.f32 %v2685
    %v2750 = vcvt.s32.f32 %v2686
    %v2751 = vcvt.s32.f32 %v2687
    %v2752 = vcvt.s32.f32 %v2688
    %v2753 = vcvt.s32.f32 %v2689
    %v2754 = vcvt.s32.f32 %v2690
    %v2755 = vcvt.s32.f32 %v2691
    %v2756 = vcvt.s32.f32 %v2692
    %v2757 = vcvt.s32.f32 %v2693
    %v2758 = vcvt.s32.f32 %v2694
    %v2759 = vcvt.s32.f32 %v2695
    %v2760 = vcvt.s32.f32 %v2696
    %v2761 = vcvt.s32.f32 %v2697
    %v2762 = vcvt.s32.f32 %v2698
    %v2763 = vcvt.s32.f32 %v2699
    %v2764 = vcvt.s32.f32 %v2700
    %v2765 = vcvt.s32.f32 %v2701
    %v2766 = vcvt.s32.f32 %v2702
    %v2767 = vcvt.s32.f32 %v2703
    %v2768 = vcvt.s32.f32 %v2704
    %v2769 = vcvt.s32.f32 %v2705
    %v2770 = vcvt.s32.f32 %v2706
    %v2771 = vcvt.s32.f32 %v2707
    %v2772 = vcvt.s32.f32 %v2708
    %v2773 = vcvt.s32.f32 %v2709
    %v2774 = vcvt.s32.f32 %v2710
    %v2775 = vcvt.s32.f32 %v2711
    %v2776 = vcvt.s32.f32 %v2712
    %v2777 = vcvt.s32.f32 %v2713
    %v2778 = vcvt.s32.f32 %v2714
    %v2779 = vcvt.s32.f32 %v2715
    %v2780 = vcvt.s32.f32 %v2716
    %v2781 = vcvt.s32.f32 %v2717
    %v2782 = vcvt.s32.f32 %v2718
    %v2783 = vcvt.s32.f32 %v2719
    %v2784 = vcvt.s32.f32 %v2720
    %v2785 = vcvt.s32.f32 %v2721
    %v2786 = vcvt.s32.f32 %v2722
    %v2787 = vcvt.s32.f32 %v2723
    %v2788 = vcvt.s32.f32 %v2724
    %v2789 = vcvt.s32.f32 %v2725
    %v2790 = vcvt.s32.f32 %v2726
    %v2791 = vcvt.s32.f32 %v2727
    %v2792 = vcvt.s32.f32 %v2728
    %v2793 = vcvt.s32.f32 %v2729
    %v2794 = vcvt.s32.f32 %v2730
    %2795 = vmatpush.msra.mxu0 %v2746
    %2796 = vmatpush.msra.mxu0 %v2745
    %2797 = vmatpush.msra.mxu0 %v2744
    %2798 = vmatpush.msra.mxu0 %v2743
    %2799 = vmatpush.msra.mxu0 %v2742
    %2800 = vmatpush.msra.mxu0 %v2741
    %2801 = vmatpush.msra.mxu0 %v2740
    %2802 = vmatpush.msra.mxu0 %v2739
    %2803 = vmatpush.msra.mxu0 %v2738
    %2804 = vmatpush.msra.mxu0 %v2737
    %2805 = vmatpush.msra.mxu0 %v2736
    %2806 = vmatpush.msra.mxu0 %v2735
    %2807 = vmatpush.msra.mxu0 %v2734
    %2808 = vmatpush.msra.mxu0 %v2733
    %2809 = vmatpush.msra.mxu0 %v2732
    %2810 = vmatpush.msra.mxu0 %v2731
    %2811 = vmatmul.f32.gmra.mxu0 %v2379
    %v2812 = vpop.f32.mrf.mxu0
    %v2813 = vadd.f32 0.0, %v2812
    %2814 = vmatmul.f32.gmra.mxu0 %v2383
    %v2815 = vpop.f32.mrf.mxu0
    %v2816 = vadd.f32 0.0, %v2815
    %2817 = vmatmul.f32.gmra.mxu0 %v2387
    %v2818 = vpop.f32.mrf.mxu0
    %v2819 = vadd.f32 0.0, %v2818
    %2820 = vmatmul.f32.gmra.mxu0 %v2391
    %v2821 = vpop.f32.mrf.mxu0
    %v2822 = vadd.f32 0.0, %v2821
    %2823 = vmatmul.f32.gmra.mxu0 %v2395
    %v2824 = vpop.f32.mrf.mxu0
    %v2825 = vadd.f32 0.0, %v2824
    %2826 = vmatmul.f32.gmra.mxu0 %v2399
    %v2827 = vpop.f32.mrf.mxu0
    %v2828 = vadd.f32 0.0, %v2827
    %2829 = vmatmul.f32.gmra.mxu0 %v2403
    %v2830 = vpop.f32.mrf.mxu0
    %v2831 = vadd.f32 0.0, %v2830
    %2832 = vmatmul.f32.gmra.mxu0 %v2407
    %v2833 = vpop.f32.mrf.mxu0
    %v2834 = vadd.f32 0.0, %v2833
    %2835 = vdwg.mxu0
    %2836 = vmatpush.msra.mxu0 %v2762
    %2837 = vmatpush.msra.mxu0 %v2761
    %2838 = vmatpush.msra.mxu0 %v2760
    %2839 = vmatpush.msra.mxu0 %v2759
    %2840 = vmatpush.msra.mxu0 %v2758
    %2841 = vmatpush.msra.mxu0 %v2757
    %2842 = vmatpush.msra.mxu0 %v2756
    %2843 = vmatpush.msra.mxu0 %v2755
    %2844 = vmatpush.msra.mxu0 %v2754
    %2845 = vmatpush.msra.mxu0 %v2753
    %2846 = vmatpush.msra.mxu0 %v2752
    %2847 = vmatpush.msra.mxu0 %v2751
    %2848 = vmatpush.msra.mxu0 %v2750
    %2849 = vmatpush.msra.mxu0 %v2749
    %2850 = vmatpush.msra.mxu0 %v2748
    %2851 = vmatpush.msra.mxu0 %v2747
    %2852 = vmatmul.f32.gmra.mxu0 %v2380
    %v2853 = vpop.f32.mrf.mxu0
    %v2854 = vadd.f32 %v2813, %v2853
    %2855 = vmatmul.f32.gmra.mxu0 %v2384
    %v2856 = vpop.f32.mrf.mxu0
    %v2857 = vadd.f32 %v2816, %v2856
    %2858 = vmatmul.f32.gmra.mxu0 %v2388
    %v2859 = vpop.f32.mrf.mxu0
    %v2860 = vadd.f32 %v2819, %v2859
    %2861 = vmatmul.f32.gmra.mxu0 %v2392
    %v2862 = vpop.f32.mrf.mxu0
    %v2863 = vadd.f32 %v2822, %v2862
    %2864 = vmatmul.f32.gmra.mxu0 %v2396
    %v2865 = vpop.f32.mrf.mxu0
    %v2866 = vadd.f32 %v2825, %v2865
    %2867 = vmatmul.f32.gmra.mxu0 %v2400
    %v2868 = vpop.f32.mrf.mxu0
    %v2869 = vadd.f32 %v2828, %v2868
    %2870 = vmatmul.f32.gmra.mxu0 %v2404
    %v2871 = vpop.f32.mrf.mxu0
    %v2872 = vadd.f32 %v2831, %v2871
    %2873 = vmatmul.f32.gmra.mxu0 %v2408
    %v2874 = vpop.f32.mrf.mxu0
    %v2875 = vadd.f32 %v2834, %v2874
    %2876 = vdwg.mxu0
    %2877 = vmatpush.msra.mxu0 %v2778
    %2878 = vmatpush.msra.mxu0 %v2777
    %2879 = vmatpush.msra.mxu0 %v2776
    %2880 = vmatpush.msra.mxu0 %v2775
    %2881 = vmatpush.msra.mxu0 %v2774
    %2882 = vmatpush.msra.mxu0 %v2773
    %2883 = vmatpush.msra.mxu0 %v2772
    %2884 = vmatpush.msra.mxu0 %v2771
    %2885 = vmatpush.msra.mxu0 %v2770
    %2886 = vmatpush.msra.mxu0 %v2769
    %2887 = vmatpush.msra.mxu0 %v2768
    %2888 = vmatpush.msra.mxu0 %v2767
    %2889 = vmatpush.msra.mxu0 %v2766
    %2890 = vmatpush.msra.mxu0 %v2765
    %2891 = vmatpush.msra.mxu0 %v2764
    %2892 = vmatpush.msra.mxu0 %v2763
    %2893 = vmatmul.f32.gmra.mxu0 %v2381
    %v2894 = vpop.f32.mrf.mxu0
    %v2895 = vadd.f32 %v2854, %v2894
    %2896 = vmatmul.f32.gmra.mxu0 %v2385
    %v2897 = vpop.f32.mrf.mxu0
    %v2898 = vadd.f32 %v2857, %v2897
    %2899 = vmatmul.f32.gmra.mxu0 %v2389
    %v2900 = vpop.f32.mrf.mxu0
    %v2901 = vadd.f32 %v2860, %v2900
    %2902 = vmatmul.f32.gmra.mxu0 %v2393
    %v2903 = vpop.f32.mrf.mxu0
    %v2904 = vadd.f32 %v2863, %v2903
    %2905 = vmatmul.f32.gmra.mxu0 %v2397
    %v2906 = vpop.f32.mrf.mxu0
    %v2907 = vadd.f32 %v2866, %v2906
    %2908 = vmatmul.f32.gmra.mxu0 %v2401
    %v2909 = vpop.f32.mrf.mxu0
    %v2910 = vadd.f32 %v2869, %v2909
    %2911 = vmatmul.f32.gmra.mxu0 %v2405
    %v2912 = vpop.f32.mrf.mxu0
    %v2913 = vadd.f32 %v2872, %v2912
    %2914 = vmatmul.f32.gmra.mxu0 %v2409
    %v2915 = vpop.f32.mrf.mxu0
    %v2916 = vadd.f32 %v2875, %v2915
    %2917 = vdwg.mxu0
    %2918 = vmatpush.msra.mxu0 %v2794
    %2919 = vmatpush.msra.mxu0 %v2793
    %2920 = vmatpush.msra.mxu0 %v2792
    %2921 = vmatpush.msra.mxu0 %v2791
    %2922 = vmatpush.msra.mxu0 %v2790
    %2923 = vmatpush.msra.mxu0 %v2789
    %2924 = vmatpush.msra.mxu0 %v2788
    %2925 = vmatpush.msra.mxu0 %v2787
    %2926 = vmatpush.msra.mxu0 %v2786
    %2927 = vmatpush.msra.mxu0 %v2785
    %2928 = vmatpush.msra.mxu0 %v2784
    %2929 = vmatpush.msra.mxu0 %v2783
    %2930 = vmatpush.msra.mxu0 %v2782
    %2931 = vmatpush.msra.mxu0 %v2781
    %2932 = vmatpush.msra.mxu0 %v2780
    %2933 = vmatpush.msra.mxu0 %v2779
    %2934 = vmatmul.f32.gmra.mxu0 %v2382
    %v2935 = vpop.f32.mrf.mxu0
    %v2936 = vadd.f32 %v2895, %v2935
    %2937 = vmatmul.f32.gmra.mxu0 %v2386
    %v2938 = vpop.f32.mrf.mxu0
    %v2939 = vadd.f32 %v2898, %v2938
    %2940 = vmatmul.f32.gmra.mxu0 %v2390
    %v2941 = vpop.f32.mrf.mxu0
    %v2942 = vadd.f32 %v2901, %v2941
    %2943 = vmatmul.f32.gmra.mxu0 %v2394
    %v2944 = vpop.f32.mrf.mxu0
    %v2945 = vadd.f32 %v2904, %v2944
    %2946 = vmatmul.f32.gmra.mxu0 %v2398
    %v2947 = vpop.f32.mrf.mxu0
    %v2948 = vadd.f32 %v2907, %v2947
    %2949 = vmatmul.f32.gmra.mxu0 %v2402
    %v2950 = vpop.f32.mrf.mxu0
    %v2951 = vadd.f32 %v2910, %v2950
    %2952 = vmatmul.f32.gmra.mxu0 %v2406
    %v2953 = vpop.f32.mrf.mxu0
    %v2954 = vadd.f32 %v2913, %v2953
    %2955 = vmatmul.f32.gmra.mxu0 %v2410
    %v2956 = vpop.f32.mrf.mxu0
    %v2957 = vadd.f32 %v2916, %v2956
    %2958 = vdwg.mxu0
    %v2959 = vadd.f32 %v2231, %v2936
    %v2960 = vadd.f32 %v2232, %v2939
    %v2961 = vadd.f32 %v2233, %v2942
    %v2962 = vadd.f32 %v2234, %v2945
    %v2963 = vadd.f32 %v2235, %v2948
    %v2964 = vadd.f32 %v2236, %v2951
    %v2965 = vadd.f32 %v2237, %v2954
    %v2966 = vadd.f32 %v2238, %v2957
    %2967 = vxpose.xlu0.b32.start [1/16] %v2959, 128
    %2968 = vxpose.xlu0.b32.cont [2/16] %v2960, 128
    %2969 = vxpose.xlu0.b32.cont [3/16] %v2961, 128
    %2970 = vxpose.xlu0.b32.cont [4/16] %v2962, 128
    %2971 = vxpose.xlu0.b32.cont [5/16] %v2963, 128
    %2972 = vxpose.xlu0.b32.cont [6/16] %v2964, 128
    %2973 = vxpose.xlu0.b32.cont [7/16] %v2965, 128
    %2974 = vxpose.xlu0.b32.cont [8/16] %v2966, 128
    %2975 = vxpose.xlu0.b32.cont [9/16] 0.0, 128
    %2976 = vxpose.xlu0.b32.cont [10/16] 0.0, 128
    %2977 = vxpose.xlu0.b32.cont [11/16] 0.0, 128
    %2978 = vxpose.xlu0.b32.cont [12/16] 0.0, 128
    %2979 = vxpose.xlu0.b32.cont [13/16] 0.0, 128
    %2980 = vxpose.xlu0.b32.cont [14/16] 0.0, 128
    %2981 = vxpose.xlu0.b32.cont [15/16] 0.0, 128
    %2982 = vxpose.xlu0.b32.end [16/16] 0.0, 128
    %v2983 = vpop.trf.xlu0
    %v2984 = vpop.trf.xlu0
    %v2985 = vpop.trf.xlu0
    %v2986 = vpop.trf.xlu0
    %v2987 = vpop.trf.xlu0
    %v2988 = vpop.trf.xlu0
    %v2989 = vpop.trf.xlu0
    %v2990 = vpop.trf.xlu0
    %v2991 = vpop.trf.xlu0
    %v2992 = vpop.trf.xlu0
    %v2993 = vpop.trf.xlu0
    %v2994 = vpop.trf.xlu0
    %v2995 = vpop.trf.xlu0
    %v2996 = vpop.trf.xlu0
    %v2997 = vpop.trf.xlu0
    %v2998 = vpop.trf.xlu0
    %v2999 = vld [vmem:[%s2 + $0x20] sm:$0x2]
    %v3000 = vunpack.c.l.bf16 %v2999
    %v3001 = vperm.slane %v3000, 2
    %vm3006 = vcmask 523264
    %v3008 = vsel %vm3006, %v2983, 0
    %3010 = vmatpush.bf16.msra.mxu0 0
    %3011 = vmatpush.bf16.msra.mxu0 0
    %3012 = vmatpush.bf16.msra.mxu0 0
    %3013 = vmatpush.bf16.msra.mxu0 0
    %3014 = vmatpush.bf16.msra.mxu0 %v45
    %3015 = vmatpush.bf16.msra.mxu0 %v44
    %3016 = vmatpush.bf16.msra.mxu0 %v43
    %3017 = vmatpush.bf16.msra.mxu0 %v42
    %3018 = vmatmul.f32.gmra.mxu0 %v3008
    %v3019 = vpop.f32.mrf.mxu0
    %v3020 = vadd.f32 %v3001, %v3019
    %3021 = vdwg.mxu0
    %v3022 = vmax.f32 %v3020, 0.0
    %v3023 = vld [vmem:[%s2 + $0x28] sm:$0xf]
    %v3024 = vld [vmem:[%s2 + $0x2c] sm:$0xf]
    %v3025 = vld [vmem:[%s2 + $0x30] sm:$0xf]
    %v3026 = vld [vmem:[%s2 + $0x34] sm:$0xf]
    %v3031 = vunpack.c.l.b16 %v3023
    %v3032 = vunpack.c.l.b16 %v3024
    %v3033 = vunpack.c.l.b16 %v3025
    %v3034 = vunpack.c.l.b16 %v3026
    %v3035 = vpack.c.b16 %v3032, %v3031
    %v3036 = vpack.c.b16 %v3034, %v3033
    %3037 = vrot.lane.b32.xlu0 %v3035, 64
    %v3038 = vpop.permute.xlu0 %3037
    %3039 = vrot.lane.b32.xlu0 %v3036, 64
    %v3040 = vpop.permute.xlu0 %3039
    %3044 = vrot.lane.b32.xlu0 %v3001, 96
    %v3045 = vpop.permute.xlu0 %3044
    %vm3047 = vcmask 261120
    %v3049 = vsel %vm3047, %v3022, 0
    %3051 = vmatpush.bf16.msra.mxu0 0
    %3052 = vmatpush.bf16.msra.mxu0 0
    %3053 = vmatpush.bf16.msra.mxu0 0
    %3054 = vmatpush.bf16.msra.mxu0 0
    %3055 = vmatpush.bf16.msra.mxu0 0
    %3056 = vmatpush.bf16.msra.mxu0 0
    %3057 = vmatpush.bf16.msra.mxu0 %v3040
    %3058 = vmatpush.bf16.msra.mxu0 %v3038
    %3059 = vmatmul.f32.gmra.mxu0 %v3049
    %v3060 = vpop.f32.mrf.mxu0
    %v3061 = vadd.f32 %v3045, %v3060
    %3062 = vdwg.mxu0
    %v3063 = vld [vmem:[%s1] sm:$0xff]
    %3064 = vset.pattern.permute.xlu0 0
    %3065 = vperm.xlu0 %3064, %v3063
    %v3066 = vpop.permute.xlu0 %3065
    %vm3067 = vcmp.eq.s32.totalorder %v3066, %v304
    %v3068 = vsel %vm3067, 1, 0
    %v3069 = vcvt.s32.f32 %v3068
    %v3070 = vld [vmem:[%s2 + $0x48] sm:$0xf]
    %v3071 = vld [vmem:[%s2 + $0x4c] sm:$0xf]
    %v3074 = vunpack.c.l.b16 %v3070
    %v3075 = vunpack.c.l.b16 %v3071
    %v3076 = vpack.c.b16 %v3075, %v3074
    %3077 = vrot.lane.b32.xlu0 %v3076, 64
    %v3078 = vpop.permute.xlu0 %3077
    %vm3080 = vcmask 130048
    %v3082 = vsel %vm3080, %v3069, 0
    %3084 = vmatpush.bf16.msra.mxu0 0
    %3085 = vmatpush.bf16.msra.mxu0 0
    %3086 = vmatpush.bf16.msra.mxu0 0
    %3087 = vmatpush.bf16.msra.mxu0 0
    %3088 = vmatpush.bf16.msra.mxu0 0
    %3089 = vmatpush.bf16.msra.mxu0 0
    %3090 = vmatpush.bf16.msra.mxu0 0
    %3091 = vmatpush.bf16.msra.mxu0 %v3078
    %3092 = vmatmul.f32.gmra.mxu0 %v3082
    %v3093 = vpop.f32.mrf.mxu0
    %v3094 = vadd.f32 0.0, %v3093
    %3095 = vdwg.mxu0
    %3096 = vrot.lane.b32.xlu0 %v44, 64
    %v3097 = vpop.permute.xlu0 %3096
    %3098 = vrot.lane.b32.xlu0 %v45, 64
    %v3099 = vpop.permute.xlu0 %3098
    %v3103 = vsel %vm3047, %v3061, 0
    %3105 = vmatpush.bf16.msra.mxu0 0
    %3106 = vmatpush.bf16.msra.mxu0 0
    %3107 = vmatpush.bf16.msra.mxu0 0
    %3108 = vmatpush.bf16.msra.mxu0 0
    %3109 = vmatpush.bf16.msra.mxu0 0
    %3110 = vmatpush.bf16.msra.mxu0 0
    %3111 = vmatpush.bf16.msra.mxu0 %v3099
    %3112 = vmatpush.bf16.msra.mxu0 %v3097
    %3113 = vmatmul.f32.gmra.mxu0 %v3103
    %v3114 = vpop.f32.mrf.mxu0
    %v3115 = vadd.f32 %v3094, %v3114
    %3116 = vdwg.mxu0
    %v3117 = vmax.f32 %v3115, 0.0
    %v3118 = vld [vmem:[%s2] sm:$0xf]
    %v3119 = vld [vmem:[%s2 + $0x4] sm:$0xf]
    %v3120 = vld [vmem:[%s2 + $0x8] sm:$0xf]
    %v3121 = vld [vmem:[%s2 + $0xc] sm:$0xf]
    %v3122 = vld [vmem:[%s2 + $0x10] sm:$0xf]
    %v3123 = vld [vmem:[%s2 + $0x14] sm:$0xf]
    %v3124 = vld [vmem:[%s2 + $0x18] sm:$0xf]
    %v3125 = vld [vmem:[%s2 + $0x1c] sm:$0xf]
    %v3126 = vld [vmem:[%s2 + $0x20] sm:$0x1]
    %v3127 = vunpack.c.l.bf16 %v3126
    %v3128 = vperm.slane %v3127, 0
    %v3137 = vunpack.c.l.b16 %v3118
    %v3138 = vunpack.c.l.b16 %v3119
    %v3139 = vunpack.c.l.b16 %v3120
    %v3140 = vunpack.c.l.b16 %v3121
    %v3141 = vunpack.c.l.b16 %v3122
    %v3142 = vunpack.c.l.b16 %v3123
    %v3143 = vunpack.c.l.b16 %v3124
    %v3144 = vunpack.c.l.b16 %v3125
    %v3145 = vpack.c.b16 %v3138, %v3137
    %v3146 = vpack.c.b16 %v3140, %v3139
    %v3147 = vpack.c.b16 %v3142, %v3141
    %v3148 = vpack.c.b16 %v3144, %v3143
    %v3154 = vsel %vm3006, %v3117, 0
    %3156 = vmatpush.bf16.msra.mxu0 0
    %3157 = vmatpush.bf16.msra.mxu0 0
    %3158 = vmatpush.bf16.msra.mxu0 0
    %3159 = vmatpush.bf16.msra.mxu0 0
    %3160 = vmatpush.bf16.msra.mxu0 %v3148
    %3161 = vmatpush.bf16.msra.mxu0 %v3147
    %3162 = vmatpush.bf16.msra.mxu0 %v3146
    %3163 = vmatpush.bf16.msra.mxu0 %v3145
    %3164 = vmatmul.f32.gmra.mxu0 %v3154
    %v3165 = vpop.f32.mrf.mxu0
    %v3166 = vadd.f32 %v3128, %v3165
    %3167 = vdwg.mxu0
    %3168 = vst [vmem:[#allocation2] sm:$0xff] %v3166
    // Predicated region
    $region14: #{ivae_forward_packed.1} parent=1 // pred_check
      _
    $region15: #{ivae_forward_packed.1} parent=1 // pred_check_branch
      %3170 = sbr.rel (0) target = $region17
    $region16: #{ivae_forward_packed.1} parent=1 // pred_region
      %3172 = vsyncadd [#allocation3], 0
      %s3174 = sshll.u32 [#allocation2], 4
      %s3175 = int_to_ptr.vmem [resolvable:$true] %s3174
      %s3176 = sshll.u32 %s3, 4
      %s3177 = int_to_ptr.hbm [resolvable:$true] %s3176
      %3179 = dma.vmem_to_hbm [thread:$0]  %s3175, 128, %s3177, [#allocation3]
    $region17: #{ivae_forward_packed.1} parent=1 // pred_fallthru
      _
    // Predicated region
    $region18: #{ivae_forward_packed.1} parent=1 // pred_check
      _
    $region19: #{ivae_forward_packed.1} parent=1 // pred_check_branch
      %3181 = sbr.rel (0) target = $region21
    $region20: #{ivae_forward_packed.1} parent=1 // pred_region
      %3183 = dma.done [#allocation3], 128
    $region21: #{ivae_forward_packed.1} parent=1 // pred_fallthru
      _
    %3184 = vsyncpa [#allocation3], 1

</llo_original>
